<compile_context>
chip_gen: v7x
topology: tpu7x:2x2x1
jax: 0.10.0
libtpu: 0.0.40
codegen_flags: <defaults>
</compile_context>

<pallas_src>
import functools

import jax
import jax.numpy as jnp
from jax.experimental import pallas as pl
from jax.experimental.pallas import tpu as pltpu

POS_WEIGHT = 2.0  # stands in for config.log_weight (positive-class weight)
_LANES = 128


def _interaction_kernel(batch_ref, w_ref, probs_ref, stats_ref, *,
                        emb_dim, max_len):
    """One grid step == one block of `B` batch elements.

    batch_ref : (B, L1, 2C + 2*max_len) packed minibatch (storage dtype)
    w_ref     : (C, C)                  interaction projection (shared)
    probs_ref : (B, L1, L2)             masked sigmoid(logits), storage dtype
    stats_ref : (1, 8, 128) f32         row 0 = loss partial sum (per lane),
                                        row 1 = mask element-count partial sum
    """
    B, L1, _ = batch_ref.shape
    C = emb_dim
    L2 = max_len

    # ---- in-kernel get_inputs(): lane-aligned static slices of the packed
    #      batch (all offsets are multiples of 128) -----------------------
    p1 = batch_ref[:, :, 0:C].astype(jnp.bfloat16)                        # (B,L1,C)
    p2 = batch_ref[:, :, C:2 * C].astype(jnp.bfloat16)                    # (B,L2,C)
    tgt = batch_ref[:, :, 2 * C:2 * C + L2].astype(jnp.float32)           # (B,L1,L2)
    msk = batch_ref[:, :, 2 * C + L2:2 * C + 2 * L2].astype(jnp.float32)  # (B,L1,L2)

    w = w_ref[...].astype(jnp.bfloat16)

    # --- MXU path: bf16 operands, f32 accumulation ------------------------
    # model1 projection: fold batch into rows so the MXU sees >=512-row tiles.
    h = jnp.dot(p1.reshape(B * L1, C), w,
                preferred_element_type=jnp.float32)                       # (B*L1,C) f32
    # TODO(synk): at production C~1024 the bf16 re-quantization of h grows the
    #             error; switch to f32 LHS (or bf16x3) if precision matters.
    h = h.reshape(B, L1, C).astype(jnp.bfloat16)

    # all-vs-all interaction: batched last-dim/last-dim contraction
    # (no explicit p2 transpose -> no XLU relayout).
    logits = jax.lax.dot_general(
        h, p2,
        dimension_numbers=(((2,), (2,)), ((0,), (0,))),
        preferred_element_type=jnp.float32)                               # (B,L1,L2)

    # interaction_mask applied inside the model (padding residues -> 0 logit)
    logits = logits * msk

    # --- fused single-exp sigmoid / softplus (EUP: 1 exp + 1 log1p + 1
    #     approx recip per element; no sp_pos/sp_neg temporaries) ----------
    t = jnp.exp(-jnp.abs(logits))
    log1p_t = jnp.log1p(t)
    inv_1pt = pl.reciprocal(1.0 + t, approx=True)
    sig = jnp.where(logits >= 0.0, 1.0, t) * inv_1pt

    # calculate_loss_n_metrics: sigmoid + output mask. Probs written back in
    # the storage dtype (halves the largest HBM write).
    probs_ref[...] = (sig * msk).astype(probs_ref.dtype)

    # pos-weighted BCE-with-logits, masked:
    #   l = w_pos*y*softplus(-x) + (1-y)*softplus(x)
    #     = w_pos*y*relu(-x) + (1-y)*relu(x) + (w_pos*y + (1-y))*log1p(t)
    wy = POS_WEIGHT * tgt
    one_m_t = 1.0 - tgt
    per_elem = (wy * jnp.maximum(-logits, 0.0)
                + one_m_t * jnp.maximum(logits, 0.0)
                + (wy + one_m_t) * log1p_t) * msk

    # lane-dense partial reductions: keep the 128 lanes parallel; the tiny
    # cross-block finish runs in XLA.
    def fold(x):                        # (B, L1, L2) f32 -> (128,) f32
        v = jnp.sum(x, axis=(0, 1))     # (L2,)
        if v.shape[0] > _LANES:
            v = v.reshape(-1, _LANES).sum(axis=0)
        return v

    loss_lanes = fold(per_elem)
    mask_lanes = fold(msk)              # in-kernel mask count (msk is already in VMEM)
    pad = jnp.zeros((6, _LANES), jnp.float32)
    stats_ref[...] = jnp.concatenate(
        [loss_lanes[None, :], mask_lanes[None, :], pad], axis=0)[None]


def trainer_predict_and_loss(batch, w, *, emb_dim, max_len, block_batch=None):
    """Replicates Trainer.get_inputs -> predict -> calculate_loss_n_metrics
    (the per-mini-batch hot path) for the 'interaction' objective.

    batch: (N, L, emb_dim + emb_dim + 2*max_len) packed exactly like
           Trainer.get_inputs expects:
             [:, :, :emb_dim]                -> p1_emb
             [:, :, emb_dim:-2*max_len]      -> p2_emb
             [:, :, -2*max_len:-max_len]     -> target
             [:, :, -max_len:]               -> target_mask
    w: (emb_dim, emb_dim) interaction projection weight.
    Returns (masked_probs (N, L, max_len) in batch dtype, scalar masked BCE loss).
    """
    N, L, F = batch.shape
    assert F == 2 * emb_dim + 2 * max_len, "unexpected packed-batch layout"
    # For the 'interaction' objective the packed format implies L == max_len.
    assert L == max_len, "packed interaction batch requires L == max_len"
    # Lane-dense requirement: pad emb_dim / max_len to 128 multiples upstream.
    assert emb_dim % _LANES == 0 and max_len % _LANES == 0
    L1, L2, C = L, max_len, emb_dim

    if block_batch is None:
        # Aim for >=512 MXU rows for the projection matmul (256-wide MXU on
        # v6e/v7x), but keep n_blocks >= 2 when N permits so v7x megacore can
        # shard the single 'parallel' batch axis across both TensorCores.
        bb = max(1, -(-512 // L1))          # ceil(512 / L1)
        if N >= 2:
            bb = min(bb, N // 2)
        bb = max(1, min(bb, N))
        while N % bb:
            bb -= 1
        block_batch = bb
    assert N % block_batch == 0
    n_blocks = N // block_batch

    kernel = functools.partial(_interaction_kernel, emb_dim=emb_dim,
                               max_len=max_len)

    out_shapes = (
        jax.ShapeDtypeStruct((N, L1, L2), batch.dtype),            # masked probs
        jax.ShapeDtypeStruct((n_blocks, 8, _LANES), jnp.float32),  # loss / mask partials
    )

    grid_spec = pltpu.PrefetchScalarGridSpec(
        num_scalar_prefetch=0,
        grid=(n_blocks,),
        in_specs=[
            pl.BlockSpec((block_batch, L, F), lambda n: (n, 0, 0)),   # packed batch
            pl.BlockSpec((C, C), lambda n: (0, 0)),                   # W shared
        ],
        out_specs=(
            pl.BlockSpec((block_batch, L1, L2), lambda n: (n, 0, 0)),
            pl.BlockSpec((1, 8, _LANES), lambda n: (n, 0, 0)),
        ),
    )

    probs, stats = pl.pallas_call(
        kernel,
        out_shape=out_shapes,
        grid_spec=grid_spec,
        # TODO(synk): for production shapes (C~1024, max_len~1024) add an L1
        #             grid axis (or in-kernel fori_loop over L1 chunks) for the
        #             logits/elementwise/loss region, set vmem_limit_bytes
        #             explicitly (v7x: 64 MiB physical, v5e: 16 MiB scoped
        #             default), and stage W once into a persistent VMEM scratch
        #             instead of a per-step block.
        compiler_params=pltpu.CompilerParams(
            dimension_semantics=("parallel",)),
    )(batch, w)

    loss_sum = jnp.sum(stats[:, 0, :])
    mask_total = jnp.sum(stats[:, 1, :])
    loss = loss_sum / jnp.maximum(mask_total, 1.0)
    return probs, loss


if __name__ == "__main__":
    # Small lane-dense shapes consistent with Trainer.get_inputs packing:
    #   N=8 protein pairs, L = max_seq_len = 128 (lane-dense), embedding
    #   dim C = 128 (stand-in for the 1024-dim T5 embedding).
    N, L, C = 8, 128, 128
    MAX_LEN = L

    key = jax.random.PRNGKey(0)
    k1, k2, k3, k4 = jax.random.split(key, 4)

    p1 = (jax.random.normal(k1, (N, L, C), jnp.float32) * 0.1).astype(jnp.bfloat16)
    p2 = (jax.random.normal(k2, (N, L, C), jnp.float32) * 0.1).astype(jnp.bfloat16)
    # binary contact-map target and a padding mask (trailing residues padded)
    target = (jax.random.uniform(k3, (N, L, MAX_LEN)) > 0.8).astype(jnp.bfloat16)
    target_mask = jnp.ones((N, L, MAX_LEN), jnp.bfloat16)
    target_mask = target_mask.at[:, :, MAX_LEN - 13:].set(0)
    target_mask = target_mask.at[:, L - 9:, :].set(0)

    # pack exactly like the dataloader batches Trainer.get_inputs slices
    batch = jnp.concatenate([p1, p2, target, target_mask], axis=-1)

    # deterministic "model1" interaction projection weight
    w = (jax.random.normal(k4, (C, C), jnp.float32) / jnp.sqrt(C)).astype(jnp.bfloat16)

    fn = jax.jit(functools.partial(trainer_predict_and_loss,
                                   emb_dim=C, max_len=MAX_LEN))
    probs, loss = fn(batch, w)
    jax.block_until_ready((probs, loss))

    # sanity check against a pure-JAX f32 reference
    p1f, p2f = p1.astype(jnp.float32), p2.astype(jnp.float32)
    wf = w.astype(jnp.float32)
    tgtf, mskf = target.astype(jnp.float32), target_mask.astype(jnp.float32)
    logits_ref = jnp.einsum("nlc,cd,nmd->nlm", p1f, wf, p2f) * mskf
    probs_ref = jax.nn.sigmoid(logits_ref) * mskf
    per_elem = (POS_WEIGHT * tgtf * jax.nn.softplus(-logits_ref)
                + (1.0 - tgtf) * jax.nn.softplus(logits_ref)) * mskf
    loss_ref = jnp.sum(per_elem) / jnp.maximum(jnp.sum(mskf), 1.0)

    assert jnp.allclose(probs.astype(jnp.float32), probs_ref, atol=2e-2), "probs mismatch"
    assert jnp.allclose(loss, loss_ref, rtol=2e-2, atol=2e-3), "loss mismatch"

    print("KERNEL_OK")
</pallas_src>

<mosaic_0001>
module attributes {stable_mosaic.version = 11 : i64} {
  func.func @_interaction_kernel(%arg0: i32, %arg1: memref<4x128x512xbf16, #tpu.memory_space<vmem>>, %arg2: memref<128x128xbf16, #tpu.memory_space<vmem>>, %arg3: memref<4x128x128xbf16, #tpu.memory_space<vmem>>, %arg4: memref<1x8x128xf32, #tpu.memory_space<vmem>>) attributes {dimension_semantics = [#tpu.dimension_semantics<parallel>], iteration_bounds = array<i64: 2>, scalar_prefetch = 0 : i64, scratch_operands = 0 : i64, tpu.core_type = #tpu.core_type<tc>, window_params = [{transform_indices = @transform_0, window_bounds = array<i64: 4, 128, 512>}, {pipeline_mode = #tpu.pipeline_mode<synchronous>, transform_indices = @transform_1, window_bounds = array<i64: 128, 128>}, {transform_indices = @transform_2, window_bounds = array<i64: 4, 128, 128>}, {transform_indices = @transform_3, window_bounds = array<i64: 1, 8, 128>}]} {
    %c0 = arith.constant 0 : index
    %c0_0 = arith.constant 0 : index
    %c0_1 = arith.constant 0 : index
    %0 = vector.load %arg1[%c0, %c0_0, %c0_1] : memref<4x128x512xbf16, #tpu.memory_space<vmem>>, vector<4x128x128xbf16>
    %c0_2 = arith.constant 0 : index
    %c0_3 = arith.constant 0 : index
    %c128 = arith.constant 128 : index
    %1 = vector.load %arg1[%c0_2, %c0_3, %c128] : memref<4x128x512xbf16, #tpu.memory_space<vmem>>, vector<4x128x128xbf16>
    %c0_4 = arith.constant 0 : index
    %c0_5 = arith.constant 0 : index
    %c256 = arith.constant 256 : index
    %2 = vector.load %arg1[%c0_4, %c0_5, %c256] : memref<4x128x512xbf16, #tpu.memory_space<vmem>>, vector<4x128x128xbf16>
    %3 = arith.extf %2 : vector<4x128x128xbf16> to vector<4x128x128xf32>
    %c0_6 = arith.constant 0 : index
    %c0_7 = arith.constant 0 : index
    %c384 = arith.constant 384 : index
    %4 = vector.load %arg1[%c0_6, %c0_7, %c384] : memref<4x128x512xbf16, #tpu.memory_space<vmem>>, vector<4x128x128xbf16>
    %5 = arith.extf %4 : vector<4x128x128xbf16> to vector<4x128x128xf32>
    %c0_8 = arith.constant 0 : index
    %c0_9 = arith.constant 0 : index
    %6 = vector.load %arg2[%c0_8, %c0_9] : memref<128x128xbf16, #tpu.memory_space<vmem>>, vector<128x128xbf16>
    %7 = vector.shape_cast %0 : vector<4x128x128xbf16> to vector<512x128xbf16>
    %cst = arith.constant dense<0.000000e+00> : vector<512x128xf32>
    %8 = tpu.matmul %7, %6, %cst {dimension_numbers = #tpu.dot_dimension_numbers<[1], [0], [0], [1], [0, 0, 1, 1], [], []>} : vector<512x128xbf16>, vector<128x128xbf16>, vector<512x128xf32> -> vector<512x128xf32>
    %9 = vector.shape_cast %8 : vector<512x128xf32> to vector<4x128x128xf32>
    %10 = arith.truncf %9 : vector<4x128x128xf32> to vector<4x128x128xbf16>
    %cst_10 = arith.constant dense<0.000000e+00> : vector<4x128x128xf32>
    %11 = tpu.matmul %10, %1, %cst_10 {dimension_numbers = #tpu.dot_dimension_numbers<[2], [2], [1], [1], [0, 0, 0, 1, 1, 1], [0], [0]>} : vector<4x128x128xbf16>, vector<4x128x128xbf16>, vector<4x128x128xf32> -> vector<4x128x128xf32>
    %12 = arith.mulf %11, %5 : vector<4x128x128xf32>
    %13 = math.absf %12 : vector<4x128x128xf32>
    %cst_11 = arith.constant 0.000000e+00 : f32
    %14 = vector.broadcast %cst_11 : f32 to vector<4x128x128xf32>
    %15 = arith.subf %14, %13 : vector<4x128x128xf32>
    %16 = math.exp %15 : vector<4x128x128xf32>
    %17 = math.log1p %16 : vector<4x128x128xf32>
    %cst_12 = arith.constant 1.000000e+00 : f32
    %18 = vector.broadcast %cst_12 : f32 to vector<4x128x128xf32>
    %19 = arith.addf %18, %16 : vector<4x128x128xf32>
    %20 = tpu.reciprocal %19 {approx = true} : vector<4x128x128xf32> -> vector<4x128x128xf32>
    %cst_13 = arith.constant 0.000000e+00 : f32
    %21 = vector.broadcast %cst_13 : f32 to vector<4x128x128xf32>
    %22 = arith.cmpf oge, %12, %21 : vector<4x128x128xf32>
    %cst_14 = arith.constant 1.000000e+00 : f32
    %23 = vector.broadcast %cst_14 : f32 to vector<4x128x128xf32>
    %24 = arith.select %22, %23, %16 : vector<4x128x128xi1>, vector<4x128x128xf32>
    %25 = arith.mulf %24, %20 : vector<4x128x128xf32>
    %26 = arith.mulf %25, %5 : vector<4x128x128xf32>
    %27 = arith.truncf %26 : vector<4x128x128xf32> to vector<4x128x128xbf16>
    %c0_15 = arith.constant 0 : index
    %c0_16 = arith.constant 0 : index
    %c0_17 = arith.constant 0 : index
    %28 = vector.load %arg3[%c0_15, %c0_16, %c0_17] : memref<4x128x128xbf16, #tpu.memory_space<vmem>>, vector<4x128x128xbf16>
    tpu.vector_store %arg3[%c0_15, %c0_16, %c0_17], %27 {strides = array<i32>} : memref<4x128x128xbf16, #tpu.memory_space<vmem>>, vector<4x128x128xbf16>,
    %cst_18 = arith.constant 2.000000e+00 : f32
    %29 = vector.broadcast %cst_18 : f32 to vector<4x128x128xf32>
    %30 = arith.mulf %29, %3 : vector<4x128x128xf32>
    %cst_19 = arith.constant 1.000000e+00 : f32
    %31 = vector.broadcast %cst_19 : f32 to vector<4x128x128xf32>
    %32 = arith.subf %31, %3 : vector<4x128x128xf32>
    %cst_20 = arith.constant 0.000000e+00 : f32
    %33 = vector.broadcast %cst_20 : f32 to vector<4x128x128xf32>
    %34 = arith.subf %33, %12 : vector<4x128x128xf32>
    %cst_21 = arith.constant 0.000000e+00 : f32
    %35 = vector.broadcast %cst_21 : f32 to vector<4x128x128xf32>
    %36 = arith.maximumf %34, %35 : vector<4x128x128xf32>
    %37 = arith.mulf %30, %36 : vector<4x128x128xf32>
    %cst_22 = arith.constant 0.000000e+00 : f32
    %38 = vector.broadcast %cst_22 : f32 to vector<4x128x128xf32>
    %39 = arith.maximumf %12, %38 : vector<4x128x128xf32>
    %40 = arith.mulf %32, %39 : vector<4x128x128xf32>
    %41 = arith.addf %37, %40 : vector<4x128x128xf32>
    %42 = arith.addf %30, %32 : vector<4x128x128xf32>
    %43 = arith.mulf %42, %17 : vector<4x128x128xf32>
    %44 = arith.addf %41, %43 : vector<4x128x128xf32>
    %45 = arith.mulf %44, %5 : vector<4x128x128xf32>
    %cst_23 = arith.constant dense<0.000000e+00> : vector<128xf32>
    %46 = vector.multi_reduction <add>, %45, %cst_23 [0, 1] : vector<4x128x128xf32> to vector<128xf32>
    %cst_24 = arith.constant dense<0.000000e+00> : vector<128xf32>
    %47 = vector.multi_reduction <add>, %5, %cst_24 [0, 1] : vector<4x128x128xf32> to vector<128xf32>
    %cst_25 = arith.constant 0.000000e+00 : f32
    %48 = vector.broadcast %cst_25 : f32 to vector<6x128xf32>
    %49 = vector.shape_cast %46 : vector<128xf32> to vector<1x128xf32>
    %50 = vector.shape_cast %47 : vector<128xf32> to vector<1x128xf32>
    %51 = tpu.concatenate %49, %50, %48 in 0 : vector<1x128xf32>, vector<1x128xf32>, vector<6x128xf32> -> vector<8x128xf32>
    %52 = vector.shape_cast %51 : vector<8x128xf32> to vector<1x8x128xf32>
    %c0_26 = arith.constant 0 : index
    %c0_27 = arith.constant 0 : index
    %c0_28 = arith.constant 0 : index
    %53 = vector.load %arg4[%c0_26, %c0_27, %c0_28] : memref<1x8x128xf32, #tpu.memory_space<vmem>>, vector<1x8x128xf32>
    tpu.vector_store %arg4[%c0_26, %c0_27, %c0_28], %52 {strides = array<i32>} : memref<1x8x128xf32, #tpu.memory_space<vmem>>, vector<1x8x128xf32>,
    return
  }
  func.func @transform_0(%arg0: i32) -> (i32, i32, i32) {
    %c0_i32 = arith.constant 0 : i32
    %c0_i32_0 = arith.constant 0 : i32
    %c0_i32_1 = arith.constant 0 : i32
    return %arg0, %c0_i32, %c0_i32_0 : i32, i32, i32
  }
  func.func @transform_1(%arg0: i32) -> (i32, i32) {
    %c0_i32 = arith.constant 0 : i32
    %c0_i32_0 = arith.constant 0 : i32
    %c0_i32_1 = arith.constant 0 : i32
    return %c0_i32, %c0_i32_0 : i32, i32
  }
  func.func @transform_2(%arg0: i32) -> (i32, i32, i32) {
    %c0_i32 = arith.constant 0 : i32
    %c0_i32_0 = arith.constant 0 : i32
    %c0_i32_1 = arith.constant 0 : i32
    return %arg0, %c0_i32, %c0_i32_0 : i32, i32, i32
  }
  func.func @transform_3(%arg0: i32) -> (i32, i32, i32) {
    %c0_i32 = arith.constant 0 : i32
    %c0_i32_0 = arith.constant 0 : i32
    %c0_i32_1 = arith.constant 0 : i32
    return %arg0, %c0_i32, %c0_i32_0 : i32, i32, i32
  }
}

</mosaic_0001>

<llo_original>
// kernel: trainer_predict_and_loss.1
$region0: #{trainer_predict_and_loss.1}
  #allocation0 [shape = 'u32[]', space=smem, size = 0x4, offset = 0x4, fixed_abs, tag = 'smem constant byte address 0x4 - core index']
  #allocation1 [shape = 'u32[144,128]{1,0:T(1,128)}', space=vmem, size = 0x12000, scoped, tag = 'internal scratch']
  %s0 = inlined_call_operand.hbm [shape: bf16[8,128,512], index: 0, kind: input, shape index: {}]
  %s1 = inlined_call_operand.hbm [shape: bf16[128,128], index: 1, kind: input, shape index: {}]
  %s2 = inlined_call_operand.hbm [shape: bf16[8,128,128], index: 2, kind: output, shape index: {0}]
  %s3 = inlined_call_operand.vmem [shape: f32[2,8,128], index: 3, kind: output, shape index: {1}]
  %4 = xla_tuple %s2, %s3
  %s5 = sld [smem:[#allocation0]]
  $region57: #{trainer_predict_and_loss.1} parent=0
    _
  %s7 = ssub.s32 1, %s5
  %s8 = scalar_select 0, %s7, %s5
  $region1: #{trainer_predict_and_loss.1} parent=0
    #allocation2 [shape = 'u8[1048576]{0}', space=vmem, size = 0x100000, scoped, tag = 'input window, operand 0']
    #allocation3 [shape = 's32[2]{0}', space=sflag, size = 0x8, scoped, tag = 'scoped memory for trainer_predict_and_loss.1']
    #allocation4 [shape = 's32[2]{0}', space=sflag, size = 0x8, scoped, tag = 'scoped memory for trainer_predict_and_loss.1']
    #allocation5 [shape = 'u8[32768]{0}', space=vmem, size = 0x8000, scoped, tag = 'input window, operand 1, single buffered']
    #allocation6 [shape = 's32[1]{0}', space=sflag, size = 0x4, scoped, tag = 'scoped memory for trainer_predict_and_loss.1']
    #allocation7 [shape = 'u8[262144]{0}', space=vmem, size = 0x40000, scoped, tag = 'output window, operand 0']
    %9 = vsyncpa [#allocation3], 0
    %s10 = scalar_lea.sflag [#allocation3], 1
    %11 = vsyncpa %s10, 0
    %12 = vsyncpa [#allocation6], 0
    %13 = vsyncpa [#allocation4], 0
    %s14 = scalar_lea.sflag [#allocation4], 1
    %15 = vsyncpa %s14, 0
    loop: start=0, step=1, limit=4
    $region2: #{trainer_predict_and_loss.1} parent=1 // loop_pre_header
      _
    $region3: #{trainer_predict_and_loss.1} parent=1 // loop_header
      %s17 = sphi 0, %s21
      %p18 = scmp.ge.s32.totalorder %s17, 4
      %s27 = sphi 0, %s29
      %s30 = sphi 0, %s27
      %s31 = sphi 0, %s30
      %s47 = sphi 0, %s31
      %s51 = sphi 0, %s51
      %s53 = sphi 0, %s51
      %s54 = sphi 0, %s53
      %s68 = sphi 0, %s54
      %s74 = sphi 0, %s76
      %s77 = sphi 0, %s74
      %s78 = sphi 0, %s77
      %s94 = sphi 0, %s78
      %s100 = sphi 0, %s102
      %s103 = sphi 0, %s100
      %s104 = sphi 0, %s103
      %s120 = sphi 0, %s104
    $region4: #{trainer_predict_and_loss.1} parent=1 // loop_header_branch
      %20 = sbr.rel (%p18) target = $region8
    $region5: #{trainer_predict_and_loss.1} parent=1 // loop_body
      %s22 = ssub.s32 %s17, 1
      %s23 = ssub.s32 %s17, 2
      %s24 = sadd.s32 %s17, 1
      %s25 = ssub.s32 %s17, %s24
      %p26 = scmp.eq.s32.totalorder %s25, 0
      %s28 = sadd.s32 %s27, 1
      %s29 = scalar_select %p26, %s27, %s28
      %p32 = pneg %p26
      %p33 = scmp.eq.s32.totalorder %s17, 1
      %p34 = por %p32, %p33
      %p35 = scmp.ne.s32.totalorder %s27, %s30
      %p36 = scmp.eq.s32.totalorder %s17, 0
      %p37 = por %p35, %p36
      %p38 = scmp.ne.s32.totalorder %s27, %s30
      %p39 = scmp.eq.s32.totalorder %s22, 1
      %p40 = por %p38, %p39
      %p41 = scmp.ne.s32.totalorder %s30, %s31
      %p42 = scmp.eq.s32.totalorder %s22, 0
      %p43 = por %p41, %p42
      %p44 = scmp.ne.s32.totalorder %s30, %s31
      %p45 = scmp.eq.s32.totalorder %s23, 1
      %p46 = por %p44, %p45
      %p48 = scmp.ne.s32.totalorder %s31, %s47
      %p49 = scmp.eq.s32.totalorder %s23, 0
      %p50 = por %p48, %p49
      %s52 = sadd.s32 %s51, 1
      %p55 = scmp.eq.s32.totalorder %s17, 1
      %p56 = scmp.ne.s32.totalorder %s51, %s53
      %p57 = scmp.eq.s32.totalorder %s17, 0
      %p58 = por %p56, %p57
      %p59 = scmp.ne.s32.totalorder %s51, %s53
      %p60 = scmp.eq.s32.totalorder %s22, 1
      %p61 = por %p59, %p60
      %p62 = scmp.ne.s32.totalorder %s53, %s54
      %p63 = scmp.eq.s32.totalorder %s22, 0
      %p64 = por %p62, %p63
      %p65 = scmp.ne.s32.totalorder %s53, %s54
      %p66 = scmp.eq.s32.totalorder %s23, 1
      %p67 = por %p65, %p66
      %p69 = scmp.ne.s32.totalorder %s54, %s68
      %p70 = scmp.eq.s32.totalorder %s23, 0
      %p71 = por %p69, %p70
      %s72 = ssub.s32 %s17, %s24
      %p73 = scmp.eq.s32.totalorder %s72, 0
      %s75 = sadd.s32 %s74, 1
      %s76 = scalar_select %p73, %s74, %s75
      %p79 = pneg %p73
      %p80 = scmp.eq.s32.totalorder %s17, 1
      %p81 = por %p79, %p80
      %p82 = scmp.ne.s32.totalorder %s74, %s77
      %p83 = scmp.eq.s32.totalorder %s17, 0
      %p84 = por %p82, %p83
      %p85 = scmp.ne.s32.totalorder %s74, %s77
      %p86 = scmp.eq.s32.totalorder %s22, 1
      %p87 = por %p85, %p86
      %p88 = scmp.ne.s32.totalorder %s77, %s78
      %p89 = scmp.eq.s32.totalorder %s22, 0
      %p90 = por %p88, %p89
      %p91 = scmp.ne.s32.totalorder %s77, %s78
      %p92 = scmp.eq.s32.totalorder %s23, 1
      %p93 = por %p91, %p92
      %p95 = scmp.ne.s32.totalorder %s78, %s94
      %p96 = scmp.eq.s32.totalorder %s23, 0
      %p97 = por %p95, %p96
      %s98 = ssub.s32 %s17, %s24
      %p99 = scmp.eq.s32.totalorder %s98, 0
      %s101 = sadd.s32 %s100, 1
      %s102 = scalar_select %p99, %s100, %s101
      %p105 = pneg %p99
      %p106 = scmp.eq.s32.totalorder %s17, 1
      %p107 = por %p105, %p106
      %p108 = scmp.ne.s32.totalorder %s100, %s103
      %p109 = scmp.eq.s32.totalorder %s17, 0
      %p110 = por %p108, %p109
      %p111 = scmp.ne.s32.totalorder %s100, %s103
      %p112 = scmp.eq.s32.totalorder %s22, 1
      %p113 = por %p111, %p112
      %p114 = scmp.ne.s32.totalorder %s103, %s104
      %p115 = scmp.eq.s32.totalorder %s22, 0
      %p116 = por %p114, %p115
      %p117 = scmp.ne.s32.totalorder %s103, %s104
      %p118 = scmp.eq.s32.totalorder %s23, 1
      %p119 = por %p117, %p118
      %p121 = scmp.ne.s32.totalorder %s104, %s120
      %p122 = scmp.eq.s32.totalorder %s23, 0
      %p123 = por %p121, %p122
      %p124 = scmp.le.s32.totalorder 1, %s17
      %p125 = scmp.lt.s32.totalorder %s17, 3
      %p126 = pnand %p124, %p125
      %p127 = pneg %p126
      // Predicated region
      $region9: #{trainer_predict_and_loss.1} parent=5 // pred_check
        _
      $region10: #{trainer_predict_and_loss.1} parent=5 // pred_check_branch
        %129 = sbr.rel (%p126) target = $region12
      $region11: #{trainer_predict_and_loss.1} parent=5 // pred_region
        %s130 = ssub.s32 %s17, 1
        // Predicated region
        $region13: #{trainer_predict_and_loss.1} parent=11 // pred_check
          %p131 = pneg %p64
        $region14: #{trainer_predict_and_loss.1} parent=11 // pred_check_branch
          %133 = sbr.rel (%p131) target = $region16
        $region15: #{trainer_predict_and_loss.1} parent=11 // pred_region
          %s135 = ssub.s32 1024, 1024
          %136 = vsyncadd [#allocation6], %s135
          %s137 = sshll.u32 [#allocation5], 4
          %s138 = int_to_ptr.vmem [resolvable:$true] %s137
          %143 = dma.hbm_to_vmem [thread:$0]  %s1, 1024, %s138, [#allocation6], 64, 64, 4
        $region16: #{trainer_predict_and_loss.1} parent=11 // pred_fallthru
          _
      $region12: #{trainer_predict_and_loss.1} parent=5 // pred_fallthru
        _
      %p144 = scmp.lt.s32.totalorder %s17, 2
      // Predicated region
      $region17: #{trainer_predict_and_loss.1} parent=5 // pred_check
        %p145 = pneg %p144
      $region18: #{trainer_predict_and_loss.1} parent=5 // pred_check_branch
        %147 = sbr.rel (%p145) target = $region20
      $region19: #{trainer_predict_and_loss.1} parent=5 // pred_region
        // Predicated region
        $region21: #{trainer_predict_and_loss.1} parent=19 // pred_check
          %p148 = pneg %p37
        $region22: #{trainer_predict_and_loss.1} parent=19 // pred_check_branch
          %150 = sbr.rel (%p148) target = $region24
        $region23: #{trainer_predict_and_loss.1} parent=19 // pred_region
          %s151 = sand.u32 %s27, 1
          %s152 = scalar_lea.sflag [#allocation3], %s151
          %s153 = sand.u32 %s27, 1
          %s154 = smul.addr %s153, 1024
          %s155 = scalar_lea.vmem [#allocation2], %s154
          %s156 = smul.u32 4, %s17
          %s158 = ssub.s32 16384, 16384
          %159 = vsyncadd %s152, %s158
          %s160 = smul.addr %s156, 64
          %s161 = smul.addr %s160, 64
          %s162 = scalar_lea.hbm %s0, %s161
          %s163 = sshll.u32 %s155, 4
          %s164 = int_to_ptr.vmem [resolvable:$true] %s163
          %169 = dma.hbm_to_vmem [thread:$0]  %s162, 16384, %s164, %s152, 256, 256, 16
        $region24: #{trainer_predict_and_loss.1} parent=19 // pred_fallthru
          _
      $region20: #{trainer_predict_and_loss.1} parent=5 // pred_fallthru
        _
      %p170 = scmp.le.s32.totalorder 1, %s17
      %p171 = scmp.lt.s32.totalorder %s17, 3
      %p172 = pnand %p170, %p171
      %p173 = pneg %p172
      // Predicated region
      $region25: #{trainer_predict_and_loss.1} parent=5 // pred_check
        _
      $region26: #{trainer_predict_and_loss.1} parent=5 // pred_check_branch
        %175 = sbr.rel (%p172) target = $region28
      $region27: #{trainer_predict_and_loss.1} parent=5 // pred_region
        %s176 = ssub.s32 %s17, 1
        %s177 = sand.u32 %s30, 1
        %s178 = scalar_lea.sflag [#allocation3], %s177
        %s179 = sand.u32 %s30, 1
        %s180 = smul.addr %s179, 1024
        %s181 = scalar_lea.vmem [#allocation2], %s180
        // Predicated region
        $region29: #{trainer_predict_and_loss.1} parent=27 // pred_check
          %p182 = pneg %p43
        $region30: #{trainer_predict_and_loss.1} parent=27 // pred_check_branch
          %184 = sbr.rel (%p182) target = $region32
        $region31: #{trainer_predict_and_loss.1} parent=27 // pred_region
          %185 = dma.done %s178, 16384
        $region32: #{trainer_predict_and_loss.1} parent=27 // pred_fallthru
          _
        // Predicated region
        $region33: #{trainer_predict_and_loss.1} parent=27 // pred_check
          %p186 = pneg %p64
        $region34: #{trainer_predict_and_loss.1} parent=27 // pred_check_branch
          %188 = sbr.rel (%p186) target = $region36
        $region35: #{trainer_predict_and_loss.1} parent=27 // pred_region
          %189 = dma.done [#allocation6], 1024
        $region36: #{trainer_predict_and_loss.1} parent=27 // pred_fallthru
          _
        %s190 = sand.u32 %s30, 1
        %s191 = scalar_lea.sflag [#allocation3], %s190
        %s192 = sand.u32 %s30, 1
        %s193 = smul.addr %s192, 1024
        %s194 = scalar_lea.vmem [#allocation2], %s193
        %p195 = pneg %p43
        %p196 = pneg %p40
        %p197 = pneg %p64
        %p198 = pneg %p61
        %p199 = pneg %p90
        %p200 = pneg %p87
        %s201 = sand.u32 %s77, 1
        %s202 = scalar_lea.sflag [#allocation4], %s201
        %s203 = sand.u32 %s77, 1
        %s204 = smul.addr %s203, 256
        %s205 = scalar_lea.vmem [#allocation7], %s204
        %p206 = pneg %p116
        %p207 = pneg %p113
        %p208 = scmp.lt.s32.totalorder %s22, 1
        %s209 = scalar_select %p208, %s22, 1
        %s210 = smul.addr %s209, 8
        %s211 = scalar_lea.vmem %s3, %s210
        %s212 = smul.u32 4, %s22
        %s213 = smul.u32 4, %s22
        %p214 = scmp.lt.s32.totalorder %s22, 1
        %s215 = scalar_select %p214, %s22, 1
        %s216 = smul.addr %s215, 8
        %s217 = scalar_lea.vmem %s3, %s216
        %v219 = vld [vmem:[%s181] sm:$0xf]
        %v220 = vld [vmem:[%s181 + $0x10] sm:$0xf]
        %v221 = vld [vmem:[%s181 + $0x20] sm:$0xf]
        %v222 = vld [vmem:[%s181 + $0x30] sm:$0xf]
        %v223 = vld [vmem:[%s181 + $0x40] sm:$0xf]
        %v224 = vld [vmem:[%s181 + $0x50] sm:$0xf]
        %v225 = vld [vmem:[%s181 + $0x60] sm:$0xf]
        %v226 = vld [vmem:[%s181 + $0x70] sm:$0xf]
        %v227 = vld [vmem:[%s181 + $0x80] sm:$0xf]
        %v228 = vld [vmem:[%s181 + $0x90] sm:$0xf]
        %v229 = vld [vmem:[%s181 + $0xa0] sm:$0xf]
        %v230 = vld [vmem:[%s181 + $0xb0] sm:$0xf]
        %v231 = vld [vmem:[%s181 + $0xc0] sm:$0xf]
        %v232 = vld [vmem:[%s181 + $0xd0] sm:$0xf]
        %v233 = vld [vmem:[%s181 + $0xe0] sm:$0xf]
        %v234 = vld [vmem:[%s181 + $0xf0] sm:$0xf]
        %v235 = vld [vmem:[%s181 + $0x100] sm:$0xf]
        %v236 = vld [vmem:[%s181 + $0x110] sm:$0xf]
        %v237 = vld [vmem:[%s181 + $0x120] sm:$0xf]
        %v238 = vld [vmem:[%s181 + $0x130] sm:$0xf]
        %v239 = vld [vmem:[%s181 + $0x140] sm:$0xf]
        %v240 = vld [vmem:[%s181 + $0x150] sm:$0xf]
        %v241 = vld [vmem:[%s181 + $0x160] sm:$0xf]
        %v242 = vld [vmem:[%s181 + $0x170] sm:$0xf]
        %v243 = vld [vmem:[%s181 + $0x180] sm:$0xf]
        %v244 = vld [vmem:[%s181 + $0x190] sm:$0xf]
        %v245 = vld [vmem:[%s181 + $0x1a0] sm:$0xf]
        %v246 = vld [vmem:[%s181 + $0x1b0] sm:$0xf]
        %v247 = vld [vmem:[%s181 + $0x1c0] sm:$0xf]
        %v248 = vld [vmem:[%s181 + $0x1d0] sm:$0xf]
        %v249 = vld [vmem:[%s181 + $0x1e0] sm:$0xf]
        %v250 = vld [vmem:[%s181 + $0x1f0] sm:$0xf]
        %v251 = vld [vmem:[%s181 + $0x200] sm:$0xf]
        %v252 = vld [vmem:[%s181 + $0x210] sm:$0xf]
        %v253 = vld [vmem:[%s181 + $0x220] sm:$0xf]
        %v254 = vld [vmem:[%s181 + $0x230] sm:$0xf]
        %v255 = vld [vmem:[%s181 + $0x240] sm:$0xf]
        %v256 = vld [vmem:[%s181 + $0x250] sm:$0xf]
        %v257 = vld [vmem:[%s181 + $0x260] sm:$0xf]
        %v258 = vld [vmem:[%s181 + $0x270] sm:$0xf]
        %v259 = vld [vmem:[%s181 + $0x280] sm:$0xf]
        %v260 = vld [vmem:[%s181 + $0x290] sm:$0xf]
        %v261 = vld [vmem:[%s181 + $0x2a0] sm:$0xf]
        %v262 = vld [vmem:[%s181 + $0x2b0] sm:$0xf]
        %v263 = vld [vmem:[%s181 + $0x2c0] sm:$0xf]
        %v264 = vld [vmem:[%s181 + $0x2d0] sm:$0xf]
        %v265 = vld [vmem:[%s181 + $0x2e0] sm:$0xf]
        %v266 = vld [vmem:[%s181 + $0x2f0] sm:$0xf]
        %v267 = vld [vmem:[%s181 + $0x300] sm:$0xf]
        %v268 = vld [vmem:[%s181 + $0x310] sm:$0xf]
        %v269 = vld [vmem:[%s181 + $0x320] sm:$0xf]
        %v270 = vld [vmem:[%s181 + $0x330] sm:$0xf]
        %v271 = vld [vmem:[%s181 + $0x340] sm:$0xf]
        %v272 = vld [vmem:[%s181 + $0x350] sm:$0xf]
        %v273 = vld [vmem:[%s181 + $0x360] sm:$0xf]
        %v274 = vld [vmem:[%s181 + $0x370] sm:$0xf]
        %v275 = vld [vmem:[%s181 + $0x380] sm:$0xf]
        %v276 = vld [vmem:[%s181 + $0x390] sm:$0xf]
        %v277 = vld [vmem:[%s181 + $0x3a0] sm:$0xf]
        %v278 = vld [vmem:[%s181 + $0x3b0] sm:$0xf]
        %v279 = vld [vmem:[%s181 + $0x3c0] sm:$0xf]
        %v280 = vld [vmem:[%s181 + $0x3d0] sm:$0xf]
        %v281 = vld [vmem:[%s181 + $0x3e0] sm:$0xf]
        %v282 = vld [vmem:[%s181 + $0x3f0] sm:$0xf]
        %v283 = vld [vmem:[%s181 + $0x4] sm:$0xf]
        %v284 = vld [vmem:[%s181 + $0x14] sm:$0xf]
        %v285 = vld [vmem:[%s181 + $0x24] sm:$0xf]
        %v286 = vld [vmem:[%s181 + $0x34] sm:$0xf]
        %v287 = vld [vmem:[%s181 + $0x44] sm:$0xf]
        %v288 = vld [vmem:[%s181 + $0x54] sm:$0xf]
        %v289 = vld [vmem:[%s181 + $0x64] sm:$0xf]
        %v290 = vld [vmem:[%s181 + $0x74] sm:$0xf]
        %v291 = vld [vmem:[%s181 + $0x84] sm:$0xf]
        %v292 = vld [vmem:[%s181 + $0x94] sm:$0xf]
        %v293 = vld [vmem:[%s181 + $0xa4] sm:$0xf]
        %v294 = vld [vmem:[%s181 + $0xb4] sm:$0xf]
        %v295 = vld [vmem:[%s181 + $0xc4] sm:$0xf]
        %v296 = vld [vmem:[%s181 + $0xd4] sm:$0xf]
        %v297 = vld [vmem:[%s181 + $0xe4] sm:$0xf]
        %v298 = vld [vmem:[%s181 + $0xf4] sm:$0xf]
        %v299 = vld [vmem:[%s181 + $0x104] sm:$0xf]
        %v300 = vld [vmem:[%s181 + $0x114] sm:$0xf]
        %v301 = vld [vmem:[%s181 + $0x124] sm:$0xf]
        %v302 = vld [vmem:[%s181 + $0x134] sm:$0xf]
        %v303 = vld [vmem:[%s181 + $0x144] sm:$0xf]
        %v304 = vld [vmem:[%s181 + $0x154] sm:$0xf]
        %v305 = vld [vmem:[%s181 + $0x164] sm:$0xf]
        %v306 = vld [vmem:[%s181 + $0x174] sm:$0xf]
        %v307 = vld [vmem:[%s181 + $0x184] sm:$0xf]
        %v308 = vld [vmem:[%s181 + $0x194] sm:$0xf]
        %v309 = vld [vmem:[%s181 + $0x1a4] sm:$0xf]
        %v310 = vld [vmem:[%s181 + $0x1b4] sm:$0xf]
        %v311 = vld [vmem:[%s181 + $0x1c4] sm:$0xf]
        %v312 = vld [vmem:[%s181 + $0x1d4] sm:$0xf]
        %v313 = vld [vmem:[%s181 + $0x1e4] sm:$0xf]
        %v314 = vld [vmem:[%s181 + $0x1f4] sm:$0xf]
        %v315 = vld [vmem:[%s181 + $0x204] sm:$0xf]
        %v316 = vld [vmem:[%s181 + $0x214] sm:$0xf]
        %v317 = vld [vmem:[%s181 + $0x224] sm:$0xf]
        %v318 = vld [vmem:[%s181 + $0x234] sm:$0xf]
        %v319 = vld [vmem:[%s181 + $0x244] sm:$0xf]
        %v320 = vld [vmem:[%s181 + $0x254] sm:$0xf]
        %v321 = vld [vmem:[%s181 + $0x264] sm:$0xf]
        %v322 = vld [vmem:[%s181 + $0x274] sm:$0xf]
        %v323 = vld [vmem:[%s181 + $0x284] sm:$0xf]
        %v324 = vld [vmem:[%s181 + $0x294] sm:$0xf]
        %v325 = vld [vmem:[%s181 + $0x2a4] sm:$0xf]
        %v326 = vld [vmem:[%s181 + $0x2b4] sm:$0xf]
        %v327 = vld [vmem:[%s181 + $0x2c4] sm:$0xf]
        %v328 = vld [vmem:[%s181 + $0x2d4] sm:$0xf]
        %v329 = vld [vmem:[%s181 + $0x2e4] sm:$0xf]
        %v330 = vld [vmem:[%s181 + $0x2f4] sm:$0xf]
        %v331 = vld [vmem:[%s181 + $0x304] sm:$0xf]
        %v332 = vld [vmem:[%s181 + $0x314] sm:$0xf]
        %v333 = vld [vmem:[%s181 + $0x324] sm:$0xf]
        %v334 = vld [vmem:[%s181 + $0x334] sm:$0xf]
        %v335 = vld [vmem:[%s181 + $0x344] sm:$0xf]
        %v336 = vld [vmem:[%s181 + $0x354] sm:$0xf]
        %v337 = vld [vmem:[%s181 + $0x364] sm:$0xf]
        %v338 = vld [vmem:[%s181 + $0x374] sm:$0xf]
        %v339 = vld [vmem:[%s181 + $0x384] sm:$0xf]
        %v340 = vld [vmem:[%s181 + $0x394] sm:$0xf]
        %v341 = vld [vmem:[%s181 + $0x3a4] sm:$0xf]
        %v342 = vld [vmem:[%s181 + $0x3b4] sm:$0xf]
        %v343 = vld [vmem:[%s181 + $0x3c4] sm:$0xf]
        %v344 = vld [vmem:[%s181 + $0x3d4] sm:$0xf]
        %v345 = vld [vmem:[%s181 + $0x3e4] sm:$0xf]
        %v346 = vld [vmem:[%s181 + $0x3f4] sm:$0xf]
        %v347 = vld [vmem:[%s181 + $0x8] sm:$0xf]
        %v348 = vld [vmem:[%s181 + $0x18] sm:$0xf]
        %v349 = vld [vmem:[%s181 + $0x28] sm:$0xf]
        %v350 = vld [vmem:[%s181 + $0x38] sm:$0xf]
        %v351 = vld [vmem:[%s181 + $0x48] sm:$0xf]
        %v352 = vld [vmem:[%s181 + $0x58] sm:$0xf]
        %v353 = vld [vmem:[%s181 + $0x68] sm:$0xf]
        %v354 = vld [vmem:[%s181 + $0x78] sm:$0xf]
        %v355 = vld [vmem:[%s181 + $0x88] sm:$0xf]
        %v356 = vld [vmem:[%s181 + $0x98] sm:$0xf]
        %v357 = vld [vmem:[%s181 + $0xa8] sm:$0xf]
        %v358 = vld [vmem:[%s181 + $0xb8] sm:$0xf]
        %v359 = vld [vmem:[%s181 + $0xc8] sm:$0xf]
        %v360 = vld [vmem:[%s181 + $0xd8] sm:$0xf]
        %v361 = vld [vmem:[%s181 + $0xe8] sm:$0xf]
        %v362 = vld [vmem:[%s181 + $0xf8] sm:$0xf]
        %v363 = vld [vmem:[%s181 + $0x108] sm:$0xf]
        %v364 = vld [vmem:[%s181 + $0x118] sm:$0xf]
        %v365 = vld [vmem:[%s181 + $0x128] sm:$0xf]
        %v366 = vld [vmem:[%s181 + $0x138] sm:$0xf]
        %v367 = vld [vmem:[%s181 + $0x148] sm:$0xf]
        %v368 = vld [vmem:[%s181 + $0x158] sm:$0xf]
        %v369 = vld [vmem:[%s181 + $0x168] sm:$0xf]
        %v370 = vld [vmem:[%s181 + $0x178] sm:$0xf]
        %v371 = vld [vmem:[%s181 + $0x188] sm:$0xf]
        %v372 = vld [vmem:[%s181 + $0x198] sm:$0xf]
        %v373 = vld [vmem:[%s181 + $0x1a8] sm:$0xf]
        %v374 = vld [vmem:[%s181 + $0x1b8] sm:$0xf]
        %v375 = vld [vmem:[%s181 + $0x1c8] sm:$0xf]
        %v376 = vld [vmem:[%s181 + $0x1d8] sm:$0xf]
        %v377 = vld [vmem:[%s181 + $0x1e8] sm:$0xf]
        %v378 = vld [vmem:[%s181 + $0x1f8] sm:$0xf]
        %v379 = vld [vmem:[%s181 + $0x208] sm:$0xf]
        %v380 = vld [vmem:[%s181 + $0x218] sm:$0xf]
        %v381 = vld [vmem:[%s181 + $0x228] sm:$0xf]
        %v382 = vld [vmem:[%s181 + $0x238] sm:$0xf]
        %v383 = vld [vmem:[%s181 + $0x248] sm:$0xf]
        %v384 = vld [vmem:[%s181 + $0x258] sm:$0xf]
        %v385 = vld [vmem:[%s181 + $0x268] sm:$0xf]
        %v386 = vld [vmem:[%s181 + $0x278] sm:$0xf]
        %v387 = vld [vmem:[%s181 + $0x288] sm:$0xf]
        %v388 = vld [vmem:[%s181 + $0x298] sm:$0xf]
        %v389 = vld [vmem:[%s181 + $0x2a8] sm:$0xf]
        %v390 = vld [vmem:[%s181 + $0x2b8] sm:$0xf]
        %v391 = vld [vmem:[%s181 + $0x2c8] sm:$0xf]
        %v392 = vld [vmem:[%s181 + $0x2d8] sm:$0xf]
        %v393 = vld [vmem:[%s181 + $0x2e8] sm:$0xf]
        %v394 = vld [vmem:[%s181 + $0x2f8] sm:$0xf]
        %v395 = vld [vmem:[%s181 + $0x308] sm:$0xf]
        %v396 = vld [vmem:[%s181 + $0x318] sm:$0xf]
        %v397 = vld [vmem:[%s181 + $0x328] sm:$0xf]
        %v398 = vld [vmem:[%s181 + $0x338] sm:$0xf]
        %v399 = vld [vmem:[%s181 + $0x348] sm:$0xf]
        %v400 = vld [vmem:[%s181 + $0x358] sm:$0xf]
        %v401 = vld [vmem:[%s181 + $0x368] sm:$0xf]
        %v402 = vld [vmem:[%s181 + $0x378] sm:$0xf]
        %v403 = vld [vmem:[%s181 + $0x388] sm:$0xf]
        %v404 = vld [vmem:[%s181 + $0x398] sm:$0xf]
        %v405 = vld [vmem:[%s181 + $0x3a8] sm:$0xf]
        %v406 = vld [vmem:[%s181 + $0x3b8] sm:$0xf]
        %v407 = vld [vmem:[%s181 + $0x3c8] sm:$0xf]
        %v408 = vld [vmem:[%s181 + $0x3d8] sm:$0xf]
        %v409 = vld [vmem:[%s181 + $0x3e8] sm:$0xf]
        %v410 = vld [vmem:[%s181 + $0x3f8] sm:$0xf]
        %v411 = vunpack.c.l.bf16 %v347
        %v412 = vunpack.c.l.bf16 %v348
        %v413 = vunpack.c.l.bf16 %v349
        %v414 = vunpack.c.l.bf16 %v350
        %v415 = vunpack.c.l.bf16 %v351
        %v416 = vunpack.c.l.bf16 %v352
        %v417 = vunpack.c.l.bf16 %v353
        %v418 = vunpack.c.l.bf16 %v354
        %v419 = vunpack.c.l.bf16 %v355
        %v420 = vunpack.c.l.bf16 %v356
        %v421 = vunpack.c.l.bf16 %v357
        %v422 = vunpack.c.l.bf16 %v358
        %v423 = vunpack.c.l.bf16 %v359
        %v424 = vunpack.c.l.bf16 %v360
        %v425 = vunpack.c.l.bf16 %v361
        %v426 = vunpack.c.l.bf16 %v362
        %v427 = vunpack.c.l.bf16 %v363
        %v428 = vunpack.c.l.bf16 %v364
        %v429 = vunpack.c.l.bf16 %v365
        %v430 = vunpack.c.l.bf16 %v366
        %v431 = vunpack.c.l.bf16 %v367
        %v432 = vunpack.c.l.bf16 %v368
        %v433 = vunpack.c.l.bf16 %v369
        %v434 = vunpack.c.l.bf16 %v370
        %v435 = vunpack.c.l.bf16 %v371
        %v436 = vunpack.c.l.bf16 %v372
        %v437 = vunpack.c.l.bf16 %v373
        %v438 = vunpack.c.l.bf16 %v374
        %v439 = vunpack.c.l.bf16 %v375
        %v440 = vunpack.c.l.bf16 %v376
        %v441 = vunpack.c.l.bf16 %v377
        %v442 = vunpack.c.l.bf16 %v378
        %v443 = vunpack.c.l.bf16 %v379
        %v444 = vunpack.c.l.bf16 %v380
        %v445 = vunpack.c.l.bf16 %v381
        %v446 = vunpack.c.l.bf16 %v382
        %v447 = vunpack.c.l.bf16 %v383
        %v448 = vunpack.c.l.bf16 %v384
        %v449 = vunpack.c.l.bf16 %v385
        %v450 = vunpack.c.l.bf16 %v386
        %v451 = vunpack.c.l.bf16 %v387
        %v452 = vunpack.c.l.bf16 %v388
        %v453 = vunpack.c.l.bf16 %v389
        %v454 = vunpack.c.l.bf16 %v390
        %v455 = vunpack.c.l.bf16 %v391
        %v456 = vunpack.c.l.bf16 %v392
        %v457 = vunpack.c.l.bf16 %v393
        %v458 = vunpack.c.l.bf16 %v394
        %v459 = vunpack.c.l.bf16 %v395
        %v460 = vunpack.c.l.bf16 %v396
        %v461 = vunpack.c.l.bf16 %v397
        %v462 = vunpack.c.l.bf16 %v398
        %v463 = vunpack.c.l.bf16 %v399
        %v464 = vunpack.c.l.bf16 %v400
        %v465 = vunpack.c.l.bf16 %v401
        %v466 = vunpack.c.l.bf16 %v402
        %v467 = vunpack.c.l.bf16 %v403
        %v468 = vunpack.c.l.bf16 %v404
        %v469 = vunpack.c.l.bf16 %v405
        %v470 = vunpack.c.l.bf16 %v406
        %v471 = vunpack.c.l.bf16 %v407
        %v472 = vunpack.c.l.bf16 %v408
        %v473 = vunpack.c.l.bf16 %v409
        %v474 = vunpack.c.l.bf16 %v410
        %v475 = vld [vmem:[%s181 + $0xc] sm:$0xf]
        %v476 = vld [vmem:[%s181 + $0x1c] sm:$0xf]
        %v477 = vld [vmem:[%s181 + $0x2c] sm:$0xf]
        %v478 = vld [vmem:[%s181 + $0x3c] sm:$0xf]
        %v479 = vld [vmem:[%s181 + $0x4c] sm:$0xf]
        %v480 = vld [vmem:[%s181 + $0x5c] sm:$0xf]
        %v481 = vld [vmem:[%s181 + $0x6c] sm:$0xf]
        %v482 = vld [vmem:[%s181 + $0x7c] sm:$0xf]
        %v483 = vld [vmem:[%s181 + $0x8c] sm:$0xf]
        %v484 = vld [vmem:[%s181 + $0x9c] sm:$0xf]
        %v485 = vld [vmem:[%s181 + $0xac] sm:$0xf]
        %v486 = vld [vmem:[%s181 + $0xbc] sm:$0xf]
        %v487 = vld [vmem:[%s181 + $0xcc] sm:$0xf]
        %v488 = vld [vmem:[%s181 + $0xdc] sm:$0xf]
        %v489 = vld [vmem:[%s181 + $0xec] sm:$0xf]
        %v490 = vld [vmem:[%s181 + $0xfc] sm:$0xf]
        %v491 = vld [vmem:[%s181 + $0x10c] sm:$0xf]
        %v492 = vld [vmem:[%s181 + $0x11c] sm:$0xf]
        %v493 = vld [vmem:[%s181 + $0x12c] sm:$0xf]
        %v494 = vld [vmem:[%s181 + $0x13c] sm:$0xf]
        %v495 = vld [vmem:[%s181 + $0x14c] sm:$0xf]
        %v496 = vld [vmem:[%s181 + $0x15c] sm:$0xf]
        %v497 = vld [vmem:[%s181 + $0x16c] sm:$0xf]
        %v498 = vld [vmem:[%s181 + $0x17c] sm:$0xf]
        %v499 = vld [vmem:[%s181 + $0x18c] sm:$0xf]
        %v500 = vld [vmem:[%s181 + $0x19c] sm:$0xf]
        %v501 = vld [vmem:[%s181 + $0x1ac] sm:$0xf]
        %v502 = vld [vmem:[%s181 + $0x1bc] sm:$0xf]
        %v503 = vld [vmem:[%s181 + $0x1cc] sm:$0xf]
        %v504 = vld [vmem:[%s181 + $0x1dc] sm:$0xf]
        %v505 = vld [vmem:[%s181 + $0x1ec] sm:$0xf]
        %v506 = vld [vmem:[%s181 + $0x1fc] sm:$0xf]
        %v507 = vld [vmem:[%s181 + $0x20c] sm:$0xf]
        %v508 = vld [vmem:[%s181 + $0x21c] sm:$0xf]
        %v509 = vld [vmem:[%s181 + $0x22c] sm:$0xf]
        %v510 = vld [vmem:[%s181 + $0x23c] sm:$0xf]
        %v511 = vld [vmem:[%s181 + $0x24c] sm:$0xf]
        %v512 = vld [vmem:[%s181 + $0x25c] sm:$0xf]
        %v513 = vld [vmem:[%s181 + $0x26c] sm:$0xf]
        %v514 = vld [vmem:[%s181 + $0x27c] sm:$0xf]
        %v515 = vld [vmem:[%s181 + $0x28c] sm:$0xf]
        %v516 = vld [vmem:[%s181 + $0x29c] sm:$0xf]
        %v517 = vld [vmem:[%s181 + $0x2ac] sm:$0xf]
        %v518 = vld [vmem:[%s181 + $0x2bc] sm:$0xf]
        %v519 = vld [vmem:[%s181 + $0x2cc] sm:$0xf]
        %v520 = vld [vmem:[%s181 + $0x2dc] sm:$0xf]
        %v521 = vld [vmem:[%s181 + $0x2ec] sm:$0xf]
        %v522 = vld [vmem:[%s181 + $0x2fc] sm:$0xf]
        %v523 = vld [vmem:[%s181 + $0x30c] sm:$0xf]
        %v524 = vld [vmem:[%s181 + $0x31c] sm:$0xf]
        %v525 = vld [vmem:[%s181 + $0x32c] sm:$0xf]
        %v526 = vld [vmem:[%s181 + $0x33c] sm:$0xf]
        %v527 = vld [vmem:[%s181 + $0x34c] sm:$0xf]
        %v528 = vld [vmem:[%s181 + $0x35c] sm:$0xf]
        %v529 = vld [vmem:[%s181 + $0x36c] sm:$0xf]
        %v530 = vld [vmem:[%s181 + $0x37c] sm:$0xf]
        %v531 = vld [vmem:[%s181 + $0x38c] sm:$0xf]
        %v532 = vld [vmem:[%s181 + $0x39c] sm:$0xf]
        %v533 = vld [vmem:[%s181 + $0x3ac] sm:$0xf]
        %v534 = vld [vmem:[%s181 + $0x3bc] sm:$0xf]
        %v535 = vld [vmem:[%s181 + $0x3cc] sm:$0xf]
        %v536 = vld [vmem:[%s181 + $0x3dc] sm:$0xf]
        %v537 = vld [vmem:[%s181 + $0x3ec] sm:$0xf]
        %v538 = vld [vmem:[%s181 + $0x3fc] sm:$0xf]
        %v539 = vunpack.c.l.bf16 %v475
        %v540 = vunpack.c.l.bf16 %v476
        %v541 = vunpack.c.l.bf16 %v477
        %v542 = vunpack.c.l.bf16 %v478
        %v543 = vunpack.c.l.bf16 %v479
        %v544 = vunpack.c.l.bf16 %v480
        %v545 = vunpack.c.l.bf16 %v481
        %v546 = vunpack.c.l.bf16 %v482
        %v547 = vunpack.c.l.bf16 %v483
        %v548 = vunpack.c.l.bf16 %v484
        %v549 = vunpack.c.l.bf16 %v485
        %v550 = vunpack.c.l.bf16 %v486
        %v551 = vunpack.c.l.bf16 %v487
        %v552 = vunpack.c.l.bf16 %v488
        %v553 = vunpack.c.l.bf16 %v489
        %v554 = vunpack.c.l.bf16 %v490
        %v555 = vunpack.c.l.bf16 %v491
        %v556 = vunpack.c.l.bf16 %v492
        %v557 = vunpack.c.l.bf16 %v493
        %v558 = vunpack.c.l.bf16 %v494
        %v559 = vunpack.c.l.bf16 %v495
        %v560 = vunpack.c.l.bf16 %v496
        %v561 = vunpack.c.l.bf16 %v497
        %v562 = vunpack.c.l.bf16 %v498
        %v563 = vunpack.c.l.bf16 %v499
        %v564 = vunpack.c.l.bf16 %v500
        %v565 = vunpack.c.l.bf16 %v501
        %v566 = vunpack.c.l.bf16 %v502
        %v567 = vunpack.c.l.bf16 %v503
        %v568 = vunpack.c.l.bf16 %v504
        %v569 = vunpack.c.l.bf16 %v505
        %v570 = vunpack.c.l.bf16 %v506
        %v571 = vunpack.c.l.bf16 %v507
        %v572 = vunpack.c.l.bf16 %v508
        %v573 = vunpack.c.l.bf16 %v509
        %v574 = vunpack.c.l.bf16 %v510
        %v575 = vunpack.c.l.bf16 %v511
        %v576 = vunpack.c.l.bf16 %v512
        %v577 = vunpack.c.l.bf16 %v513
        %v578 = vunpack.c.l.bf16 %v514
        %v579 = vunpack.c.l.bf16 %v515
        %v580 = vunpack.c.l.bf16 %v516
        %v581 = vunpack.c.l.bf16 %v517
        %v582 = vunpack.c.l.bf16 %v518
        %v583 = vunpack.c.l.bf16 %v519
        %v584 = vunpack.c.l.bf16 %v520
        %v585 = vunpack.c.l.bf16 %v521
        %v586 = vunpack.c.l.bf16 %v522
        %v587 = vunpack.c.l.bf16 %v523
        %v588 = vunpack.c.l.bf16 %v524
        %v589 = vunpack.c.l.bf16 %v525
        %v590 = vunpack.c.l.bf16 %v526
        %v591 = vunpack.c.l.bf16 %v527
        %v592 = vunpack.c.l.bf16 %v528
        %v593 = vunpack.c.l.bf16 %v529
        %v594 = vunpack.c.l.bf16 %v530
        %v595 = vunpack.c.l.bf16 %v531
        %v596 = vunpack.c.l.bf16 %v532
        %v597 = vunpack.c.l.bf16 %v533
        %v598 = vunpack.c.l.bf16 %v534
        %v599 = vunpack.c.l.bf16 %v535
        %v600 = vunpack.c.l.bf16 %v536
        %v601 = vunpack.c.l.bf16 %v537
        %v602 = vunpack.c.l.bf16 %v538
        %v603 = vld [vmem:[#allocation5] sm:$0xf]
        %v604 = vld [vmem:[#allocation5 + $0x4] sm:$0xf]
        %v605 = vld [vmem:[#allocation5 + $0x8] sm:$0xf]
        %v606 = vld [vmem:[#allocation5 + $0xc] sm:$0xf]
        %v607 = vld [vmem:[#allocation5 + $0x10] sm:$0xf]
        %v608 = vld [vmem:[#allocation5 + $0x14] sm:$0xf]
        %v609 = vld [vmem:[#allocation5 + $0x18] sm:$0xf]
        %v610 = vld [vmem:[#allocation5 + $0x1c] sm:$0xf]
        %v611 = vld [vmem:[#allocation5 + $0x20] sm:$0xf]
        %v612 = vld [vmem:[#allocation5 + $0x24] sm:$0xf]
        %v613 = vld [vmem:[#allocation5 + $0x28] sm:$0xf]
        %v614 = vld [vmem:[#allocation5 + $0x2c] sm:$0xf]
        %v615 = vld [vmem:[#allocation5 + $0x30] sm:$0xf]
        %v616 = vld [vmem:[#allocation5 + $0x34] sm:$0xf]
        %v617 = vld [vmem:[#allocation5 + $0x38] sm:$0xf]
        %v618 = vld [vmem:[#allocation5 + $0x3c] sm:$0xf]
        %v683 = vunpack.c.l.b16 %v219
        %v684 = vunpack.c.l.b16 %v220
        %v685 = vunpack.c.l.b16 %v221
        %v686 = vunpack.c.l.b16 %v222
        %v687 = vunpack.c.l.b16 %v223
        %v688 = vunpack.c.l.b16 %v224
        %v689 = vunpack.c.l.b16 %v225
        %v690 = vunpack.c.l.b16 %v226
        %v691 = vunpack.c.l.b16 %v227
        %v692 = vunpack.c.l.b16 %v228
        %v693 = vunpack.c.l.b16 %v229
        %v694 = vunpack.c.l.b16 %v230
        %v695 = vunpack.c.l.b16 %v231
        %v696 = vunpack.c.l.b16 %v232
        %v697 = vunpack.c.l.b16 %v233
        %v698 = vunpack.c.l.b16 %v234
        %v699 = vunpack.c.l.b16 %v235
        %v700 = vunpack.c.l.b16 %v236
        %v701 = vunpack.c.l.b16 %v237
        %v702 = vunpack.c.l.b16 %v238
        %v703 = vunpack.c.l.b16 %v239
        %v704 = vunpack.c.l.b16 %v240
        %v705 = vunpack.c.l.b16 %v241
        %v706 = vunpack.c.l.b16 %v242
        %v707 = vunpack.c.l.b16 %v243
        %v708 = vunpack.c.l.b16 %v244
        %v709 = vunpack.c.l.b16 %v245
        %v710 = vunpack.c.l.b16 %v246
        %v711 = vunpack.c.l.b16 %v247
        %v712 = vunpack.c.l.b16 %v248
        %v713 = vunpack.c.l.b16 %v249
        %v714 = vunpack.c.l.b16 %v250
        %v715 = vunpack.c.l.b16 %v251
        %v716 = vunpack.c.l.b16 %v252
        %v717 = vunpack.c.l.b16 %v253
        %v718 = vunpack.c.l.b16 %v254
        %v719 = vunpack.c.l.b16 %v255
        %v720 = vunpack.c.l.b16 %v256
        %v721 = vunpack.c.l.b16 %v257
        %v722 = vunpack.c.l.b16 %v258
        %v723 = vunpack.c.l.b16 %v259
        %v724 = vunpack.c.l.b16 %v260
        %v725 = vunpack.c.l.b16 %v261
        %v726 = vunpack.c.l.b16 %v262
        %v727 = vunpack.c.l.b16 %v263
        %v728 = vunpack.c.l.b16 %v264
        %v729 = vunpack.c.l.b16 %v265
        %v730 = vunpack.c.l.b16 %v266
        %v731 = vunpack.c.l.b16 %v267
        %v732 = vunpack.c.l.b16 %v268
        %v733 = vunpack.c.l.b16 %v269
        %v734 = vunpack.c.l.b16 %v270
        %v735 = vunpack.c.l.b16 %v271
        %v736 = vunpack.c.l.b16 %v272
        %v737 = vunpack.c.l.b16 %v273
        %v738 = vunpack.c.l.b16 %v274
        %v739 = vunpack.c.l.b16 %v275
        %v740 = vunpack.c.l.b16 %v276
        %v741 = vunpack.c.l.b16 %v277
        %v742 = vunpack.c.l.b16 %v278
        %v743 = vunpack.c.l.b16 %v279
        %v744 = vunpack.c.l.b16 %v280
        %v745 = vunpack.c.l.b16 %v281
        %v746 = vunpack.c.l.b16 %v282
        %v747 = vpack.c.b16 %v684, %v683
        %v748 = vpack.c.b16 %v686, %v685
        %v749 = vpack.c.b16 %v688, %v687
        %v750 = vpack.c.b16 %v690, %v689
        %v751 = vpack.c.b16 %v692, %v691
        %v752 = vpack.c.b16 %v694, %v693
        %v753 = vpack.c.b16 %v696, %v695
        %v754 = vpack.c.b16 %v698, %v697
        %v755 = vpack.c.b16 %v700, %v699
        %v756 = vpack.c.b16 %v702, %v701
        %v757 = vpack.c.b16 %v704, %v703
        %v758 = vpack.c.b16 %v706, %v705
        %v759 = vpack.c.b16 %v708, %v707
        %v760 = vpack.c.b16 %v710, %v709
        %v761 = vpack.c.b16 %v712, %v711
        %v762 = vpack.c.b16 %v714, %v713
        %v763 = vpack.c.b16 %v716, %v715
        %v764 = vpack.c.b16 %v718, %v717
        %v765 = vpack.c.b16 %v720, %v719
        %v766 = vpack.c.b16 %v722, %v721
        %v767 = vpack.c.b16 %v724, %v723
        %v768 = vpack.c.b16 %v726, %v725
        %v769 = vpack.c.b16 %v728, %v727
        %v770 = vpack.c.b16 %v730, %v729
        %v771 = vpack.c.b16 %v732, %v731
        %v772 = vpack.c.b16 %v734, %v733
        %v773 = vpack.c.b16 %v736, %v735
        %v774 = vpack.c.b16 %v738, %v737
        %v775 = vpack.c.b16 %v740, %v739
        %v776 = vpack.c.b16 %v742, %v741
        %v777 = vpack.c.b16 %v744, %v743
        %v778 = vpack.c.b16 %v746, %v745
        %v827 = vunpack.c.l.b16 %v603
        %v828 = vunpack.c.l.b16 %v604
        %v829 = vunpack.c.l.b16 %v605
        %v830 = vunpack.c.l.b16 %v606
        %v831 = vunpack.c.l.b16 %v607
        %v832 = vunpack.c.l.b16 %v608
        %v833 = vunpack.c.l.b16 %v609
        %v834 = vunpack.c.l.b16 %v610
        %v835 = vunpack.c.l.b16 %v611
        %v836 = vunpack.c.l.b16 %v612
        %v837 = vunpack.c.l.b16 %v613
        %v838 = vunpack.c.l.b16 %v614
        %v839 = vunpack.c.l.b16 %v615
        %v840 = vunpack.c.l.b16 %v616
        %v841 = vunpack.c.l.b16 %v617
        %v842 = vunpack.c.l.b16 %v618
        %v843 = vpack.c.b16 %v828, %v827
        %v844 = vpack.c.b16 %v830, %v829
        %v845 = vpack.c.b16 %v832, %v831
        %v846 = vpack.c.b16 %v834, %v833
        %v847 = vpack.c.b16 %v836, %v835
        %v848 = vpack.c.b16 %v838, %v837
        %v849 = vpack.c.b16 %v840, %v839
        %v850 = vpack.c.b16 %v842, %v841
        %859 = vmatprep.subr.bf16.mxu0 0
        %860 = vmatpush1.bf16.msra.mxu0 %v843
        %861 = vmatprep.subr.bf16.mxu0 0
        %862 = vmatpush1.bf16.msra.mxu0 %v844
        %863 = vmatprep.subr.bf16.mxu0 0
        %864 = vmatpush1.bf16.msra.mxu0 %v845
        %865 = vmatprep.subr.bf16.mxu0 0
        %866 = vmatpush1.bf16.msra.mxu0 %v846
        %867 = vmatprep.subr.bf16.mxu0 0
        %868 = vmatpush1.bf16.msra.mxu0 %v847
        %869 = vmatprep.subr.bf16.mxu0 0
        %870 = vmatpush1.bf16.msra.mxu0 %v848
        %871 = vmatprep.subr.bf16.mxu0 0
        %872 = vmatpush1.bf16.msra.mxu0 %v849
        %873 = vmatprep.subr.bf16.mxu0 0
        %874 = vmatpush1.bf16.msra.mxu0 %v850
        %875 = vmatprep.subr.bf16.mxu0 0
        %876 = vmatpush1.bf16.msra.mxu0 0
        %877 = vmatprep.subr.bf16.mxu0 0
        %878 = vmatpush1.bf16.msra.mxu0 0
        %879 = vmatprep.subr.bf16.mxu0 0
        %880 = vmatpush1.bf16.msra.mxu0 0
        %881 = vmatprep.subr.bf16.mxu0 0
        %882 = vmatpush1.bf16.msra.mxu0 0
        %883 = vmatprep.subr.bf16.mxu0 0
        %884 = vmatpush1.bf16.msra.mxu0 0
        %885 = vmatprep.subr.bf16.mxu0 0
        %886 = vmatpush1.bf16.msra.mxu0 0
        %887 = vmatprep.subr.bf16.mxu0 0
        %888 = vmatpush1.bf16.msra.mxu0 0
        %889 = vmatprep.subr.bf16.mxu0 0
        %890 = vmatpush1.bf16.msra.mxu0 0
        %891 = vmatprep.mubr.bf16.mxu0 0
        %892 = vmatmul.mubr.bf16.gmra.mrb[0].mxu0 %v747
        %v893 = vpop.f32.mrb[0].mxu0
        %v894 = vadd.f32 0.0, %v893
        %v895 = vpop.f32.mrb[0].mxu0
        %v896 = vpop.f32.mrb[0].mxu0
        %v897 = vadd.f32 0.0, %v896
        %v898 = vpop.f32.mrb[0].mxu0
        %899 = vmatprep.mubr.bf16.mxu0 0
        %900 = vmatmul.mubr.bf16.gmra.mrb[0].mxu0 %v748
        %v901 = vpop.f32.mrb[0].mxu0
        %v902 = vadd.f32 0.0, %v901
        %v903 = vpop.f32.mrb[0].mxu0
        %v904 = vpop.f32.mrb[0].mxu0
        %v905 = vadd.f32 0.0, %v904
        %v906 = vpop.f32.mrb[0].mxu0
        %907 = vmatprep.mubr.bf16.mxu0 0
        %908 = vmatmul.mubr.bf16.gmra.mrb[0].mxu0 %v749
        %v909 = vpop.f32.mrb[0].mxu0
        %v910 = vadd.f32 0.0, %v909
        %v911 = vpop.f32.mrb[0].mxu0
        %v912 = vpop.f32.mrb[0].mxu0
        %v913 = vadd.f32 0.0, %v912
        %v914 = vpop.f32.mrb[0].mxu0
        %915 = vmatprep.mubr.bf16.mxu0 0
        %916 = vmatmul.mubr.bf16.gmra.mrb[0].mxu0 %v750
        %v917 = vpop.f32.mrb[0].mxu0
        %v918 = vadd.f32 0.0, %v917
        %v919 = vpop.f32.mrb[0].mxu0
        %v920 = vpop.f32.mrb[0].mxu0
        %v921 = vadd.f32 0.0, %v920
        %v922 = vpop.f32.mrb[0].mxu0
        %923 = vmatprep.mubr.bf16.mxu0 0
        %924 = vmatmul.mubr.bf16.gmra.mrb[0].mxu0 %v751
        %v925 = vpop.f32.mrb[0].mxu0
        %v926 = vadd.f32 0.0, %v925
        %v927 = vpop.f32.mrb[0].mxu0
        %v928 = vpop.f32.mrb[0].mxu0
        %v929 = vadd.f32 0.0, %v928
        %v930 = vpop.f32.mrb[0].mxu0
        %931 = vmatprep.mubr.bf16.mxu0 0
        %932 = vmatmul.mubr.bf16.gmra.mrb[0].mxu0 %v752
        %v933 = vpop.f32.mrb[0].mxu0
        %v934 = vadd.f32 0.0, %v933
        %v935 = vpop.f32.mrb[0].mxu0
        %v936 = vpop.f32.mrb[0].mxu0
        %v937 = vadd.f32 0.0, %v936
        %v938 = vpop.f32.mrb[0].mxu0
        %939 = vmatprep.mubr.bf16.mxu0 0
        %940 = vmatmul.mubr.bf16.gmra.mrb[0].mxu0 %v753
        %v941 = vpop.f32.mrb[0].mxu0
        %v942 = vadd.f32 0.0, %v941
        %v943 = vpop.f32.mrb[0].mxu0
        %v944 = vpop.f32.mrb[0].mxu0
        %v945 = vadd.f32 0.0, %v944
        %v946 = vpop.f32.mrb[0].mxu0
        %947 = vmatprep.mubr.bf16.mxu0 0
        %948 = vmatmul.mubr.bf16.gmra.mrb[0].mxu0 %v754
        %v949 = vpop.f32.mrb[0].mxu0
        %v950 = vadd.f32 0.0, %v949
        %v951 = vpop.f32.mrb[0].mxu0
        %v952 = vpop.f32.mrb[0].mxu0
        %v953 = vadd.f32 0.0, %v952
        %v954 = vpop.f32.mrb[0].mxu0
        %955 = vmatprep.mubr.bf16.mxu0 0
        %956 = vmatmul.mubr.bf16.gmra.mrb[0].mxu0 %v755
        %v957 = vpop.f32.mrb[0].mxu0
        %v958 = vadd.f32 0.0, %v957
        %v959 = vpop.f32.mrb[0].mxu0
        %v960 = vpop.f32.mrb[0].mxu0
        %v961 = vadd.f32 0.0, %v960
        %v962 = vpop.f32.mrb[0].mxu0
        %963 = vmatprep.mubr.bf16.mxu0 0
        %964 = vmatmul.mubr.bf16.gmra.mrb[0].mxu0 %v756
        %v965 = vpop.f32.mrb[0].mxu0
        %v966 = vadd.f32 0.0, %v965
        %v967 = vpop.f32.mrb[0].mxu0
        %v968 = vpop.f32.mrb[0].mxu0
        %v969 = vadd.f32 0.0, %v968
        %v970 = vpop.f32.mrb[0].mxu0
        %971 = vmatprep.mubr.bf16.mxu0 0
        %972 = vmatmul.mubr.bf16.gmra.mrb[0].mxu0 %v757
        %v973 = vpop.f32.mrb[0].mxu0
        %v974 = vadd.f32 0.0, %v973
        %v975 = vpop.f32.mrb[0].mxu0
        %v976 = vpop.f32.mrb[0].mxu0
        %v977 = vadd.f32 0.0, %v976
        %v978 = vpop.f32.mrb[0].mxu0
        %979 = vmatprep.mubr.bf16.mxu0 0
        %980 = vmatmul.mubr.bf16.gmra.mrb[0].mxu0 %v758
        %v981 = vpop.f32.mrb[0].mxu0
        %v982 = vadd.f32 0.0, %v981
        %v983 = vpop.f32.mrb[0].mxu0
        %v984 = vpop.f32.mrb[0].mxu0
        %v985 = vadd.f32 0.0, %v984
        %v986 = vpop.f32.mrb[0].mxu0
        %987 = vmatprep.mubr.bf16.mxu0 0
        %988 = vmatmul.mubr.bf16.gmra.mrb[0].mxu0 %v759
        %v989 = vpop.f32.mrb[0].mxu0
        %v990 = vadd.f32 0.0, %v989
        %v991 = vpop.f32.mrb[0].mxu0
        %v992 = vpop.f32.mrb[0].mxu0
        %v993 = vadd.f32 0.0, %v992
        %v994 = vpop.f32.mrb[0].mxu0
        %995 = vmatprep.mubr.bf16.mxu0 0
        %996 = vmatmul.mubr.bf16.gmra.mrb[0].mxu0 %v760
        %v997 = vpop.f32.mrb[0].mxu0
        %v998 = vadd.f32 0.0, %v997
        %v999 = vpop.f32.mrb[0].mxu0
        %v1000 = vpop.f32.mrb[0].mxu0
        %v1001 = vadd.f32 0.0, %v1000
        %v1002 = vpop.f32.mrb[0].mxu0
        %1003 = vmatprep.mubr.bf16.mxu0 0
        %1004 = vmatmul.mubr.bf16.gmra.mrb[0].mxu0 %v761
        %v1005 = vpop.f32.mrb[0].mxu0
        %v1006 = vadd.f32 0.0, %v1005
        %v1007 = vpop.f32.mrb[0].mxu0
        %v1008 = vpop.f32.mrb[0].mxu0
        %v1009 = vadd.f32 0.0, %v1008
        %v1010 = vpop.f32.mrb[0].mxu0
        %1011 = vmatprep.mubr.bf16.mxu0 0
        %1012 = vmatmul.mubr.bf16.gmra.mrb[0].mxu0 %v762
        %v1013 = vpop.f32.mrb[0].mxu0
        %v1014 = vadd.f32 0.0, %v1013
        %v1015 = vpop.f32.mrb[0].mxu0
        %v1016 = vpop.f32.mrb[0].mxu0
        %v1017 = vadd.f32 0.0, %v1016
        %v1018 = vpop.f32.mrb[0].mxu0
        %1019 = vmatprep.mubr.bf16.mxu0 0
        %1020 = vmatmul.mubr.bf16.gmra.mrb[0].mxu0 %v763
        %v1021 = vpop.f32.mrb[0].mxu0
        %v1022 = vadd.f32 0.0, %v1021
        %v1023 = vpop.f32.mrb[0].mxu0
        %v1024 = vpop.f32.mrb[0].mxu0
        %v1025 = vadd.f32 0.0, %v1024
        %v1026 = vpop.f32.mrb[0].mxu0
        %1027 = vmatprep.mubr.bf16.mxu0 0
        %1028 = vmatmul.mubr.bf16.gmra.mrb[0].mxu0 %v764
        %v1029 = vpop.f32.mrb[0].mxu0
        %v1030 = vadd.f32 0.0, %v1029
        %v1031 = vpop.f32.mrb[0].mxu0
        %v1032 = vpop.f32.mrb[0].mxu0
        %v1033 = vadd.f32 0.0, %v1032
        %v1034 = vpop.f32.mrb[0].mxu0
        %1035 = vmatprep.mubr.bf16.mxu0 0
        %1036 = vmatmul.mubr.bf16.gmra.mrb[0].mxu0 %v765
        %v1037 = vpop.f32.mrb[0].mxu0
        %v1038 = vadd.f32 0.0, %v1037
        %v1039 = vpop.f32.mrb[0].mxu0
        %v1040 = vpop.f32.mrb[0].mxu0
        %v1041 = vadd.f32 0.0, %v1040
        %v1042 = vpop.f32.mrb[0].mxu0
        %1043 = vmatprep.mubr.bf16.mxu0 0
        %1044 = vmatmul.mubr.bf16.gmra.mrb[0].mxu0 %v766
        %v1045 = vpop.f32.mrb[0].mxu0
        %v1046 = vadd.f32 0.0, %v1045
        %v1047 = vpop.f32.mrb[0].mxu0
        %v1048 = vpop.f32.mrb[0].mxu0
        %v1049 = vadd.f32 0.0, %v1048
        %v1050 = vpop.f32.mrb[0].mxu0
        %1051 = vmatprep.mubr.bf16.mxu0 0
        %1052 = vmatmul.mubr.bf16.gmra.mrb[0].mxu0 %v767
        %v1053 = vpop.f32.mrb[0].mxu0
        %v1054 = vadd.f32 0.0, %v1053
        %v1055 = vpop.f32.mrb[0].mxu0
        %v1056 = vpop.f32.mrb[0].mxu0
        %v1057 = vadd.f32 0.0, %v1056
        %v1058 = vpop.f32.mrb[0].mxu0
        %1059 = vmatprep.mubr.bf16.mxu0 0
        %1060 = vmatmul.mubr.bf16.gmra.mrb[0].mxu0 %v768
        %v1061 = vpop.f32.mrb[0].mxu0
        %v1062 = vadd.f32 0.0, %v1061
        %v1063 = vpop.f32.mrb[0].mxu0
        %v1064 = vpop.f32.mrb[0].mxu0
        %v1065 = vadd.f32 0.0, %v1064
        %v1066 = vpop.f32.mrb[0].mxu0
        %1067 = vmatprep.mubr.bf16.mxu0 0
        %1068 = vmatmul.mubr.bf16.gmra.mrb[0].mxu0 %v769
        %v1069 = vpop.f32.mrb[0].mxu0
        %v1070 = vadd.f32 0.0, %v1069
        %v1071 = vpop.f32.mrb[0].mxu0
        %v1072 = vpop.f32.mrb[0].mxu0
        %v1073 = vadd.f32 0.0, %v1072
        %v1074 = vpop.f32.mrb[0].mxu0
        %1075 = vmatprep.mubr.bf16.mxu0 0
        %1076 = vmatmul.mubr.bf16.gmra.mrb[0].mxu0 %v770
        %v1077 = vpop.f32.mrb[0].mxu0
        %v1078 = vadd.f32 0.0, %v1077
        %v1079 = vpop.f32.mrb[0].mxu0
        %v1080 = vpop.f32.mrb[0].mxu0
        %v1081 = vadd.f32 0.0, %v1080
        %v1082 = vpop.f32.mrb[0].mxu0
        %1083 = vmatprep.mubr.bf16.mxu0 0
        %1084 = vmatmul.mubr.bf16.gmra.mrb[0].mxu0 %v771
        %v1085 = vpop.f32.mrb[0].mxu0
        %v1086 = vadd.f32 0.0, %v1085
        %v1087 = vpop.f32.mrb[0].mxu0
        %v1088 = vpop.f32.mrb[0].mxu0
        %v1089 = vadd.f32 0.0, %v1088
        %v1090 = vpop.f32.mrb[0].mxu0
        %1091 = vmatprep.mubr.bf16.mxu0 0
        %1092 = vmatmul.mubr.bf16.gmra.mrb[0].mxu0 %v772
        %v1093 = vpop.f32.mrb[0].mxu0
        %v1094 = vadd.f32 0.0, %v1093
        %v1095 = vpop.f32.mrb[0].mxu0
        %v1096 = vpop.f32.mrb[0].mxu0
        %v1097 = vadd.f32 0.0, %v1096
        %v1098 = vpop.f32.mrb[0].mxu0
        %1099 = vmatprep.mubr.bf16.mxu0 0
        %1100 = vmatmul.mubr.bf16.gmra.mrb[0].mxu0 %v773
        %v1101 = vpop.f32.mrb[0].mxu0
        %v1102 = vadd.f32 0.0, %v1101
        %v1103 = vpop.f32.mrb[0].mxu0
        %v1104 = vpop.f32.mrb[0].mxu0
        %v1105 = vadd.f32 0.0, %v1104
        %v1106 = vpop.f32.mrb[0].mxu0
        %1107 = vmatprep.mubr.bf16.mxu0 0
        %1108 = vmatmul.mubr.bf16.gmra.mrb[0].mxu0 %v774
        %v1109 = vpop.f32.mrb[0].mxu0
        %v1110 = vadd.f32 0.0, %v1109
        %v1111 = vpop.f32.mrb[0].mxu0
        %v1112 = vpop.f32.mrb[0].mxu0
        %v1113 = vadd.f32 0.0, %v1112
        %v1114 = vpop.f32.mrb[0].mxu0
        %1115 = vmatprep.mubr.bf16.mxu0 0
        %1116 = vmatmul.mubr.bf16.gmra.mrb[0].mxu0 %v775
        %v1117 = vpop.f32.mrb[0].mxu0
        %v1118 = vadd.f32 0.0, %v1117
        %v1119 = vpop.f32.mrb[0].mxu0
        %v1120 = vpop.f32.mrb[0].mxu0
        %v1121 = vadd.f32 0.0, %v1120
        %v1122 = vpop.f32.mrb[0].mxu0
        %1123 = vmatprep.mubr.bf16.mxu0 0
        %1124 = vmatmul.mubr.bf16.gmra.mrb[0].mxu0 %v776
        %v1125 = vpop.f32.mrb[0].mxu0
        %v1126 = vadd.f32 0.0, %v1125
        %v1127 = vpop.f32.mrb[0].mxu0
        %v1128 = vpop.f32.mrb[0].mxu0
        %v1129 = vadd.f32 0.0, %v1128
        %v1130 = vpop.f32.mrb[0].mxu0
        %1131 = vmatprep.mubr.bf16.mxu0 0
        %1132 = vmatmul.mubr.bf16.gmra.mrb[0].mxu0 %v777
        %v1133 = vpop.f32.mrb[0].mxu0
        %v1134 = vadd.f32 0.0, %v1133
        %v1135 = vpop.f32.mrb[0].mxu0
        %v1136 = vpop.f32.mrb[0].mxu0
        %v1137 = vadd.f32 0.0, %v1136
        %v1138 = vpop.f32.mrb[0].mxu0
        %1139 = vmatprep.mubr.bf16.mxu0 0
        %1140 = vmatmul.mubr.bf16.gmra.mrb[0].mxu0 %v778
        %v1141 = vpop.f32.mrb[0].mxu0
        %v1142 = vadd.f32 0.0, %v1141
        %v1143 = vpop.f32.mrb[0].mxu0
        %v1144 = vpop.f32.mrb[0].mxu0
        %v1145 = vadd.f32 0.0, %v1144
        %v1146 = vpop.f32.mrb[0].mxu0
        %1147 = vdwg.mxu0
        %v1148 = vpack.c.bf16 %v897, %v894
        %v1149 = vpack.c.bf16 %v905, %v902
        %v1150 = vpack.c.bf16 %v913, %v910
        %v1151 = vpack.c.bf16 %v921, %v918
        %v1152 = vpack.c.bf16 %v929, %v926
        %v1153 = vpack.c.bf16 %v937, %v934
        %v1154 = vpack.c.bf16 %v945, %v942
        %v1155 = vpack.c.bf16 %v953, %v950
        %v1156 = vpack.c.bf16 %v961, %v958
        %v1157 = vpack.c.bf16 %v969, %v966
        %v1158 = vpack.c.bf16 %v977, %v974
        %v1159 = vpack.c.bf16 %v985, %v982
        %v1160 = vpack.c.bf16 %v993, %v990
        %v1161 = vpack.c.bf16 %v1001, %v998
        %v1162 = vpack.c.bf16 %v1009, %v1006
        %v1163 = vpack.c.bf16 %v1017, %v1014
        %v1164 = vpack.c.bf16 %v1025, %v1022
        %v1165 = vpack.c.bf16 %v1033, %v1030
        %v1166 = vpack.c.bf16 %v1041, %v1038
        %v1167 = vpack.c.bf16 %v1049, %v1046
        %v1168 = vpack.c.bf16 %v1057, %v1054
        %v1169 = vpack.c.bf16 %v1065, %v1062
        %v1170 = vpack.c.bf16 %v1073, %v1070
        %v1171 = vpack.c.bf16 %v1081, %v1078
        %v1172 = vpack.c.bf16 %v1089, %v1086
        %v1173 = vpack.c.bf16 %v1097, %v1094
        %v1174 = vpack.c.bf16 %v1105, %v1102
        %v1175 = vpack.c.bf16 %v1113, %v1110
        %v1176 = vpack.c.bf16 %v1121, %v1118
        %v1177 = vpack.c.bf16 %v1129, %v1126
        %v1178 = vpack.c.bf16 %v1137, %v1134
        %v1179 = vpack.c.bf16 %v1145, %v1142
        %v1196 = vunpack.c.l.b16 %v283
        %v1197 = vunpack.c.l.b16 %v284
        %v1198 = vunpack.c.l.b16 %v285
        %v1199 = vunpack.c.l.b16 %v286
        %v1200 = vunpack.c.l.b16 %v287
        %v1201 = vunpack.c.l.b16 %v288
        %v1202 = vunpack.c.l.b16 %v289
        %v1203 = vunpack.c.l.b16 %v290
        %v1204 = vunpack.c.l.b16 %v291
        %v1205 = vunpack.c.l.b16 %v292
        %v1206 = vunpack.c.l.b16 %v293
        %v1207 = vunpack.c.l.b16 %v294
        %v1208 = vunpack.c.l.b16 %v295
        %v1209 = vunpack.c.l.b16 %v296
        %v1210 = vunpack.c.l.b16 %v297
        %v1211 = vunpack.c.l.b16 %v298
        %v1212 = vpack.c.b16 %v1197, %v1196
        %v1213 = vpack.c.b16 %v1199, %v1198
        %v1214 = vpack.c.b16 %v1201, %v1200
        %v1215 = vpack.c.b16 %v1203, %v1202
        %v1216 = vpack.c.b16 %v1205, %v1204
        %v1217 = vpack.c.b16 %v1207, %v1206
        %v1218 = vpack.c.b16 %v1209, %v1208
        %v1219 = vpack.c.b16 %v1211, %v1210
        %1228 = vmatprep.subr.bf16.mxu0 0
        %1229 = vmatpush1.bf16.xpose.msra.mxu0 %v1212
        %1230 = vmatprep.subr.bf16.mxu0 0
        %1231 = vmatpush1.bf16.xpose.msra.mxu0 %v1213
        %1232 = vmatprep.subr.bf16.mxu0 0
        %1233 = vmatpush1.bf16.xpose.msra.mxu0 %v1214
        %1234 = vmatprep.subr.bf16.mxu0 0
        %1235 = vmatpush1.bf16.xpose.msra.mxu0 %v1215
        %1236 = vmatprep.subr.bf16.mxu0 0
        %1237 = vmatpush1.bf16.xpose.msra.mxu0 %v1216
        %1238 = vmatprep.subr.bf16.mxu0 0
        %1239 = vmatpush1.bf16.xpose.msra.mxu0 %v1217
        %1240 = vmatprep.subr.bf16.mxu0 0
        %1241 = vmatpush1.bf16.xpose.msra.mxu0 %v1218
        %1242 = vmatprep.subr.bf16.mxu0 0
        %1243 = vmatpush1.bf16.xpose.msra.mxu0 %v1219
        %1244 = vmatprep.subr.bf16.mxu0 0
        %1245 = vmatpush1.bf16.xpose.msra.mxu0 0
        %1246 = vmatprep.subr.bf16.mxu0 0
        %1247 = vmatpush1.bf16.xpose.msra.mxu0 0
        %1248 = vmatprep.subr.bf16.mxu0 0
        %1249 = vmatpush1.bf16.xpose.msra.mxu0 0
        %1250 = vmatprep.subr.bf16.mxu0 0
        %1251 = vmatpush1.bf16.xpose.msra.mxu0 0
        %1252 = vmatprep.subr.bf16.mxu0 0
        %1253 = vmatpush1.bf16.xpose.msra.mxu0 0
        %1254 = vmatprep.subr.bf16.mxu0 0
        %1255 = vmatpush1.bf16.xpose.msra.mxu0 0
        %1256 = vmatprep.subr.bf16.mxu0 0
        %1257 = vmatpush1.bf16.xpose.msra.mxu0 0
        %1258 = vmatprep.subr.bf16.mxu0 0
        %1259 = vmatpush1.bf16.xpose.msra.mxu0 0
        %1260 = vmatprep.mubr.bf16.mxu0 0
        %1261 = vmatmul.mubr.bf16.gmra.mrb[0].mxu0 %v1148
        %v1262 = vpop.f32.mrb[0].mxu0
        %v1263 = vadd.f32 0.0, %v1262
        %v1264 = vpop.f32.mrb[0].mxu0
        %v1265 = vpop.f32.mrb[0].mxu0
        %v1266 = vadd.f32 0.0, %v1265
        %v1267 = vpop.f32.mrb[0].mxu0
        %1268 = vmatprep.mubr.bf16.mxu0 0
        %1269 = vmatmul.mubr.bf16.gmra.mrb[0].mxu0 %v1149
        %v1270 = vpop.f32.mrb[0].mxu0
        %v1271 = vadd.f32 0.0, %v1270
        %v1272 = vpop.f32.mrb[0].mxu0
        %v1273 = vpop.f32.mrb[0].mxu0
        %v1274 = vadd.f32 0.0, %v1273
        %v1275 = vpop.f32.mrb[0].mxu0
        %1276 = vmatprep.mubr.bf16.mxu0 0
        %1277 = vmatmul.mubr.bf16.gmra.mrb[0].mxu0 %v1150
        %v1278 = vpop.f32.mrb[0].mxu0
        %v1279 = vadd.f32 0.0, %v1278
        %v1280 = vpop.f32.mrb[0].mxu0
        %v1281 = vpop.f32.mrb[0].mxu0
        %v1282 = vadd.f32 0.0, %v1281
        %v1283 = vpop.f32.mrb[0].mxu0
        %1284 = vmatprep.mubr.bf16.mxu0 0
        %1285 = vmatmul.mubr.bf16.gmra.mrb[0].mxu0 %v1151
        %v1286 = vpop.f32.mrb[0].mxu0
        %v1287 = vadd.f32 0.0, %v1286
        %v1288 = vpop.f32.mrb[0].mxu0
        %v1289 = vpop.f32.mrb[0].mxu0
        %v1290 = vadd.f32 0.0, %v1289
        %v1291 = vpop.f32.mrb[0].mxu0
        %1292 = vmatprep.mubr.bf16.mxu0 0
        %1293 = vmatmul.mubr.bf16.gmra.mrb[0].mxu0 %v1152
        %v1294 = vpop.f32.mrb[0].mxu0
        %v1295 = vadd.f32 0.0, %v1294
        %v1296 = vpop.f32.mrb[0].mxu0
        %v1297 = vpop.f32.mrb[0].mxu0
        %v1298 = vadd.f32 0.0, %v1297
        %v1299 = vpop.f32.mrb[0].mxu0
        %1300 = vmatprep.mubr.bf16.mxu0 0
        %1301 = vmatmul.mubr.bf16.gmra.mrb[0].mxu0 %v1153
        %v1302 = vpop.f32.mrb[0].mxu0
        %v1303 = vadd.f32 0.0, %v1302
        %v1304 = vpop.f32.mrb[0].mxu0
        %v1305 = vpop.f32.mrb[0].mxu0
        %v1306 = vadd.f32 0.0, %v1305
        %v1307 = vpop.f32.mrb[0].mxu0
        %1308 = vmatprep.mubr.bf16.mxu0 0
        %1309 = vmatmul.mubr.bf16.gmra.mrb[0].mxu0 %v1154
        %v1310 = vpop.f32.mrb[0].mxu0
        %v1311 = vadd.f32 0.0, %v1310
        %v1312 = vpop.f32.mrb[0].mxu0
        %v1313 = vpop.f32.mrb[0].mxu0
        %v1314 = vadd.f32 0.0, %v1313
        %v1315 = vpop.f32.mrb[0].mxu0
        %1316 = vmatprep.mubr.bf16.mxu0 0
        %1317 = vmatmul.mubr.bf16.gmra.mrb[0].mxu0 %v1155
        %v1318 = vpop.f32.mrb[0].mxu0
        %v1319 = vadd.f32 0.0, %v1318
        %v1320 = vpop.f32.mrb[0].mxu0
        %v1321 = vpop.f32.mrb[0].mxu0
        %v1322 = vadd.f32 0.0, %v1321
        %v1323 = vpop.f32.mrb[0].mxu0
        %1324 = vdwg.mxu0
        %v1341 = vunpack.c.l.b16 %v299
        %v1342 = vunpack.c.l.b16 %v300
        %v1343 = vunpack.c.l.b16 %v301
        %v1344 = vunpack.c.l.b16 %v302
        %v1345 = vunpack.c.l.b16 %v303
        %v1346 = vunpack.c.l.b16 %v304
        %v1347 = vunpack.c.l.b16 %v305
        %v1348 = vunpack.c.l.b16 %v306
        %v1349 = vunpack.c.l.b16 %v307
        %v1350 = vunpack.c.l.b16 %v308
        %v1351 = vunpack.c.l.b16 %v309
        %v1352 = vunpack.c.l.b16 %v310
        %v1353 = vunpack.c.l.b16 %v311
        %v1354 = vunpack.c.l.b16 %v312
        %v1355 = vunpack.c.l.b16 %v313
        %v1356 = vunpack.c.l.b16 %v314
        %v1357 = vpack.c.b16 %v1342, %v1341
        %v1358 = vpack.c.b16 %v1344, %v1343
        %v1359 = vpack.c.b16 %v1346, %v1345
        %v1360 = vpack.c.b16 %v1348, %v1347
        %v1361 = vpack.c.b16 %v1350, %v1349
        %v1362 = vpack.c.b16 %v1352, %v1351
        %v1363 = vpack.c.b16 %v1354, %v1353
        %v1364 = vpack.c.b16 %v1356, %v1355
        %1373 = vmatprep.subr.bf16.mxu0 0
        %1374 = vmatpush1.bf16.xpose.msra.mxu0 %v1357
        %1375 = vmatprep.subr.bf16.mxu0 0
        %1376 = vmatpush1.bf16.xpose.msra.mxu0 %v1358
        %1377 = vmatprep.subr.bf16.mxu0 0
        %1378 = vmatpush1.bf16.xpose.msra.mxu0 %v1359
        %1379 = vmatprep.subr.bf16.mxu0 0
        %1380 = vmatpush1.bf16.xpose.msra.mxu0 %v1360
        %1381 = vmatprep.subr.bf16.mxu0 0
        %1382 = vmatpush1.bf16.xpose.msra.mxu0 %v1361
        %1383 = vmatprep.subr.bf16.mxu0 0
        %1384 = vmatpush1.bf16.xpose.msra.mxu0 %v1362
        %1385 = vmatprep.subr.bf16.mxu0 0
        %1386 = vmatpush1.bf16.xpose.msra.mxu0 %v1363
        %1387 = vmatprep.subr.bf16.mxu0 0
        %1388 = vmatpush1.bf16.xpose.msra.mxu0 %v1364
        %1389 = vmatprep.subr.bf16.mxu0 0
        %1390 = vmatpush1.bf16.xpose.msra.mxu0 0
        %1391 = vmatprep.subr.bf16.mxu0 0
        %1392 = vmatpush1.bf16.xpose.msra.mxu0 0
        %1393 = vmatprep.subr.bf16.mxu0 0
        %1394 = vmatpush1.bf16.xpose.msra.mxu0 0
        %1395 = vmatprep.subr.bf16.mxu0 0
        %1396 = vmatpush1.bf16.xpose.msra.mxu0 0
        %1397 = vmatprep.subr.bf16.mxu0 0
        %1398 = vmatpush1.bf16.xpose.msra.mxu0 0
        %1399 = vmatprep.subr.bf16.mxu0 0
        %1400 = vmatpush1.bf16.xpose.msra.mxu0 0
        %1401 = vmatprep.subr.bf16.mxu0 0
        %1402 = vmatpush1.bf16.xpose.msra.mxu0 0
        %1403 = vmatprep.subr.bf16.mxu0 0
        %1404 = vmatpush1.bf16.xpose.msra.mxu0 0
        %1405 = vmatprep.mubr.bf16.mxu0 0
        %1406 = vmatmul.mubr.bf16.gmra.mrb[0].mxu0 %v1156
        %v1407 = vpop.f32.mrb[0].mxu0
        %v1408 = vadd.f32 0.0, %v1407
        %v1409 = vpop.f32.mrb[0].mxu0
        %v1410 = vpop.f32.mrb[0].mxu0
        %v1411 = vadd.f32 0.0, %v1410
        %v1412 = vpop.f32.mrb[0].mxu0
        %1413 = vmatprep.mubr.bf16.mxu0 0
        %1414 = vmatmul.mubr.bf16.gmra.mrb[0].mxu0 %v1157
        %v1415 = vpop.f32.mrb[0].mxu0
        %v1416 = vadd.f32 0.0, %v1415
        %v1417 = vpop.f32.mrb[0].mxu0
        %v1418 = vpop.f32.mrb[0].mxu0
        %v1419 = vadd.f32 0.0, %v1418
        %v1420 = vpop.f32.mrb[0].mxu0
        %1421 = vmatprep.mubr.bf16.mxu0 0
        %1422 = vmatmul.mubr.bf16.gmra.mrb[0].mxu0 %v1158
        %v1423 = vpop.f32.mrb[0].mxu0
        %v1424 = vadd.f32 0.0, %v1423
        %v1425 = vpop.f32.mrb[0].mxu0
        %v1426 = vpop.f32.mrb[0].mxu0
        %v1427 = vadd.f32 0.0, %v1426
        %v1428 = vpop.f32.mrb[0].mxu0
        %1429 = vmatprep.mubr.bf16.mxu0 0
        %1430 = vmatmul.mubr.bf16.gmra.mrb[0].mxu0 %v1159
        %v1431 = vpop.f32.mrb[0].mxu0
        %v1432 = vadd.f32 0.0, %v1431
        %v1433 = vpop.f32.mrb[0].mxu0
        %v1434 = vpop.f32.mrb[0].mxu0
        %v1435 = vadd.f32 0.0, %v1434
        %v1436 = vpop.f32.mrb[0].mxu0
        %1437 = vmatprep.mubr.bf16.mxu0 0
        %1438 = vmatmul.mubr.bf16.gmra.mrb[0].mxu0 %v1160
        %v1439 = vpop.f32.mrb[0].mxu0
        %v1440 = vadd.f32 0.0, %v1439
        %v1441 = vpop.f32.mrb[0].mxu0
        %v1442 = vpop.f32.mrb[0].mxu0
        %v1443 = vadd.f32 0.0, %v1442
        %v1444 = vpop.f32.mrb[0].mxu0
        %1445 = vmatprep.mubr.bf16.mxu0 0
        %1446 = vmatmul.mubr.bf16.gmra.mrb[0].mxu0 %v1161
        %v1447 = vpop.f32.mrb[0].mxu0
        %v1448 = vadd.f32 0.0, %v1447
        %v1449 = vpop.f32.mrb[0].mxu0
        %v1450 = vpop.f32.mrb[0].mxu0
        %v1451 = vadd.f32 0.0, %v1450
        %v1452 = vpop.f32.mrb[0].mxu0
        %1453 = vmatprep.mubr.bf16.mxu0 0
        %1454 = vmatmul.mubr.bf16.gmra.mrb[0].mxu0 %v1162
        %v1455 = vpop.f32.mrb[0].mxu0
        %v1456 = vadd.f32 0.0, %v1455
        %v1457 = vpop.f32.mrb[0].mxu0
        %v1458 = vpop.f32.mrb[0].mxu0
        %v1459 = vadd.f32 0.0, %v1458
        %v1460 = vpop.f32.mrb[0].mxu0
        %1461 = vmatprep.mubr.bf16.mxu0 0
        %1462 = vmatmul.mubr.bf16.gmra.mrb[0].mxu0 %v1163
        %v1463 = vpop.f32.mrb[0].mxu0
        %v1464 = vadd.f32 0.0, %v1463
        %v1465 = vpop.f32.mrb[0].mxu0
        %v1466 = vpop.f32.mrb[0].mxu0
        %v1467 = vadd.f32 0.0, %v1466
        %v1468 = vpop.f32.mrb[0].mxu0
        %1469 = vdwg.mxu0
        %v1486 = vunpack.c.l.b16 %v315
        %v1487 = vunpack.c.l.b16 %v316
        %v1488 = vunpack.c.l.b16 %v317
        %v1489 = vunpack.c.l.b16 %v318
        %v1490 = vunpack.c.l.b16 %v319
        %v1491 = vunpack.c.l.b16 %v320
        %v1492 = vunpack.c.l.b16 %v321
        %v1493 = vunpack.c.l.b16 %v322
        %v1494 = vunpack.c.l.b16 %v323
        %v1495 = vunpack.c.l.b16 %v324
        %v1496 = vunpack.c.l.b16 %v325
        %v1497 = vunpack.c.l.b16 %v326
        %v1498 = vunpack.c.l.b16 %v327
        %v1499 = vunpack.c.l.b16 %v328
        %v1500 = vunpack.c.l.b16 %v329
        %v1501 = vunpack.c.l.b16 %v330
        %v1502 = vpack.c.b16 %v1487, %v1486
        %v1503 = vpack.c.b16 %v1489, %v1488
        %v1504 = vpack.c.b16 %v1491, %v1490
        %v1505 = vpack.c.b16 %v1493, %v1492
        %v1506 = vpack.c.b16 %v1495, %v1494
        %v1507 = vpack.c.b16 %v1497, %v1496
        %v1508 = vpack.c.b16 %v1499, %v1498
        %v1509 = vpack.c.b16 %v1501, %v1500
        %1518 = vmatprep.subr.bf16.mxu0 0
        %1519 = vmatpush1.bf16.xpose.msra.mxu0 %v1502
        %1520 = vmatprep.subr.bf16.mxu0 0
        %1521 = vmatpush1.bf16.xpose.msra.mxu0 %v1503
        %1522 = vmatprep.subr.bf16.mxu0 0
        %1523 = vmatpush1.bf16.xpose.msra.mxu0 %v1504
        %1524 = vmatprep.subr.bf16.mxu0 0
        %1525 = vmatpush1.bf16.xpose.msra.mxu0 %v1505
        %1526 = vmatprep.subr.bf16.mxu0 0
        %1527 = vmatpush1.bf16.xpose.msra.mxu0 %v1506
        %1528 = vmatprep.subr.bf16.mxu0 0
        %1529 = vmatpush1.bf16.xpose.msra.mxu0 %v1507
        %1530 = vmatprep.subr.bf16.mxu0 0
        %1531 = vmatpush1.bf16.xpose.msra.mxu0 %v1508
        %1532 = vmatprep.subr.bf16.mxu0 0
        %1533 = vmatpush1.bf16.xpose.msra.mxu0 %v1509
        %1534 = vmatprep.subr.bf16.mxu0 0
        %1535 = vmatpush1.bf16.xpose.msra.mxu0 0
        %1536 = vmatprep.subr.bf16.mxu0 0
        %1537 = vmatpush1.bf16.xpose.msra.mxu0 0
        %1538 = vmatprep.subr.bf16.mxu0 0
        %1539 = vmatpush1.bf16.xpose.msra.mxu0 0
        %1540 = vmatprep.subr.bf16.mxu0 0
        %1541 = vmatpush1.bf16.xpose.msra.mxu0 0
        %1542 = vmatprep.subr.bf16.mxu0 0
        %1543 = vmatpush1.bf16.xpose.msra.mxu0 0
        %1544 = vmatprep.subr.bf16.mxu0 0
        %1545 = vmatpush1.bf16.xpose.msra.mxu0 0
        %1546 = vmatprep.subr.bf16.mxu0 0
        %1547 = vmatpush1.bf16.xpose.msra.mxu0 0
        %1548 = vmatprep.subr.bf16.mxu0 0
        %1549 = vmatpush1.bf16.xpose.msra.mxu0 0
        %1550 = vmatprep.mubr.bf16.mxu0 0
        %1551 = vmatmul.mubr.bf16.gmra.mrb[0].mxu0 %v1164
        %v1552 = vpop.f32.mrb[0].mxu0
        %v1553 = vadd.f32 0.0, %v1552
        %v1554 = vpop.f32.mrb[0].mxu0
        %v1555 = vpop.f32.mrb[0].mxu0
        %v1556 = vadd.f32 0.0, %v1555
        %v1557 = vpop.f32.mrb[0].mxu0
        %1558 = vmatprep.mubr.bf16.mxu0 0
        %1559 = vmatmul.mubr.bf16.gmra.mrb[0].mxu0 %v1165
        %v1560 = vpop.f32.mrb[0].mxu0
        %v1561 = vadd.f32 0.0, %v1560
        %v1562 = vpop.f32.mrb[0].mxu0
        %v1563 = vpop.f32.mrb[0].mxu0
        %v1564 = vadd.f32 0.0, %v1563
        %v1565 = vpop.f32.mrb[0].mxu0
        %1566 = vmatprep.mubr.bf16.mxu0 0
        %1567 = vmatmul.mubr.bf16.gmra.mrb[0].mxu0 %v1166
        %v1568 = vpop.f32.mrb[0].mxu0
        %v1569 = vadd.f32 0.0, %v1568
        %v1570 = vpop.f32.mrb[0].mxu0
        %v1571 = vpop.f32.mrb[0].mxu0
        %v1572 = vadd.f32 0.0, %v1571
        %v1573 = vpop.f32.mrb[0].mxu0
        %1574 = vmatprep.mubr.bf16.mxu0 0
        %1575 = vmatmul.mubr.bf16.gmra.mrb[0].mxu0 %v1167
        %v1576 = vpop.f32.mrb[0].mxu0
        %v1577 = vadd.f32 0.0, %v1576
        %v1578 = vpop.f32.mrb[0].mxu0
        %v1579 = vpop.f32.mrb[0].mxu0
        %v1580 = vadd.f32 0.0, %v1579
        %v1581 = vpop.f32.mrb[0].mxu0
        %1582 = vmatprep.mubr.bf16.mxu0 0
        %1583 = vmatmul.mubr.bf16.gmra.mrb[0].mxu0 %v1168
        %v1584 = vpop.f32.mrb[0].mxu0
        %v1585 = vadd.f32 0.0, %v1584
        %v1586 = vpop.f32.mrb[0].mxu0
        %v1587 = vpop.f32.mrb[0].mxu0
        %v1588 = vadd.f32 0.0, %v1587
        %v1589 = vpop.f32.mrb[0].mxu0
        %1590 = vmatprep.mubr.bf16.mxu0 0
        %1591 = vmatmul.mubr.bf16.gmra.mrb[0].mxu0 %v1169
        %v1592 = vpop.f32.mrb[0].mxu0
        %v1593 = vadd.f32 0.0, %v1592
        %v1594 = vpop.f32.mrb[0].mxu0
        %v1595 = vpop.f32.mrb[0].mxu0
        %v1596 = vadd.f32 0.0, %v1595
        %v1597 = vpop.f32.mrb[0].mxu0
        %1598 = vmatprep.mubr.bf16.mxu0 0
        %1599 = vmatmul.mubr.bf16.gmra.mrb[0].mxu0 %v1170
        %v1600 = vpop.f32.mrb[0].mxu0
        %v1601 = vadd.f32 0.0, %v1600
        %v1602 = vpop.f32.mrb[0].mxu0
        %v1603 = vpop.f32.mrb[0].mxu0
        %v1604 = vadd.f32 0.0, %v1603
        %v1605 = vpop.f32.mrb[0].mxu0
        %1606 = vmatprep.mubr.bf16.mxu0 0
        %1607 = vmatmul.mubr.bf16.gmra.mrb[0].mxu0 %v1171
        %v1608 = vpop.f32.mrb[0].mxu0
        %v1609 = vadd.f32 0.0, %v1608
        %v1610 = vpop.f32.mrb[0].mxu0
        %v1611 = vpop.f32.mrb[0].mxu0
        %v1612 = vadd.f32 0.0, %v1611
        %v1613 = vpop.f32.mrb[0].mxu0
        %1614 = vdwg.mxu0
        %v1631 = vunpack.c.l.b16 %v331
        %v1632 = vunpack.c.l.b16 %v332
        %v1633 = vunpack.c.l.b16 %v333
        %v1634 = vunpack.c.l.b16 %v334
        %v1635 = vunpack.c.l.b16 %v335
        %v1636 = vunpack.c.l.b16 %v336
        %v1637 = vunpack.c.l.b16 %v337
        %v1638 = vunpack.c.l.b16 %v338
        %v1639 = vunpack.c.l.b16 %v339
        %v1640 = vunpack.c.l.b16 %v340
        %v1641 = vunpack.c.l.b16 %v341
        %v1642 = vunpack.c.l.b16 %v342
        %v1643 = vunpack.c.l.b16 %v343
        %v1644 = vunpack.c.l.b16 %v344
        %v1645 = vunpack.c.l.b16 %v345
        %v1646 = vunpack.c.l.b16 %v346
        %v1647 = vpack.c.b16 %v1632, %v1631
        %v1648 = vpack.c.b16 %v1634, %v1633
        %v1649 = vpack.c.b16 %v1636, %v1635
        %v1650 = vpack.c.b16 %v1638, %v1637
        %v1651 = vpack.c.b16 %v1640, %v1639
        %v1652 = vpack.c.b16 %v1642, %v1641
        %v1653 = vpack.c.b16 %v1644, %v1643
        %v1654 = vpack.c.b16 %v1646, %v1645
        %1663 = vmatprep.subr.bf16.mxu0 0
        %1664 = vmatpush1.bf16.xpose.msra.mxu0 %v1647
        %1665 = vmatprep.subr.bf16.mxu0 0
        %1666 = vmatpush1.bf16.xpose.msra.mxu0 %v1648
        %1667 = vmatprep.subr.bf16.mxu0 0
        %1668 = vmatpush1.bf16.xpose.msra.mxu0 %v1649
        %1669 = vmatprep.subr.bf16.mxu0 0
        %1670 = vmatpush1.bf16.xpose.msra.mxu0 %v1650
        %1671 = vmatprep.subr.bf16.mxu0 0
        %1672 = vmatpush1.bf16.xpose.msra.mxu0 %v1651
        %1673 = vmatprep.subr.bf16.mxu0 0
        %1674 = vmatpush1.bf16.xpose.msra.mxu0 %v1652
        %1675 = vmatprep.subr.bf16.mxu0 0
        %1676 = vmatpush1.bf16.xpose.msra.mxu0 %v1653
        %1677 = vmatprep.subr.bf16.mxu0 0
        %1678 = vmatpush1.bf16.xpose.msra.mxu0 %v1654
        %1679 = vmatprep.subr.bf16.mxu0 0
        %1680 = vmatpush1.bf16.xpose.msra.mxu0 0
        %1681 = vmatprep.subr.bf16.mxu0 0
        %1682 = vmatpush1.bf16.xpose.msra.mxu0 0
        %1683 = vmatprep.subr.bf16.mxu0 0
        %1684 = vmatpush1.bf16.xpose.msra.mxu0 0
        %1685 = vmatprep.subr.bf16.mxu0 0
        %1686 = vmatpush1.bf16.xpose.msra.mxu0 0
        %1687 = vmatprep.subr.bf16.mxu0 0
        %1688 = vmatpush1.bf16.xpose.msra.mxu0 0
        %1689 = vmatprep.subr.bf16.mxu0 0
        %1690 = vmatpush1.bf16.xpose.msra.mxu0 0
        %1691 = vmatprep.subr.bf16.mxu0 0
        %1692 = vmatpush1.bf16.xpose.msra.mxu0 0
        %1693 = vmatprep.subr.bf16.mxu0 0
        %1694 = vmatpush1.bf16.xpose.msra.mxu0 0
        %1695 = vmatprep.mubr.bf16.mxu0 0
        %1696 = vmatmul.mubr.bf16.gmra.mrb[0].mxu0 %v1172
        %v1697 = vpop.f32.mrb[0].mxu0
        %v1698 = vadd.f32 0.0, %v1697
        %v1699 = vpop.f32.mrb[0].mxu0
        %v1700 = vpop.f32.mrb[0].mxu0
        %v1701 = vadd.f32 0.0, %v1700
        %v1702 = vpop.f32.mrb[0].mxu0
        %1703 = vmatprep.mubr.bf16.mxu0 0
        %1704 = vmatmul.mubr.bf16.gmra.mrb[0].mxu0 %v1173
        %v1705 = vpop.f32.mrb[0].mxu0
        %v1706 = vadd.f32 0.0, %v1705
        %v1707 = vpop.f32.mrb[0].mxu0
        %v1708 = vpop.f32.mrb[0].mxu0
        %v1709 = vadd.f32 0.0, %v1708
        %v1710 = vpop.f32.mrb[0].mxu0
        %1711 = vmatprep.mubr.bf16.mxu0 0
        %1712 = vmatmul.mubr.bf16.gmra.mrb[0].mxu0 %v1174
        %v1713 = vpop.f32.mrb[0].mxu0
        %v1714 = vadd.f32 0.0, %v1713
        %v1715 = vpop.f32.mrb[0].mxu0
        %v1716 = vpop.f32.mrb[0].mxu0
        %v1717 = vadd.f32 0.0, %v1716
        %v1718 = vpop.f32.mrb[0].mxu0
        %1719 = vmatprep.mubr.bf16.mxu0 0
        %1720 = vmatmul.mubr.bf16.gmra.mrb[0].mxu0 %v1175
        %v1721 = vpop.f32.mrb[0].mxu0
        %v1722 = vadd.f32 0.0, %v1721
        %v1723 = vpop.f32.mrb[0].mxu0
        %v1724 = vpop.f32.mrb[0].mxu0
        %v1725 = vadd.f32 0.0, %v1724
        %v1726 = vpop.f32.mrb[0].mxu0
        %1727 = vmatprep.mubr.bf16.mxu0 0
        %1728 = vmatmul.mubr.bf16.gmra.mrb[0].mxu0 %v1176
        %v1729 = vpop.f32.mrb[0].mxu0
        %v1730 = vadd.f32 0.0, %v1729
        %v1731 = vpop.f32.mrb[0].mxu0
        %v1732 = vpop.f32.mrb[0].mxu0
        %v1733 = vadd.f32 0.0, %v1732
        %v1734 = vpop.f32.mrb[0].mxu0
        %1735 = vmatprep.mubr.bf16.mxu0 0
        %1736 = vmatmul.mubr.bf16.gmra.mrb[0].mxu0 %v1177
        %v1737 = vpop.f32.mrb[0].mxu0
        %v1738 = vadd.f32 0.0, %v1737
        %v1739 = vpop.f32.mrb[0].mxu0
        %v1740 = vpop.f32.mrb[0].mxu0
        %v1741 = vadd.f32 0.0, %v1740
        %v1742 = vpop.f32.mrb[0].mxu0
        %1743 = vmatprep.mubr.bf16.mxu0 0
        %1744 = vmatmul.mubr.bf16.gmra.mrb[0].mxu0 %v1178
        %v1745 = vpop.f32.mrb[0].mxu0
        %v1746 = vadd.f32 0.0, %v1745
        %v1747 = vpop.f32.mrb[0].mxu0
        %v1748 = vpop.f32.mrb[0].mxu0
        %v1749 = vadd.f32 0.0, %v1748
        %v1750 = vpop.f32.mrb[0].mxu0
        %1751 = vmatprep.mubr.bf16.mxu0 0
        %1752 = vmatmul.mubr.bf16.gmra.mrb[0].mxu0 %v1179
        %v1753 = vpop.f32.mrb[0].mxu0
        %v1754 = vadd.f32 0.0, %v1753
        %v1755 = vpop.f32.mrb[0].mxu0
        %v1756 = vpop.f32.mrb[0].mxu0
        %v1757 = vadd.f32 0.0, %v1756
        %v1758 = vpop.f32.mrb[0].mxu0
        %1759 = vdwg.mxu0
        %v1760 = vmul.f32 %v1263, %v539
        %v1761 = vmul.f32 %v1266, %v540
        %v1762 = vmul.f32 %v1271, %v541
        %v1763 = vmul.f32 %v1274, %v542
        %v1764 = vmul.f32 %v1279, %v543
        %v1765 = vmul.f32 %v1282, %v544
        %v1766 = vmul.f32 %v1287, %v545
        %v1767 = vmul.f32 %v1290, %v546
        %v1768 = vmul.f32 %v1295, %v547
        %v1769 = vmul.f32 %v1298, %v548
        %v1770 = vmul.f32 %v1303, %v549
        %v1771 = vmul.f32 %v1306, %v550
        %v1772 = vmul.f32 %v1311, %v551
        %v1773 = vmul.f32 %v1314, %v552
        %v1774 = vmul.f32 %v1319, %v553
        %v1775 = vmul.f32 %v1322, %v554
        %v1776 = vmul.f32 %v1408, %v555
        %v1777 = vmul.f32 %v1411, %v556
        %v1778 = vmul.f32 %v1416, %v557
        %v1779 = vmul.f32 %v1419, %v558
        %v1780 = vmul.f32 %v1424, %v559
        %v1781 = vmul.f32 %v1427, %v560
        %v1782 = vmul.f32 %v1432, %v561
        %v1783 = vmul.f32 %v1435, %v562
        %v1784 = vmul.f32 %v1440, %v563
        %v1785 = vmul.f32 %v1443, %v564
        %v1786 = vmul.f32 %v1448, %v565
        %v1787 = vmul.f32 %v1451, %v566
        %v1788 = vmul.f32 %v1456, %v567
        %v1789 = vmul.f32 %v1459, %v568
        %v1790 = vmul.f32 %v1464, %v569
        %v1791 = vmul.f32 %v1467, %v570
        %v1792 = vmul.f32 %v1553, %v571
        %v1793 = vmul.f32 %v1556, %v572
        %v1794 = vmul.f32 %v1561, %v573
        %v1795 = vmul.f32 %v1564, %v574
        %v1796 = vmul.f32 %v1569, %v575
        %v1797 = vmul.f32 %v1572, %v576
        %v1798 = vmul.f32 %v1577, %v577
        %v1799 = vmul.f32 %v1580, %v578
        %v1800 = vmul.f32 %v1585, %v579
        %v1801 = vmul.f32 %v1588, %v580
        %v1802 = vmul.f32 %v1593, %v581
        %v1803 = vmul.f32 %v1596, %v582
        %v1804 = vmul.f32 %v1601, %v583
        %v1805 = vmul.f32 %v1604, %v584
        %v1806 = vmul.f32 %v1609, %v585
        %v1807 = vmul.f32 %v1612, %v586
        %v1808 = vmul.f32 %v1698, %v587
        %v1809 = vmul.f32 %v1701, %v588
        %v1810 = vmul.f32 %v1706, %v589
        %v1811 = vmul.f32 %v1709, %v590
        %v1812 = vmul.f32 %v1714, %v591
        %v1813 = vmul.f32 %v1717, %v592
        %v1814 = vmul.f32 %v1722, %v593
        %v1815 = vmul.f32 %v1725, %v594
        %v1816 = vmul.f32 %v1730, %v595
        %v1817 = vmul.f32 %v1733, %v596
        %v1818 = vmul.f32 %v1738, %v597
        %v1819 = vmul.f32 %v1741, %v598
        %v1820 = vmul.f32 %v1746, %v599
        %v1821 = vmul.f32 %v1749, %v600
        %v1822 = vmul.f32 %v1754, %v601
        %v1823 = vmul.f32 %v1757, %v602
        %v1824 = vand.u32 2147483647, %v1760
        %v1825 = vand.u32 2147483647, %v1761
        %v1826 = vand.u32 2147483647, %v1762
        %v1827 = vand.u32 2147483647, %v1763
        %v1828 = vand.u32 2147483647, %v1764
        %v1829 = vand.u32 2147483647, %v1765
        %v1830 = vand.u32 2147483647, %v1766
        %v1831 = vand.u32 2147483647, %v1767
        %v1832 = vand.u32 2147483647, %v1768
        %v1833 = vand.u32 2147483647, %v1769
        %v1834 = vand.u32 2147483647, %v1770
        %v1835 = vand.u32 2147483647, %v1771
        %v1836 = vand.u32 2147483647, %v1772
        %v1837 = vand.u32 2147483647, %v1773
        %v1838 = vand.u32 2147483647, %v1774
        %v1839 = vand.u32 2147483647, %v1775
        %v1840 = vand.u32 2147483647, %v1776
        %v1841 = vand.u32 2147483647, %v1777
        %v1842 = vand.u32 2147483647, %v1778
        %v1843 = vand.u32 2147483647, %v1779
        %v1844 = vand.u32 2147483647, %v1780
        %v1845 = vand.u32 2147483647, %v1781
        %v1846 = vand.u32 2147483647, %v1782
        %v1847 = vand.u32 2147483647, %v1783
        %v1848 = vand.u32 2147483647, %v1784
        %v1849 = vand.u32 2147483647, %v1785
        %v1850 = vand.u32 2147483647, %v1786
        %v1851 = vand.u32 2147483647, %v1787
        %v1852 = vand.u32 2147483647, %v1788
        %v1853 = vand.u32 2147483647, %v1789
        %v1854 = vand.u32 2147483647, %v1790
        %v1855 = vand.u32 2147483647, %v1791
        %v1856 = vand.u32 2147483647, %v1792
        %v1857 = vand.u32 2147483647, %v1793
        %v1858 = vand.u32 2147483647, %v1794
        %v1859 = vand.u32 2147483647, %v1795
        %v1860 = vand.u32 2147483647, %v1796
        %v1861 = vand.u32 2147483647, %v1797
        %v1862 = vand.u32 2147483647, %v1798
        %v1863 = vand.u32 2147483647, %v1799
        %v1864 = vand.u32 2147483647, %v1800
        %v1865 = vand.u32 2147483647, %v1801
        %v1866 = vand.u32 2147483647, %v1802
        %v1867 = vand.u32 2147483647, %v1803
        %v1868 = vand.u32 2147483647, %v1804
        %v1869 = vand.u32 2147483647, %v1805
        %v1870 = vand.u32 2147483647, %v1806
        %v1871 = vand.u32 2147483647, %v1807
        %v1872 = vand.u32 2147483647, %v1808
        %v1873 = vand.u32 2147483647, %v1809
        %v1874 = vand.u32 2147483647, %v1810
        %v1875 = vand.u32 2147483647, %v1811
        %v1876 = vand.u32 2147483647, %v1812
        %v1877 = vand.u32 2147483647, %v1813
        %v1878 = vand.u32 2147483647, %v1814
        %v1879 = vand.u32 2147483647, %v1815
        %v1880 = vand.u32 2147483647, %v1816
        %v1881 = vand.u32 2147483647, %v1817
        %v1882 = vand.u32 2147483647, %v1818
        %v1883 = vand.u32 2147483647, %v1819
        %v1884 = vand.u32 2147483647, %v1820
        %v1885 = vand.u32 2147483647, %v1821
        %v1886 = vand.u32 2147483647, %v1822
        %v1887 = vand.u32 2147483647, %v1823
        %v1888 = vsub.f32 0.0, %v1824
        %v1889 = vsub.f32 0.0, %v1825
        %v1890 = vsub.f32 0.0, %v1826
        %v1891 = vsub.f32 0.0, %v1827
        %v1892 = vsub.f32 0.0, %v1828
        %v1893 = vsub.f32 0.0, %v1829
        %v1894 = vsub.f32 0.0, %v1830
        %v1895 = vsub.f32 0.0, %v1831
        %v1896 = vsub.f32 0.0, %v1832
        %v1897 = vsub.f32 0.0, %v1833
        %v1898 = vsub.f32 0.0, %v1834
        %v1899 = vsub.f32 0.0, %v1835
        %v1900 = vsub.f32 0.0, %v1836
        %v1901 = vsub.f32 0.0, %v1837
        %v1902 = vsub.f32 0.0, %v1838
        %v1903 = vsub.f32 0.0, %v1839
        %v1904 = vsub.f32 0.0, %v1840
        %v1905 = vsub.f32 0.0, %v1841
        %v1906 = vsub.f32 0.0, %v1842
        %v1907 = vsub.f32 0.0, %v1843
        %v1908 = vsub.f32 0.0, %v1844
        %v1909 = vsub.f32 0.0, %v1845
        %v1910 = vsub.f32 0.0, %v1846
        %v1911 = vsub.f32 0.0, %v1847
        %v1912 = vsub.f32 0.0, %v1848
        %v1913 = vsub.f32 0.0, %v1849
        %v1914 = vsub.f32 0.0, %v1850
        %v1915 = vsub.f32 0.0, %v1851
        %v1916 = vsub.f32 0.0, %v1852
        %v1917 = vsub.f32 0.0, %v1853
        %v1918 = vsub.f32 0.0, %v1854
        %v1919 = vsub.f32 0.0, %v1855
        %v1920 = vsub.f32 0.0, %v1856
        %v1921 = vsub.f32 0.0, %v1857
        %v1922 = vsub.f32 0.0, %v1858
        %v1923 = vsub.f32 0.0, %v1859
        %v1924 = vsub.f32 0.0, %v1860
        %v1925 = vsub.f32 0.0, %v1861
        %v1926 = vsub.f32 0.0, %v1862
        %v1927 = vsub.f32 0.0, %v1863
        %v1928 = vsub.f32 0.0, %v1864
        %v1929 = vsub.f32 0.0, %v1865
        %v1930 = vsub.f32 0.0, %v1866
        %v1931 = vsub.f32 0.0, %v1867
        %v1932 = vsub.f32 0.0, %v1868
        %v1933 = vsub.f32 0.0, %v1869
        %v1934 = vsub.f32 0.0, %v1870
        %v1935 = vsub.f32 0.0, %v1871
        %v1936 = vsub.f32 0.0, %v1872
        %v1937 = vsub.f32 0.0, %v1873
        %v1938 = vsub.f32 0.0, %v1874
        %v1939 = vsub.f32 0.0, %v1875
        %v1940 = vsub.f32 0.0, %v1876
        %v1941 = vsub.f32 0.0, %v1877
        %v1942 = vsub.f32 0.0, %v1878
        %v1943 = vsub.f32 0.0, %v1879
        %v1944 = vsub.f32 0.0, %v1880
        %v1945 = vsub.f32 0.0, %v1881
        %v1946 = vsub.f32 0.0, %v1882
        %v1947 = vsub.f32 0.0, %v1883
        %v1948 = vsub.f32 0.0, %v1884
        %v1949 = vsub.f32 0.0, %v1885
        %v1950 = vsub.f32 0.0, %v1886
        %v1951 = vsub.f32 0.0, %v1887
        %v1952 = vmul.f32 %v1888, 1.442695
        %v1953 = vpow.pop %v1952
        %v1954 = vmul.f32 %v1889, 1.442695
        %v1955 = vpow.pop %v1954
        %v1956 = vmul.f32 %v1890, 1.442695
        %v1957 = vpow.pop %v1956
        %v1958 = vmul.f32 %v1891, 1.442695
        %v1959 = vpow.pop %v1958
        %v1960 = vmul.f32 %v1892, 1.442695
        %v1961 = vpow.pop %v1960
        %v1962 = vmul.f32 %v1893, 1.442695
        %v1963 = vpow.pop %v1962
        %v1964 = vmul.f32 %v1894, 1.442695
        %v1965 = vpow.pop %v1964
        %v1966 = vmul.f32 %v1895, 1.442695
        %v1967 = vpow.pop %v1966
        %v1968 = vmul.f32 %v1896, 1.442695
        %v1969 = vpow.pop %v1968
        %v1970 = vmul.f32 %v1897, 1.442695
        %v1971 = vpow.pop %v1970
        %v1972 = vmul.f32 %v1898, 1.442695
        %v1973 = vpow.pop %v1972
        %v1974 = vmul.f32 %v1899, 1.442695
        %v1975 = vpow.pop %v1974
        %v1976 = vmul.f32 %v1900, 1.442695
        %v1977 = vpow.pop %v1976
        %v1978 = vmul.f32 %v1901, 1.442695
        %v1979 = vpow.pop %v1978
        %v1980 = vmul.f32 %v1902, 1.442695
        %v1981 = vpow.pop %v1980
        %v1982 = vmul.f32 %v1903, 1.442695
        %v1983 = vpow.pop %v1982
        %v1984 = vmul.f32 %v1904, 1.442695
        %v1985 = vpow.pop %v1984
        %v1986 = vmul.f32 %v1905, 1.442695
        %v1987 = vpow.pop %v1986
        %v1988 = vmul.f32 %v1906, 1.442695
        %v1989 = vpow.pop %v1988
        %v1990 = vmul.f32 %v1907, 1.442695
        %v1991 = vpow.pop %v1990
        %v1992 = vmul.f32 %v1908, 1.442695
        %v1993 = vpow.pop %v1992
        %v1994 = vmul.f32 %v1909, 1.442695
        %v1995 = vpow.pop %v1994
        %v1996 = vmul.f32 %v1910, 1.442695
        %v1997 = vpow.pop %v1996
        %v1998 = vmul.f32 %v1911, 1.442695
        %v1999 = vpow.pop %v1998
        %v2000 = vmul.f32 %v1912, 1.442695
        %v2001 = vpow.pop %v2000
        %v2002 = vmul.f32 %v1913, 1.442695
        %v2003 = vpow.pop %v2002
        %v2004 = vmul.f32 %v1914, 1.442695
        %v2005 = vpow.pop %v2004
        %v2006 = vmul.f32 %v1915, 1.442695
        %v2007 = vpow.pop %v2006
        %v2008 = vmul.f32 %v1916, 1.442695
        %v2009 = vpow.pop %v2008
        %v2010 = vmul.f32 %v1917, 1.442695
        %v2011 = vpow.pop %v2010
        %v2012 = vmul.f32 %v1918, 1.442695
        %v2013 = vpow.pop %v2012
        %v2014 = vmul.f32 %v1919, 1.442695
        %v2015 = vpow.pop %v2014
        %v2016 = vmul.f32 %v1920, 1.442695
        %v2017 = vpow.pop %v2016
        %v2018 = vmul.f32 %v1921, 1.442695
        %v2019 = vpow.pop %v2018
        %v2020 = vmul.f32 %v1922, 1.442695
        %v2021 = vpow.pop %v2020
        %v2022 = vmul.f32 %v1923, 1.442695
        %v2023 = vpow.pop %v2022
        %v2024 = vmul.f32 %v1924, 1.442695
        %v2025 = vpow.pop %v2024
        %v2026 = vmul.f32 %v1925, 1.442695
        %v2027 = vpow.pop %v2026
        %v2028 = vmul.f32 %v1926, 1.442695
        %v2029 = vpow.pop %v2028
        %v2030 = vmul.f32 %v1927, 1.442695
        %v2031 = vpow.pop %v2030
        %v2032 = vmul.f32 %v1928, 1.442695
        %v2033 = vpow.pop %v2032
        %v2034 = vmul.f32 %v1929, 1.442695
        %v2035 = vpow.pop %v2034
        %v2036 = vmul.f32 %v1930, 1.442695
        %v2037 = vpow.pop %v2036
        %v2038 = vmul.f32 %v1931, 1.442695
        %v2039 = vpow.pop %v2038
        %v2040 = vmul.f32 %v1932, 1.442695
        %v2041 = vpow.pop %v2040
        %v2042 = vmul.f32 %v1933, 1.442695
        %v2043 = vpow.pop %v2042
        %v2044 = vmul.f32 %v1934, 1.442695
        %v2045 = vpow.pop %v2044
        %v2046 = vmul.f32 %v1935, 1.442695
        %v2047 = vpow.pop %v2046
        %v2048 = vmul.f32 %v1936, 1.442695
        %v2049 = vpow.pop %v2048
        %v2050 = vmul.f32 %v1937, 1.442695
        %v2051 = vpow.pop %v2050
        %v2052 = vmul.f32 %v1938, 1.442695
        %v2053 = vpow.pop %v2052
        %v2054 = vmul.f32 %v1939, 1.442695
        %v2055 = vpow.pop %v2054
        %v2056 = vmul.f32 %v1940, 1.442695
        %v2057 = vpow.pop %v2056
        %v2058 = vmul.f32 %v1941, 1.442695
        %v2059 = vpow.pop %v2058
        %v2060 = vmul.f32 %v1942, 1.442695
        %v2061 = vpow.pop %v2060
        %v2062 = vmul.f32 %v1943, 1.442695
        %v2063 = vpow.pop %v2062
        %v2064 = vmul.f32 %v1944, 1.442695
        %v2065 = vpow.pop %v2064
        %v2066 = vmul.f32 %v1945, 1.442695
        %v2067 = vpow.pop %v2066
        %v2068 = vmul.f32 %v1946, 1.442695
        %v2069 = vpow.pop %v2068
        %v2070 = vmul.f32 %v1947, 1.442695
        %v2071 = vpow.pop %v2070
        %v2072 = vmul.f32 %v1948, 1.442695
        %v2073 = vpow.pop %v2072
        %v2074 = vmul.f32 %v1949, 1.442695
        %v2075 = vpow.pop %v2074
        %v2076 = vmul.f32 %v1950, 1.442695
        %v2077 = vpow.pop %v2076
        %v2078 = vmul.f32 %v1951, 1.442695
        %v2079 = vpow.pop %v2078
        %v2080 = vadd.f32 %v1953, 1.0
        %v2081 = vlog2.pop %v2080
        %v2082 = vmul.f32 %v2081, 0.6931472
        %v2083 = vmul.f32 -0.5, %v1953
        %v2084 = vadd.f32 %v2083, 1.0
        %v2085 = vmul.f32 %v2084, %v1953
        %v2086 = vand.u32 2147483647, %v1953
        %vm2087 = vcmp.lt.f32.partialorder %v2086, 0.0004427343
        %v2088 = vsel %vm2087, %v2085, %v2082
        %v2089 = vadd.f32 %v1955, 1.0
        %v2090 = vlog2.pop %v2089
        %v2091 = vmul.f32 %v2090, 0.6931472
        %v2092 = vmul.f32 -0.5, %v1955
        %v2093 = vadd.f32 %v2092, 1.0
        %v2094 = vmul.f32 %v2093, %v1955
        %v2095 = vand.u32 2147483647, %v1955
        %vm2096 = vcmp.lt.f32.partialorder %v2095, 0.0004427343
        %v2097 = vsel %vm2096, %v2094, %v2091
        %v2098 = vadd.f32 %v1957, 1.0
        %v2099 = vlog2.pop %v2098
        %v2100 = vmul.f32 %v2099, 0.6931472
        %v2101 = vmul.f32 -0.5, %v1957
        %v2102 = vadd.f32 %v2101, 1.0
        %v2103 = vmul.f32 %v2102, %v1957
        %v2104 = vand.u32 2147483647, %v1957
        %vm2105 = vcmp.lt.f32.partialorder %v2104, 0.0004427343
        %v2106 = vsel %vm2105, %v2103, %v2100
        %v2107 = vadd.f32 %v1959, 1.0
        %v2108 = vlog2.pop %v2107
        %v2109 = vmul.f32 %v2108, 0.6931472
        %v2110 = vmul.f32 -0.5, %v1959
        %v2111 = vadd.f32 %v2110, 1.0
        %v2112 = vmul.f32 %v2111, %v1959
        %v2113 = vand.u32 2147483647, %v1959
        %vm2114 = vcmp.lt.f32.partialorder %v2113, 0.0004427343
        %v2115 = vsel %vm2114, %v2112, %v2109
        %v2116 = vadd.f32 %v1961, 1.0
        %v2117 = vlog2.pop %v2116
        %v2118 = vmul.f32 %v2117, 0.6931472
        %v2119 = vmul.f32 -0.5, %v1961
        %v2120 = vadd.f32 %v2119, 1.0
        %v2121 = vmul.f32 %v2120, %v1961
        %v2122 = vand.u32 2147483647, %v1961
        %vm2123 = vcmp.lt.f32.partialorder %v2122, 0.0004427343
        %v2124 = vsel %vm2123, %v2121, %v2118
        %v2125 = vadd.f32 %v1963, 1.0
        %v2126 = vlog2.pop %v2125
        %v2127 = vmul.f32 %v2126, 0.6931472
        %v2128 = vmul.f32 -0.5, %v1963
        %v2129 = vadd.f32 %v2128, 1.0
        %v2130 = vmul.f32 %v2129, %v1963
        %v2131 = vand.u32 2147483647, %v1963
        %vm2132 = vcmp.lt.f32.partialorder %v2131, 0.0004427343
        %v2133 = vsel %vm2132, %v2130, %v2127
        %v2134 = vadd.f32 %v1965, 1.0
        %v2135 = vlog2.pop %v2134
        %v2136 = vmul.f32 %v2135, 0.6931472
        %v2137 = vmul.f32 -0.5, %v1965
        %v2138 = vadd.f32 %v2137, 1.0
        %v2139 = vmul.f32 %v2138, %v1965
        %v2140 = vand.u32 2147483647, %v1965
        %vm2141 = vcmp.lt.f32.partialorder %v2140, 0.0004427343
        %v2142 = vsel %vm2141, %v2139, %v2136
        %v2143 = vadd.f32 %v1967, 1.0
        %v2144 = vlog2.pop %v2143
        %v2145 = vmul.f32 %v2144, 0.6931472
        %v2146 = vmul.f32 -0.5, %v1967
        %v2147 = vadd.f32 %v2146, 1.0
        %v2148 = vmul.f32 %v2147, %v1967
        %v2149 = vand.u32 2147483647, %v1967
        %vm2150 = vcmp.lt.f32.partialorder %v2149, 0.0004427343
        %v2151 = vsel %vm2150, %v2148, %v2145
        %v2152 = vadd.f32 %v1969, 1.0
        %v2153 = vlog2.pop %v2152
        %v2154 = vmul.f32 %v2153, 0.6931472
        %v2155 = vmul.f32 -0.5, %v1969
        %v2156 = vadd.f32 %v2155, 1.0
        %v2157 = vmul.f32 %v2156, %v1969
        %v2158 = vand.u32 2147483647, %v1969
        %vm2159 = vcmp.lt.f32.partialorder %v2158, 0.0004427343
        %v2160 = vsel %vm2159, %v2157, %v2154
        %v2161 = vadd.f32 %v1971, 1.0
        %v2162 = vlog2.pop %v2161
        %v2163 = vmul.f32 %v2162, 0.6931472
        %v2164 = vmul.f32 -0.5, %v1971
        %v2165 = vadd.f32 %v2164, 1.0
        %v2166 = vmul.f32 %v2165, %v1971
        %v2167 = vand.u32 2147483647, %v1971
        %vm2168 = vcmp.lt.f32.partialorder %v2167, 0.0004427343
        %v2169 = vsel %vm2168, %v2166, %v2163
        %v2170 = vadd.f32 %v1973, 1.0
        %v2171 = vlog2.pop %v2170
        %v2172 = vmul.f32 %v2171, 0.6931472
        %v2173 = vmul.f32 -0.5, %v1973
        %v2174 = vadd.f32 %v2173, 1.0
        %v2175 = vmul.f32 %v2174, %v1973
        %v2176 = vand.u32 2147483647, %v1973
        %vm2177 = vcmp.lt.f32.partialorder %v2176, 0.0004427343
        %v2178 = vsel %vm2177, %v2175, %v2172
        %v2179 = vadd.f32 %v1975, 1.0
        %v2180 = vlog2.pop %v2179
        %v2181 = vmul.f32 %v2180, 0.6931472
        %v2182 = vmul.f32 -0.5, %v1975
        %v2183 = vadd.f32 %v2182, 1.0
        %v2184 = vmul.f32 %v2183, %v1975
        %v2185 = vand.u32 2147483647, %v1975
        %vm2186 = vcmp.lt.f32.partialorder %v2185, 0.0004427343
        %v2187 = vsel %vm2186, %v2184, %v2181
        %v2188 = vadd.f32 %v1977, 1.0
        %v2189 = vlog2.pop %v2188
        %v2190 = vmul.f32 %v2189, 0.6931472
        %v2191 = vmul.f32 -0.5, %v1977
        %v2192 = vadd.f32 %v2191, 1.0
        %v2193 = vmul.f32 %v2192, %v1977
        %v2194 = vand.u32 2147483647, %v1977
        %vm2195 = vcmp.lt.f32.partialorder %v2194, 0.0004427343
        %v2196 = vsel %vm2195, %v2193, %v2190
        %v2197 = vadd.f32 %v1979, 1.0
        %v2198 = vlog2.pop %v2197
        %v2199 = vmul.f32 %v2198, 0.6931472
        %v2200 = vmul.f32 -0.5, %v1979
        %v2201 = vadd.f32 %v2200, 1.0
        %v2202 = vmul.f32 %v2201, %v1979
        %v2203 = vand.u32 2147483647, %v1979
        %vm2204 = vcmp.lt.f32.partialorder %v2203, 0.0004427343
        %v2205 = vsel %vm2204, %v2202, %v2199
        %v2206 = vadd.f32 %v1981, 1.0
        %v2207 = vlog2.pop %v2206
        %v2208 = vmul.f32 %v2207, 0.6931472
        %v2209 = vmul.f32 -0.5, %v1981
        %v2210 = vadd.f32 %v2209, 1.0
        %v2211 = vmul.f32 %v2210, %v1981
        %v2212 = vand.u32 2147483647, %v1981
        %vm2213 = vcmp.lt.f32.partialorder %v2212, 0.0004427343
        %v2214 = vsel %vm2213, %v2211, %v2208
        %v2215 = vadd.f32 %v1983, 1.0
        %v2216 = vlog2.pop %v2215
        %v2217 = vmul.f32 %v2216, 0.6931472
        %v2218 = vmul.f32 -0.5, %v1983
        %v2219 = vadd.f32 %v2218, 1.0
        %v2220 = vmul.f32 %v2219, %v1983
        %v2221 = vand.u32 2147483647, %v1983
        %vm2222 = vcmp.lt.f32.partialorder %v2221, 0.0004427343
        %v2223 = vsel %vm2222, %v2220, %v2217
        %v2224 = vadd.f32 %v1985, 1.0
        %v2225 = vlog2.pop %v2224
        %v2226 = vmul.f32 %v2225, 0.6931472
        %v2227 = vmul.f32 -0.5, %v1985
        %v2228 = vadd.f32 %v2227, 1.0
        %v2229 = vmul.f32 %v2228, %v1985
        %v2230 = vand.u32 2147483647, %v1985
        %vm2231 = vcmp.lt.f32.partialorder %v2230, 0.0004427343
        %v2232 = vsel %vm2231, %v2229, %v2226
        %v2233 = vadd.f32 %v1987, 1.0
        %v2234 = vlog2.pop %v2233
        %v2235 = vmul.f32 %v2234, 0.6931472
        %v2236 = vmul.f32 -0.5, %v1987
        %v2237 = vadd.f32 %v2236, 1.0
        %v2238 = vmul.f32 %v2237, %v1987
        %v2239 = vand.u32 2147483647, %v1987
        %vm2240 = vcmp.lt.f32.partialorder %v2239, 0.0004427343
        %v2241 = vsel %vm2240, %v2238, %v2235
        %v2242 = vadd.f32 %v1989, 1.0
        %v2243 = vlog2.pop %v2242
        %v2244 = vmul.f32 %v2243, 0.6931472
        %v2245 = vmul.f32 -0.5, %v1989
        %v2246 = vadd.f32 %v2245, 1.0
        %v2247 = vmul.f32 %v2246, %v1989
        %v2248 = vand.u32 2147483647, %v1989
        %vm2249 = vcmp.lt.f32.partialorder %v2248, 0.0004427343
        %v2250 = vsel %vm2249, %v2247, %v2244
        %v2251 = vadd.f32 %v1991, 1.0
        %v2252 = vlog2.pop %v2251
        %v2253 = vmul.f32 %v2252, 0.6931472
        %v2254 = vmul.f32 -0.5, %v1991
        %v2255 = vadd.f32 %v2254, 1.0
        %v2256 = vmul.f32 %v2255, %v1991
        %v2257 = vand.u32 2147483647, %v1991
        %vm2258 = vcmp.lt.f32.partialorder %v2257, 0.0004427343
        %v2259 = vsel %vm2258, %v2256, %v2253
        %v2260 = vadd.f32 %v1993, 1.0
        %v2261 = vlog2.pop %v2260
        %v2262 = vmul.f32 %v2261, 0.6931472
        %v2263 = vmul.f32 -0.5, %v1993
        %v2264 = vadd.f32 %v2263, 1.0
        %v2265 = vmul.f32 %v2264, %v1993
        %v2266 = vand.u32 2147483647, %v1993
        %vm2267 = vcmp.lt.f32.partialorder %v2266, 0.0004427343
        %v2268 = vsel %vm2267, %v2265, %v2262
        %v2269 = vadd.f32 %v1995, 1.0
        %v2270 = vlog2.pop %v2269
        %v2271 = vmul.f32 %v2270, 0.6931472
        %v2272 = vmul.f32 -0.5, %v1995
        %v2273 = vadd.f32 %v2272, 1.0
        %v2274 = vmul.f32 %v2273, %v1995
        %v2275 = vand.u32 2147483647, %v1995
        %vm2276 = vcmp.lt.f32.partialorder %v2275, 0.0004427343
        %v2277 = vsel %vm2276, %v2274, %v2271
        %v2278 = vadd.f32 %v1997, 1.0
        %v2279 = vlog2.pop %v2278
        %v2280 = vmul.f32 %v2279, 0.6931472
        %v2281 = vmul.f32 -0.5, %v1997
        %v2282 = vadd.f32 %v2281, 1.0
        %v2283 = vmul.f32 %v2282, %v1997
        %v2284 = vand.u32 2147483647, %v1997
        %vm2285 = vcmp.lt.f32.partialorder %v2284, 0.0004427343
        %v2286 = vsel %vm2285, %v2283, %v2280
        %v2287 = vadd.f32 %v1999, 1.0
        %v2288 = vlog2.pop %v2287
        %v2289 = vmul.f32 %v2288, 0.6931472
        %v2290 = vmul.f32 -0.5, %v1999
        %v2291 = vadd.f32 %v2290, 1.0
        %v2292 = vmul.f32 %v2291, %v1999
        %v2293 = vand.u32 2147483647, %v1999
        %vm2294 = vcmp.lt.f32.partialorder %v2293, 0.0004427343
        %v2295 = vsel %vm2294, %v2292, %v2289
        %v2296 = vadd.f32 %v2001, 1.0
        %v2297 = vlog2.pop %v2296
        %v2298 = vmul.f32 %v2297, 0.6931472
        %v2299 = vmul.f32 -0.5, %v2001
        %v2300 = vadd.f32 %v2299, 1.0
        %v2301 = vmul.f32 %v2300, %v2001
        %v2302 = vand.u32 2147483647, %v2001
        %vm2303 = vcmp.lt.f32.partialorder %v2302, 0.0004427343
        %v2304 = vsel %vm2303, %v2301, %v2298
        %v2305 = vadd.f32 %v2003, 1.0
        %v2306 = vlog2.pop %v2305
        %v2307 = vmul.f32 %v2306, 0.6931472
        %v2308 = vmul.f32 -0.5, %v2003
        %v2309 = vadd.f32 %v2308, 1.0
        %v2310 = vmul.f32 %v2309, %v2003
        %v2311 = vand.u32 2147483647, %v2003
        %vm2312 = vcmp.lt.f32.partialorder %v2311, 0.0004427343
        %v2313 = vsel %vm2312, %v2310, %v2307
        %v2314 = vadd.f32 %v2005, 1.0
        %v2315 = vlog2.pop %v2314
        %v2316 = vmul.f32 %v2315, 0.6931472
        %v2317 = vmul.f32 -0.5, %v2005
        %v2318 = vadd.f32 %v2317, 1.0
        %v2319 = vmul.f32 %v2318, %v2005
        %v2320 = vand.u32 2147483647, %v2005
        %vm2321 = vcmp.lt.f32.partialorder %v2320, 0.0004427343
        %v2322 = vsel %vm2321, %v2319, %v2316
        %v2323 = vadd.f32 %v2007, 1.0
        %v2324 = vlog2.pop %v2323
        %v2325 = vmul.f32 %v2324, 0.6931472
        %v2326 = vmul.f32 -0.5, %v2007
        %v2327 = vadd.f32 %v2326, 1.0
        %v2328 = vmul.f32 %v2327, %v2007
        %v2329 = vand.u32 2147483647, %v2007
        %vm2330 = vcmp.lt.f32.partialorder %v2329, 0.0004427343
        %v2331 = vsel %vm2330, %v2328, %v2325
        %v2332 = vadd.f32 %v2009, 1.0
        %v2333 = vlog2.pop %v2332
        %v2334 = vmul.f32 %v2333, 0.6931472
        %v2335 = vmul.f32 -0.5, %v2009
        %v2336 = vadd.f32 %v2335, 1.0
        %v2337 = vmul.f32 %v2336, %v2009
        %v2338 = vand.u32 2147483647, %v2009
        %vm2339 = vcmp.lt.f32.partialorder %v2338, 0.0004427343
        %v2340 = vsel %vm2339, %v2337, %v2334
        %v2341 = vadd.f32 %v2011, 1.0
        %v2342 = vlog2.pop %v2341
        %v2343 = vmul.f32 %v2342, 0.6931472
        %v2344 = vmul.f32 -0.5, %v2011
        %v2345 = vadd.f32 %v2344, 1.0
        %v2346 = vmul.f32 %v2345, %v2011
        %v2347 = vand.u32 2147483647, %v2011
        %vm2348 = vcmp.lt.f32.partialorder %v2347, 0.0004427343
        %v2349 = vsel %vm2348, %v2346, %v2343
        %v2350 = vadd.f32 %v2013, 1.0
        %v2351 = vlog2.pop %v2350
        %v2352 = vmul.f32 %v2351, 0.6931472
        %v2353 = vmul.f32 -0.5, %v2013
        %v2354 = vadd.f32 %v2353, 1.0
        %v2355 = vmul.f32 %v2354, %v2013
        %v2356 = vand.u32 2147483647, %v2013
        %vm2357 = vcmp.lt.f32.partialorder %v2356, 0.0004427343
        %v2358 = vsel %vm2357, %v2355, %v2352
        %v2359 = vadd.f32 %v2015, 1.0
        %v2360 = vlog2.pop %v2359
        %v2361 = vmul.f32 %v2360, 0.6931472
        %v2362 = vmul.f32 -0.5, %v2015
        %v2363 = vadd.f32 %v2362, 1.0
        %v2364 = vmul.f32 %v2363, %v2015
        %v2365 = vand.u32 2147483647, %v2015
        %vm2366 = vcmp.lt.f32.partialorder %v2365, 0.0004427343
        %v2367 = vsel %vm2366, %v2364, %v2361
        %v2368 = vadd.f32 %v2017, 1.0
        %v2369 = vlog2.pop %v2368
        %v2370 = vmul.f32 %v2369, 0.6931472
        %v2371 = vmul.f32 -0.5, %v2017
        %v2372 = vadd.f32 %v2371, 1.0
        %v2373 = vmul.f32 %v2372, %v2017
        %v2374 = vand.u32 2147483647, %v2017
        %vm2375 = vcmp.lt.f32.partialorder %v2374, 0.0004427343
        %v2376 = vsel %vm2375, %v2373, %v2370
        %v2377 = vadd.f32 %v2019, 1.0
        %v2378 = vlog2.pop %v2377
        %v2379 = vmul.f32 %v2378, 0.6931472
        %v2380 = vmul.f32 -0.5, %v2019
        %v2381 = vadd.f32 %v2380, 1.0
        %v2382 = vmul.f32 %v2381, %v2019
        %v2383 = vand.u32 2147483647, %v2019
        %vm2384 = vcmp.lt.f32.partialorder %v2383, 0.0004427343
        %v2385 = vsel %vm2384, %v2382, %v2379
        %v2386 = vadd.f32 %v2021, 1.0
        %v2387 = vlog2.pop %v2386
        %v2388 = vmul.f32 %v2387, 0.6931472
        %v2389 = vmul.f32 -0.5, %v2021
        %v2390 = vadd.f32 %v2389, 1.0
        %v2391 = vmul.f32 %v2390, %v2021
        %v2392 = vand.u32 2147483647, %v2021
        %vm2393 = vcmp.lt.f32.partialorder %v2392, 0.0004427343
        %v2394 = vsel %vm2393, %v2391, %v2388
        %v2395 = vadd.f32 %v2023, 1.0
        %v2396 = vlog2.pop %v2395
        %v2397 = vmul.f32 %v2396, 0.6931472
        %v2398 = vmul.f32 -0.5, %v2023
        %v2399 = vadd.f32 %v2398, 1.0
        %v2400 = vmul.f32 %v2399, %v2023
        %v2401 = vand.u32 2147483647, %v2023
        %vm2402 = vcmp.lt.f32.partialorder %v2401, 0.0004427343
        %v2403 = vsel %vm2402, %v2400, %v2397
        %v2404 = vadd.f32 %v2025, 1.0
        %v2405 = vlog2.pop %v2404
        %v2406 = vmul.f32 %v2405, 0.6931472
        %v2407 = vmul.f32 -0.5, %v2025
        %v2408 = vadd.f32 %v2407, 1.0
        %v2409 = vmul.f32 %v2408, %v2025
        %v2410 = vand.u32 2147483647, %v2025
        %vm2411 = vcmp.lt.f32.partialorder %v2410, 0.0004427343
        %v2412 = vsel %vm2411, %v2409, %v2406
        %v2413 = vadd.f32 %v2027, 1.0
        %v2414 = vlog2.pop %v2413
        %v2415 = vmul.f32 %v2414, 0.6931472
        %v2416 = vmul.f32 -0.5, %v2027
        %v2417 = vadd.f32 %v2416, 1.0
        %v2418 = vmul.f32 %v2417, %v2027
        %v2419 = vand.u32 2147483647, %v2027
        %vm2420 = vcmp.lt.f32.partialorder %v2419, 0.0004427343
        %v2421 = vsel %vm2420, %v2418, %v2415
        %v2422 = vadd.f32 %v2029, 1.0
        %v2423 = vlog2.pop %v2422
        %v2424 = vmul.f32 %v2423, 0.6931472
        %v2425 = vmul.f32 -0.5, %v2029
        %v2426 = vadd.f32 %v2425, 1.0
        %v2427 = vmul.f32 %v2426, %v2029
        %v2428 = vand.u32 2147483647, %v2029
        %vm2429 = vcmp.lt.f32.partialorder %v2428, 0.0004427343
        %v2430 = vsel %vm2429, %v2427, %v2424
        %v2431 = vadd.f32 %v2031, 1.0
        %v2432 = vlog2.pop %v2431
        %v2433 = vmul.f32 %v2432, 0.6931472
        %v2434 = vmul.f32 -0.5, %v2031
        %v2435 = vadd.f32 %v2434, 1.0
        %v2436 = vmul.f32 %v2435, %v2031
        %v2437 = vand.u32 2147483647, %v2031
        %vm2438 = vcmp.lt.f32.partialorder %v2437, 0.0004427343
        %v2439 = vsel %vm2438, %v2436, %v2433
        %v2440 = vadd.f32 %v2033, 1.0
        %v2441 = vlog2.pop %v2440
        %v2442 = vmul.f32 %v2441, 0.6931472
        %v2443 = vmul.f32 -0.5, %v2033
        %v2444 = vadd.f32 %v2443, 1.0
        %v2445 = vmul.f32 %v2444, %v2033
        %v2446 = vand.u32 2147483647, %v2033
        %vm2447 = vcmp.lt.f32.partialorder %v2446, 0.0004427343
        %v2448 = vsel %vm2447, %v2445, %v2442
        %v2449 = vadd.f32 %v2035, 1.0
        %v2450 = vlog2.pop %v2449
        %v2451 = vmul.f32 %v2450, 0.6931472
        %v2452 = vmul.f32 -0.5, %v2035
        %v2453 = vadd.f32 %v2452, 1.0
        %v2454 = vmul.f32 %v2453, %v2035
        %v2455 = vand.u32 2147483647, %v2035
        %vm2456 = vcmp.lt.f32.partialorder %v2455, 0.0004427343
        %v2457 = vsel %vm2456, %v2454, %v2451
        %v2458 = vadd.f32 %v2037, 1.0
        %v2459 = vlog2.pop %v2458
        %v2460 = vmul.f32 %v2459, 0.6931472
        %v2461 = vmul.f32 -0.5, %v2037
        %v2462 = vadd.f32 %v2461, 1.0
        %v2463 = vmul.f32 %v2462, %v2037
        %v2464 = vand.u32 2147483647, %v2037
        %vm2465 = vcmp.lt.f32.partialorder %v2464, 0.0004427343
        %v2466 = vsel %vm2465, %v2463, %v2460
        %v2467 = vadd.f32 %v2039, 1.0
        %v2468 = vlog2.pop %v2467
        %v2469 = vmul.f32 %v2468, 0.6931472
        %v2470 = vmul.f32 -0.5, %v2039
        %v2471 = vadd.f32 %v2470, 1.0
        %v2472 = vmul.f32 %v2471, %v2039
        %v2473 = vand.u32 2147483647, %v2039
        %vm2474 = vcmp.lt.f32.partialorder %v2473, 0.0004427343
        %v2475 = vsel %vm2474, %v2472, %v2469
        %v2476 = vadd.f32 %v2041, 1.0
        %v2477 = vlog2.pop %v2476
        %v2478 = vmul.f32 %v2477, 0.6931472
        %v2479 = vmul.f32 -0.5, %v2041
        %v2480 = vadd.f32 %v2479, 1.0
        %v2481 = vmul.f32 %v2480, %v2041
        %v2482 = vand.u32 2147483647, %v2041
        %vm2483 = vcmp.lt.f32.partialorder %v2482, 0.0004427343
        %v2484 = vsel %vm2483, %v2481, %v2478
        %v2485 = vadd.f32 %v2043, 1.0
        %v2486 = vlog2.pop %v2485
        %v2487 = vmul.f32 %v2486, 0.6931472
        %v2488 = vmul.f32 -0.5, %v2043
        %v2489 = vadd.f32 %v2488, 1.0
        %v2490 = vmul.f32 %v2489, %v2043
        %v2491 = vand.u32 2147483647, %v2043
        %vm2492 = vcmp.lt.f32.partialorder %v2491, 0.0004427343
        %v2493 = vsel %vm2492, %v2490, %v2487
        %v2494 = vadd.f32 %v2045, 1.0
        %v2495 = vlog2.pop %v2494
        %v2496 = vmul.f32 %v2495, 0.6931472
        %v2497 = vmul.f32 -0.5, %v2045
        %v2498 = vadd.f32 %v2497, 1.0
        %v2499 = vmul.f32 %v2498, %v2045
        %v2500 = vand.u32 2147483647, %v2045
        %vm2501 = vcmp.lt.f32.partialorder %v2500, 0.0004427343
        %v2502 = vsel %vm2501, %v2499, %v2496
        %v2503 = vadd.f32 %v2047, 1.0
        %v2504 = vlog2.pop %v2503
        %v2505 = vmul.f32 %v2504, 0.6931472
        %v2506 = vmul.f32 -0.5, %v2047
        %v2507 = vadd.f32 %v2506, 1.0
        %v2508 = vmul.f32 %v2507, %v2047
        %v2509 = vand.u32 2147483647, %v2047
        %vm2510 = vcmp.lt.f32.partialorder %v2509, 0.0004427343
        %v2511 = vsel %vm2510, %v2508, %v2505
        %v2512 = vadd.f32 %v2049, 1.0
        %v2513 = vlog2.pop %v2512
        %v2514 = vmul.f32 %v2513, 0.6931472
        %v2515 = vmul.f32 -0.5, %v2049
        %v2516 = vadd.f32 %v2515, 1.0
        %v2517 = vmul.f32 %v2516, %v2049
        %v2518 = vand.u32 2147483647, %v2049
        %vm2519 = vcmp.lt.f32.partialorder %v2518, 0.0004427343
        %v2520 = vsel %vm2519, %v2517, %v2514
        %v2521 = vadd.f32 %v2051, 1.0
        %v2522 = vlog2.pop %v2521
        %v2523 = vmul.f32 %v2522, 0.6931472
        %v2524 = vmul.f32 -0.5, %v2051
        %v2525 = vadd.f32 %v2524, 1.0
        %v2526 = vmul.f32 %v2525, %v2051
        %v2527 = vand.u32 2147483647, %v2051
        %vm2528 = vcmp.lt.f32.partialorder %v2527, 0.0004427343
        %v2529 = vsel %vm2528, %v2526, %v2523
        %v2530 = vadd.f32 %v2053, 1.0
        %v2531 = vlog2.pop %v2530
        %v2532 = vmul.f32 %v2531, 0.6931472
        %v2533 = vmul.f32 -0.5, %v2053
        %v2534 = vadd.f32 %v2533, 1.0
        %v2535 = vmul.f32 %v2534, %v2053
        %v2536 = vand.u32 2147483647, %v2053
        %vm2537 = vcmp.lt.f32.partialorder %v2536, 0.0004427343
        %v2538 = vsel %vm2537, %v2535, %v2532
        %v2539 = vadd.f32 %v2055, 1.0
        %v2540 = vlog2.pop %v2539
        %v2541 = vmul.f32 %v2540, 0.6931472
        %v2542 = vmul.f32 -0.5, %v2055
        %v2543 = vadd.f32 %v2542, 1.0
        %v2544 = vmul.f32 %v2543, %v2055
        %v2545 = vand.u32 2147483647, %v2055
        %vm2546 = vcmp.lt.f32.partialorder %v2545, 0.0004427343
        %v2547 = vsel %vm2546, %v2544, %v2541
        %v2548 = vadd.f32 %v2057, 1.0
        %v2549 = vlog2.pop %v2548
        %v2550 = vmul.f32 %v2549, 0.6931472
        %v2551 = vmul.f32 -0.5, %v2057
        %v2552 = vadd.f32 %v2551, 1.0
        %v2553 = vmul.f32 %v2552, %v2057
        %v2554 = vand.u32 2147483647, %v2057
        %vm2555 = vcmp.lt.f32.partialorder %v2554, 0.0004427343
        %v2556 = vsel %vm2555, %v2553, %v2550
        %v2557 = vadd.f32 %v2059, 1.0
        %v2558 = vlog2.pop %v2557
        %v2559 = vmul.f32 %v2558, 0.6931472
        %v2560 = vmul.f32 -0.5, %v2059
        %v2561 = vadd.f32 %v2560, 1.0
        %v2562 = vmul.f32 %v2561, %v2059
        %v2563 = vand.u32 2147483647, %v2059
        %vm2564 = vcmp.lt.f32.partialorder %v2563, 0.0004427343
        %v2565 = vsel %vm2564, %v2562, %v2559
        %v2566 = vadd.f32 %v2061, 1.0
        %v2567 = vlog2.pop %v2566
        %v2568 = vmul.f32 %v2567, 0.6931472
        %v2569 = vmul.f32 -0.5, %v2061
        %v2570 = vadd.f32 %v2569, 1.0
        %v2571 = vmul.f32 %v2570, %v2061
        %v2572 = vand.u32 2147483647, %v2061
        %vm2573 = vcmp.lt.f32.partialorder %v2572, 0.0004427343
        %v2574 = vsel %vm2573, %v2571, %v2568
        %v2575 = vadd.f32 %v2063, 1.0
        %v2576 = vlog2.pop %v2575
        %v2577 = vmul.f32 %v2576, 0.6931472
        %v2578 = vmul.f32 -0.5, %v2063
        %v2579 = vadd.f32 %v2578, 1.0
        %v2580 = vmul.f32 %v2579, %v2063
        %v2581 = vand.u32 2147483647, %v2063
        %vm2582 = vcmp.lt.f32.partialorder %v2581, 0.0004427343
        %v2583 = vsel %vm2582, %v2580, %v2577
        %v2584 = vadd.f32 %v2065, 1.0
        %v2585 = vlog2.pop %v2584
        %v2586 = vmul.f32 %v2585, 0.6931472
        %v2587 = vmul.f32 -0.5, %v2065
        %v2588 = vadd.f32 %v2587, 1.0
        %v2589 = vmul.f32 %v2588, %v2065
        %v2590 = vand.u32 2147483647, %v2065
        %vm2591 = vcmp.lt.f32.partialorder %v2590, 0.0004427343
        %v2592 = vsel %vm2591, %v2589, %v2586
        %v2593 = vadd.f32 %v2067, 1.0
        %v2594 = vlog2.pop %v2593
        %v2595 = vmul.f32 %v2594, 0.6931472
        %v2596 = vmul.f32 -0.5, %v2067
        %v2597 = vadd.f32 %v2596, 1.0
        %v2598 = vmul.f32 %v2597, %v2067
        %v2599 = vand.u32 2147483647, %v2067
        %vm2600 = vcmp.lt.f32.partialorder %v2599, 0.0004427343
        %v2601 = vsel %vm2600, %v2598, %v2595
        %v2602 = vadd.f32 %v2069, 1.0
        %v2603 = vlog2.pop %v2602
        %v2604 = vmul.f32 %v2603, 0.6931472
        %v2605 = vmul.f32 -0.5, %v2069
        %v2606 = vadd.f32 %v2605, 1.0
        %v2607 = vmul.f32 %v2606, %v2069
        %v2608 = vand.u32 2147483647, %v2069
        %vm2609 = vcmp.lt.f32.partialorder %v2608, 0.0004427343
        %v2610 = vsel %vm2609, %v2607, %v2604
        %v2611 = vadd.f32 %v2071, 1.0
        %v2612 = vlog2.pop %v2611
        %v2613 = vmul.f32 %v2612, 0.6931472
        %v2614 = vmul.f32 -0.5, %v2071
        %v2615 = vadd.f32 %v2614, 1.0
        %v2616 = vmul.f32 %v2615, %v2071
        %v2617 = vand.u32 2147483647, %v2071
        %vm2618 = vcmp.lt.f32.partialorder %v2617, 0.0004427343
        %v2619 = vsel %vm2618, %v2616, %v2613
        %v2620 = vadd.f32 %v2073, 1.0
        %v2621 = vlog2.pop %v2620
        %v2622 = vmul.f32 %v2621, 0.6931472
        %v2623 = vmul.f32 -0.5, %v2073
        %v2624 = vadd.f32 %v2623, 1.0
        %v2625 = vmul.f32 %v2624, %v2073
        %v2626 = vand.u32 2147483647, %v2073
        %vm2627 = vcmp.lt.f32.partialorder %v2626, 0.0004427343
        %v2628 = vsel %vm2627, %v2625, %v2622
        %v2629 = vadd.f32 %v2075, 1.0
        %v2630 = vlog2.pop %v2629
        %v2631 = vmul.f32 %v2630, 0.6931472
        %v2632 = vmul.f32 -0.5, %v2075
        %v2633 = vadd.f32 %v2632, 1.0
        %v2634 = vmul.f32 %v2633, %v2075
        %v2635 = vand.u32 2147483647, %v2075
        %vm2636 = vcmp.lt.f32.partialorder %v2635, 0.0004427343
        %v2637 = vsel %vm2636, %v2634, %v2631
        %v2638 = vadd.f32 %v2077, 1.0
        %v2639 = vlog2.pop %v2638
        %v2640 = vmul.f32 %v2639, 0.6931472
        %v2641 = vmul.f32 -0.5, %v2077
        %v2642 = vadd.f32 %v2641, 1.0
        %v2643 = vmul.f32 %v2642, %v2077
        %v2644 = vand.u32 2147483647, %v2077
        %vm2645 = vcmp.lt.f32.partialorder %v2644, 0.0004427343
        %v2646 = vsel %vm2645, %v2643, %v2640
        %v2647 = vadd.f32 %v2079, 1.0
        %v2648 = vlog2.pop %v2647
        %v2649 = vmul.f32 %v2648, 0.6931472
        %v2650 = vmul.f32 -0.5, %v2079
        %v2651 = vadd.f32 %v2650, 1.0
        %v2652 = vmul.f32 %v2651, %v2079
        %v2653 = vand.u32 2147483647, %v2079
        %vm2654 = vcmp.lt.f32.partialorder %v2653, 0.0004427343
        %v2655 = vsel %vm2654, %v2652, %v2649
        %v2656 = vadd.f32 %v1953, 1.0
        %v2657 = vadd.f32 %v1955, 1.0
        %v2658 = vadd.f32 %v1957, 1.0
        %v2659 = vadd.f32 %v1959, 1.0
        %v2660 = vadd.f32 %v1961, 1.0
        %v2661 = vadd.f32 %v1963, 1.0
        %v2662 = vadd.f32 %v1965, 1.0
        %v2663 = vadd.f32 %v1967, 1.0
        %v2664 = vadd.f32 %v1969, 1.0
        %v2665 = vadd.f32 %v1971, 1.0
        %v2666 = vadd.f32 %v1973, 1.0
        %v2667 = vadd.f32 %v1975, 1.0
        %v2668 = vadd.f32 %v1977, 1.0
        %v2669 = vadd.f32 %v1979, 1.0
        %v2670 = vadd.f32 %v1981, 1.0
        %v2671 = vadd.f32 %v1983, 1.0
        %v2672 = vadd.f32 %v1985, 1.0
        %v2673 = vadd.f32 %v1987, 1.0
        %v2674 = vadd.f32 %v1989, 1.0
        %v2675 = vadd.f32 %v1991, 1.0
        %v2676 = vadd.f32 %v1993, 1.0
        %v2677 = vadd.f32 %v1995, 1.0
        %v2678 = vadd.f32 %v1997, 1.0
        %v2679 = vadd.f32 %v1999, 1.0
        %v2680 = vadd.f32 %v2001, 1.0
        %v2681 = vadd.f32 %v2003, 1.0
        %v2682 = vadd.f32 %v2005, 1.0
        %v2683 = vadd.f32 %v2007, 1.0
        %v2684 = vadd.f32 %v2009, 1.0
        %v2685 = vadd.f32 %v2011, 1.0
        %v2686 = vadd.f32 %v2013, 1.0
        %v2687 = vadd.f32 %v2015, 1.0
        %v2688 = vadd.f32 %v2017, 1.0
        %v2689 = vadd.f32 %v2019, 1.0
        %v2690 = vadd.f32 %v2021, 1.0
        %v2691 = vadd.f32 %v2023, 1.0
        %v2692 = vadd.f32 %v2025, 1.0
        %v2693 = vadd.f32 %v2027, 1.0
        %v2694 = vadd.f32 %v2029, 1.0
        %v2695 = vadd.f32 %v2031, 1.0
        %v2696 = vadd.f32 %v2033, 1.0
        %v2697 = vadd.f32 %v2035, 1.0
        %v2698 = vadd.f32 %v2037, 1.0
        %v2699 = vadd.f32 %v2039, 1.0
        %v2700 = vadd.f32 %v2041, 1.0
        %v2701 = vadd.f32 %v2043, 1.0
        %v2702 = vadd.f32 %v2045, 1.0
        %v2703 = vadd.f32 %v2047, 1.0
        %v2704 = vadd.f32 %v2049, 1.0
        %v2705 = vadd.f32 %v2051, 1.0
        %v2706 = vadd.f32 %v2053, 1.0
        %v2707 = vadd.f32 %v2055, 1.0
        %v2708 = vadd.f32 %v2057, 1.0
        %v2709 = vadd.f32 %v2059, 1.0
        %v2710 = vadd.f32 %v2061, 1.0
        %v2711 = vadd.f32 %v2063, 1.0
        %v2712 = vadd.f32 %v2065, 1.0
        %v2713 = vadd.f32 %v2067, 1.0
        %v2714 = vadd.f32 %v2069, 1.0
        %v2715 = vadd.f32 %v2071, 1.0
        %v2716 = vadd.f32 %v2073, 1.0
        %v2717 = vadd.f32 %v2075, 1.0
        %v2718 = vadd.f32 %v2077, 1.0
        %v2719 = vadd.f32 %v2079, 1.0
        %v2720 = vrcp.pop %v2656
        %v2721 = vrcp.pop %v2657
        %v2722 = vrcp.pop %v2658
        %v2723 = vrcp.pop %v2659
        %v2724 = vrcp.pop %v2660
        %v2725 = vrcp.pop %v2661
        %v2726 = vrcp.pop %v2662
        %v2727 = vrcp.pop %v2663
        %v2728 = vrcp.pop %v2664
        %v2729 = vrcp.pop %v2665
        %v2730 = vrcp.pop %v2666
        %v2731 = vrcp.pop %v2667
        %v2732 = vrcp.pop %v2668
        %v2733 = vrcp.pop %v2669
        %v2734 = vrcp.pop %v2670
        %v2735 = vrcp.pop %v2671
        %v2736 = vrcp.pop %v2672
        %v2737 = vrcp.pop %v2673
        %v2738 = vrcp.pop %v2674
        %v2739 = vrcp.pop %v2675
        %v2740 = vrcp.pop %v2676
        %v2741 = vrcp.pop %v2677
        %v2742 = vrcp.pop %v2678
        %v2743 = vrcp.pop %v2679
        %v2744 = vrcp.pop %v2680
        %v2745 = vrcp.pop %v2681
        %v2746 = vrcp.pop %v2682
        %v2747 = vrcp.pop %v2683
        %v2748 = vrcp.pop %v2684
        %v2749 = vrcp.pop %v2685
        %v2750 = vrcp.pop %v2686
        %v2751 = vrcp.pop %v2687
        %v2752 = vrcp.pop %v2688
        %v2753 = vrcp.pop %v2689
        %v2754 = vrcp.pop %v2690
        %v2755 = vrcp.pop %v2691
        %v2756 = vrcp.pop %v2692
        %v2757 = vrcp.pop %v2693
        %v2758 = vrcp.pop %v2694
        %v2759 = vrcp.pop %v2695
        %v2760 = vrcp.pop %v2696
        %v2761 = vrcp.pop %v2697
        %v2762 = vrcp.pop %v2698
        %v2763 = vrcp.pop %v2699
        %v2764 = vrcp.pop %v2700
        %v2765 = vrcp.pop %v2701
        %v2766 = vrcp.pop %v2702
        %v2767 = vrcp.pop %v2703
        %v2768 = vrcp.pop %v2704
        %v2769 = vrcp.pop %v2705
        %v2770 = vrcp.pop %v2706
        %v2771 = vrcp.pop %v2707
        %v2772 = vrcp.pop %v2708
        %v2773 = vrcp.pop %v2709
        %v2774 = vrcp.pop %v2710
        %v2775 = vrcp.pop %v2711
        %v2776 = vrcp.pop %v2712
        %v2777 = vrcp.pop %v2713
        %v2778 = vrcp.pop %v2714
        %v2779 = vrcp.pop %v2715
        %v2780 = vrcp.pop %v2716
        %v2781 = vrcp.pop %v2717
        %v2782 = vrcp.pop %v2718
        %v2783 = vrcp.pop %v2719
        %vm2784 = vcmp.ge.f32.partialorder %v1760, 0.0
        %vm2785 = vcmp.ge.f32.partialorder %v1761, 0.0
        %vm2786 = vcmp.ge.f32.partialorder %v1762, 0.0
        %vm2787 = vcmp.ge.f32.partialorder %v1763, 0.0
        %vm2788 = vcmp.ge.f32.partialorder %v1764, 0.0
        %vm2789 = vcmp.ge.f32.partialorder %v1765, 0.0
        %vm2790 = vcmp.ge.f32.partialorder %v1766, 0.0
        %vm2791 = vcmp.ge.f32.partialorder %v1767, 0.0
        %vm2792 = vcmp.ge.f32.partialorder %v1768, 0.0
        %vm2793 = vcmp.ge.f32.partialorder %v1769, 0.0
        %vm2794 = vcmp.ge.f32.partialorder %v1770, 0.0
        %vm2795 = vcmp.ge.f32.partialorder %v1771, 0.0
        %vm2796 = vcmp.ge.f32.partialorder %v1772, 0.0
        %vm2797 = vcmp.ge.f32.partialorder %v1773, 0.0
        %vm2798 = vcmp.ge.f32.partialorder %v1774, 0.0
        %vm2799 = vcmp.ge.f32.partialorder %v1775, 0.0
        %vm2800 = vcmp.ge.f32.partialorder %v1776, 0.0
        %vm2801 = vcmp.ge.f32.partialorder %v1777, 0.0
        %vm2802 = vcmp.ge.f32.partialorder %v1778, 0.0
        %vm2803 = vcmp.ge.f32.partialorder %v1779, 0.0
        %vm2804 = vcmp.ge.f32.partialorder %v1780, 0.0
        %vm2805 = vcmp.ge.f32.partialorder %v1781, 0.0
        %vm2806 = vcmp.ge.f32.partialorder %v1782, 0.0
        %vm2807 = vcmp.ge.f32.partialorder %v1783, 0.0
        %vm2808 = vcmp.ge.f32.partialorder %v1784, 0.0
        %vm2809 = vcmp.ge.f32.partialorder %v1785, 0.0
        %vm2810 = vcmp.ge.f32.partialorder %v1786, 0.0
        %vm2811 = vcmp.ge.f32.partialorder %v1787, 0.0
        %vm2812 = vcmp.ge.f32.partialorder %v1788, 0.0
        %vm2813 = vcmp.ge.f32.partialorder %v1789, 0.0
        %vm2814 = vcmp.ge.f32.partialorder %v1790, 0.0
        %vm2815 = vcmp.ge.f32.partialorder %v1791, 0.0
        %vm2816 = vcmp.ge.f32.partialorder %v1792, 0.0
        %vm2817 = vcmp.ge.f32.partialorder %v1793, 0.0
        %vm2818 = vcmp.ge.f32.partialorder %v1794, 0.0
        %vm2819 = vcmp.ge.f32.partialorder %v1795, 0.0
        %vm2820 = vcmp.ge.f32.partialorder %v1796, 0.0
        %vm2821 = vcmp.ge.f32.partialorder %v1797, 0.0
        %vm2822 = vcmp.ge.f32.partialorder %v1798, 0.0
        %vm2823 = vcmp.ge.f32.partialorder %v1799, 0.0
        %vm2824 = vcmp.ge.f32.partialorder %v1800, 0.0
        %vm2825 = vcmp.ge.f32.partialorder %v1801, 0.0
        %vm2826 = vcmp.ge.f32.partialorder %v1802, 0.0
        %vm2827 = vcmp.ge.f32.partialorder %v1803, 0.0
        %vm2828 = vcmp.ge.f32.partialorder %v1804, 0.0
        %vm2829 = vcmp.ge.f32.partialorder %v1805, 0.0
        %vm2830 = vcmp.ge.f32.partialorder %v1806, 0.0
        %vm2831 = vcmp.ge.f32.partialorder %v1807, 0.0
        %vm2832 = vcmp.ge.f32.partialorder %v1808, 0.0
        %vm2833 = vcmp.ge.f32.partialorder %v1809, 0.0
        %vm2834 = vcmp.ge.f32.partialorder %v1810, 0.0
        %vm2835 = vcmp.ge.f32.partialorder %v1811, 0.0
        %vm2836 = vcmp.ge.f32.partialorder %v1812, 0.0
        %vm2837 = vcmp.ge.f32.partialorder %v1813, 0.0
        %vm2838 = vcmp.ge.f32.partialorder %v1814, 0.0
        %vm2839 = vcmp.ge.f32.partialorder %v1815, 0.0
        %vm2840 = vcmp.ge.f32.partialorder %v1816, 0.0
        %vm2841 = vcmp.ge.f32.partialorder %v1817, 0.0
        %vm2842 = vcmp.ge.f32.partialorder %v1818, 0.0
        %vm2843 = vcmp.ge.f32.partialorder %v1819, 0.0
        %vm2844 = vcmp.ge.f32.partialorder %v1820, 0.0
        %vm2845 = vcmp.ge.f32.partialorder %v1821, 0.0
        %vm2846 = vcmp.ge.f32.partialorder %v1822, 0.0
        %vm2847 = vcmp.ge.f32.partialorder %v1823, 0.0
        %v2848 = vsel %vm2784, 1.0, %v1953
        %v2849 = vsel %vm2785, 1.0, %v1955
        %v2850 = vsel %vm2786, 1.0, %v1957
        %v2851 = vsel %vm2787, 1.0, %v1959
        %v2852 = vsel %vm2788, 1.0, %v1961
        %v2853 = vsel %vm2789, 1.0, %v1963
        %v2854 = vsel %vm2790, 1.0, %v1965
        %v2855 = vsel %vm2791, 1.0, %v1967
        %v2856 = vsel %vm2792, 1.0, %v1969
        %v2857 = vsel %vm2793, 1.0, %v1971
        %v2858 = vsel %vm2794, 1.0, %v1973
        %v2859 = vsel %vm2795, 1.0, %v1975
        %v2860 = vsel %vm2796, 1.0, %v1977
        %v2861 = vsel %vm2797, 1.0, %v1979
        %v2862 = vsel %vm2798, 1.0, %v1981
        %v2863 = vsel %vm2799, 1.0, %v1983
        %v2864 = vsel %vm2800, 1.0, %v1985
        %v2865 = vsel %vm2801, 1.0, %v1987
        %v2866 = vsel %vm2802, 1.0, %v1989
        %v2867 = vsel %vm2803, 1.0, %v1991
        %v2868 = vsel %vm2804, 1.0, %v1993
        %v2869 = vsel %vm2805, 1.0, %v1995
        %v2870 = vsel %vm2806, 1.0, %v1997
        %v2871 = vsel %vm2807, 1.0, %v1999
        %v2872 = vsel %vm2808, 1.0, %v2001
        %v2873 = vsel %vm2809, 1.0, %v2003
        %v2874 = vsel %vm2810, 1.0, %v2005
        %v2875 = vsel %vm2811, 1.0, %v2007
        %v2876 = vsel %vm2812, 1.0, %v2009
        %v2877 = vsel %vm2813, 1.0, %v2011
        %v2878 = vsel %vm2814, 1.0, %v2013
        %v2879 = vsel %vm2815, 1.0, %v2015
        %v2880 = vsel %vm2816, 1.0, %v2017
        %v2881 = vsel %vm2817, 1.0, %v2019
        %v2882 = vsel %vm2818, 1.0, %v2021
        %v2883 = vsel %vm2819, 1.0, %v2023
        %v2884 = vsel %vm2820, 1.0, %v2025
        %v2885 = vsel %vm2821, 1.0, %v2027
        %v2886 = vsel %vm2822, 1.0, %v2029
        %v2887 = vsel %vm2823, 1.0, %v2031
        %v2888 = vsel %vm2824, 1.0, %v2033
        %v2889 = vsel %vm2825, 1.0, %v2035
        %v2890 = vsel %vm2826, 1.0, %v2037
        %v2891 = vsel %vm2827, 1.0, %v2039
        %v2892 = vsel %vm2828, 1.0, %v2041
        %v2893 = vsel %vm2829, 1.0, %v2043
        %v2894 = vsel %vm2830, 1.0, %v2045
        %v2895 = vsel %vm2831, 1.0, %v2047
        %v2896 = vsel %vm2832, 1.0, %v2049
        %v2897 = vsel %vm2833, 1.0, %v2051
        %v2898 = vsel %vm2834, 1.0, %v2053
        %v2899 = vsel %vm2835, 1.0, %v2055
        %v2900 = vsel %vm2836, 1.0, %v2057
        %v2901 = vsel %vm2837, 1.0, %v2059
        %v2902 = vsel %vm2838, 1.0, %v2061
        %v2903 = vsel %vm2839, 1.0, %v2063
        %v2904 = vsel %vm2840, 1.0, %v2065
        %v2905 = vsel %vm2841, 1.0, %v2067
        %v2906 = vsel %vm2842, 1.0, %v2069
        %v2907 = vsel %vm2843, 1.0, %v2071
        %v2908 = vsel %vm2844, 1.0, %v2073
        %v2909 = vsel %vm2845, 1.0, %v2075
        %v2910 = vsel %vm2846, 1.0, %v2077
        %v2911 = vsel %vm2847, 1.0, %v2079
        %v2912 = vmul.f32 %v2848, %v2720
        %v2913 = vmul.f32 %v2849, %v2721
        %v2914 = vmul.f32 %v2850, %v2722
        %v2915 = vmul.f32 %v2851, %v2723
        %v2916 = vmul.f32 %v2852, %v2724
        %v2917 = vmul.f32 %v2853, %v2725
        %v2918 = vmul.f32 %v2854, %v2726
        %v2919 = vmul.f32 %v2855, %v2727
        %v2920 = vmul.f32 %v2856, %v2728
        %v2921 = vmul.f32 %v2857, %v2729
        %v2922 = vmul.f32 %v2858, %v2730
        %v2923 = vmul.f32 %v2859, %v2731
        %v2924 = vmul.f32 %v2860, %v2732
        %v2925 = vmul.f32 %v2861, %v2733
        %v2926 = vmul.f32 %v2862, %v2734
        %v2927 = vmul.f32 %v2863, %v2735
        %v2928 = vmul.f32 %v2864, %v2736
        %v2929 = vmul.f32 %v2865, %v2737
        %v2930 = vmul.f32 %v2866, %v2738
        %v2931 = vmul.f32 %v2867, %v2739
        %v2932 = vmul.f32 %v2868, %v2740
        %v2933 = vmul.f32 %v2869, %v2741
        %v2934 = vmul.f32 %v2870, %v2742
        %v2935 = vmul.f32 %v2871, %v2743
        %v2936 = vmul.f32 %v2872, %v2744
        %v2937 = vmul.f32 %v2873, %v2745
        %v2938 = vmul.f32 %v2874, %v2746
        %v2939 = vmul.f32 %v2875, %v2747
        %v2940 = vmul.f32 %v2876, %v2748
        %v2941 = vmul.f32 %v2877, %v2749
        %v2942 = vmul.f32 %v2878, %v2750
        %v2943 = vmul.f32 %v2879, %v2751
        %v2944 = vmul.f32 %v2880, %v2752
        %v2945 = vmul.f32 %v2881, %v2753
        %v2946 = vmul.f32 %v2882, %v2754
        %v2947 = vmul.f32 %v2883, %v2755
        %v2948 = vmul.f32 %v2884, %v2756
        %v2949 = vmul.f32 %v2885, %v2757
        %v2950 = vmul.f32 %v2886, %v2758
        %v2951 = vmul.f32 %v2887, %v2759
        %v2952 = vmul.f32 %v2888, %v2760
        %v2953 = vmul.f32 %v2889, %v2761
        %v2954 = vmul.f32 %v2890, %v2762
        %v2955 = vmul.f32 %v2891, %v2763
        %v2956 = vmul.f32 %v2892, %v2764
        %v2957 = vmul.f32 %v2893, %v2765
        %v2958 = vmul.f32 %v2894, %v2766
        %v2959 = vmul.f32 %v2895, %v2767
        %v2960 = vmul.f32 %v2896, %v2768
        %v2961 = vmul.f32 %v2897, %v2769
        %v2962 = vmul.f32 %v2898, %v2770
        %v2963 = vmul.f32 %v2899, %v2771
        %v2964 = vmul.f32 %v2900, %v2772
        %v2965 = vmul.f32 %v2901, %v2773
        %v2966 = vmul.f32 %v2902, %v2774
        %v2967 = vmul.f32 %v2903, %v2775
        %v2968 = vmul.f32 %v2904, %v2776
        %v2969 = vmul.f32 %v2905, %v2777
        %v2970 = vmul.f32 %v2906, %v2778
        %v2971 = vmul.f32 %v2907, %v2779
        %v2972 = vmul.f32 %v2908, %v2780
        %v2973 = vmul.f32 %v2909, %v2781
        %v2974 = vmul.f32 %v2910, %v2782
        %v2975 = vmul.f32 %v2911, %v2783
        %v2976 = vmul.f32 %v2912, %v539
        %v2977 = vmul.f32 %v2913, %v540
        %v2978 = vmul.f32 %v2914, %v541
        %v2979 = vmul.f32 %v2915, %v542
        %v2980 = vmul.f32 %v2916, %v543
        %v2981 = vmul.f32 %v2917, %v544
        %v2982 = vmul.f32 %v2918, %v545
        %v2983 = vmul.f32 %v2919, %v546
        %v2984 = vmul.f32 %v2920, %v547
        %v2985 = vmul.f32 %v2921, %v548
        %v2986 = vmul.f32 %v2922, %v549
        %v2987 = vmul.f32 %v2923, %v550
        %v2988 = vmul.f32 %v2924, %v551
        %v2989 = vmul.f32 %v2925, %v552
        %v2990 = vmul.f32 %v2926, %v553
        %v2991 = vmul.f32 %v2927, %v554
        %v2992 = vmul.f32 %v2928, %v555
        %v2993 = vmul.f32 %v2929, %v556
        %v2994 = vmul.f32 %v2930, %v557
        %v2995 = vmul.f32 %v2931, %v558
        %v2996 = vmul.f32 %v2932, %v559
        %v2997 = vmul.f32 %v2933, %v560
        %v2998 = vmul.f32 %v2934, %v561
        %v2999 = vmul.f32 %v2935, %v562
        %v3000 = vmul.f32 %v2936, %v563
        %v3001 = vmul.f32 %v2937, %v564
        %v3002 = vmul.f32 %v2938, %v565
        %v3003 = vmul.f32 %v2939, %v566
        %v3004 = vmul.f32 %v2940, %v567
        %v3005 = vmul.f32 %v2941, %v568
        %v3006 = vmul.f32 %v2942, %v569
        %v3007 = vmul.f32 %v2943, %v570
        %v3008 = vmul.f32 %v2944, %v571
        %v3009 = vmul.f32 %v2945, %v572
        %v3010 = vmul.f32 %v2946, %v573
        %v3011 = vmul.f32 %v2947, %v574
        %v3012 = vmul.f32 %v2948, %v575
        %v3013 = vmul.f32 %v2949, %v576
        %v3014 = vmul.f32 %v2950, %v577
        %v3015 = vmul.f32 %v2951, %v578
        %v3016 = vmul.f32 %v2952, %v579
        %v3017 = vmul.f32 %v2953, %v580
        %v3018 = vmul.f32 %v2954, %v581
        %v3019 = vmul.f32 %v2955, %v582
        %v3020 = vmul.f32 %v2956, %v583
        %v3021 = vmul.f32 %v2957, %v584
        %v3022 = vmul.f32 %v2958, %v585
        %v3023 = vmul.f32 %v2959, %v586
        %v3024 = vmul.f32 %v2960, %v587
        %v3025 = vmul.f32 %v2961, %v588
        %v3026 = vmul.f32 %v2962, %v589
        %v3027 = vmul.f32 %v2963, %v590
        %v3028 = vmul.f32 %v2964, %v591
        %v3029 = vmul.f32 %v2965, %v592
        %v3030 = vmul.f32 %v2966, %v593
        %v3031 = vmul.f32 %v2967, %v594
        %v3032 = vmul.f32 %v2968, %v595
        %v3033 = vmul.f32 %v2969, %v596
        %v3034 = vmul.f32 %v2970, %v597
        %v3035 = vmul.f32 %v2971, %v598
        %v3036 = vmul.f32 %v2972, %v599
        %v3037 = vmul.f32 %v2973, %v600
        %v3038 = vmul.f32 %v2974, %v601
        %v3039 = vmul.f32 %v2975, %v602
        %v3040 = vpack.c.bf16 %v2977, %v2976
        %v3041 = vpack.c.bf16 %v2979, %v2978
        %v3042 = vpack.c.bf16 %v2981, %v2980
        %v3043 = vpack.c.bf16 %v2983, %v2982
        %v3044 = vpack.c.bf16 %v2985, %v2984
        %v3045 = vpack.c.bf16 %v2987, %v2986
        %v3046 = vpack.c.bf16 %v2989, %v2988
        %v3047 = vpack.c.bf16 %v2991, %v2990
        %v3048 = vpack.c.bf16 %v2993, %v2992
        %v3049 = vpack.c.bf16 %v2995, %v2994
        %v3050 = vpack.c.bf16 %v2997, %v2996
        %v3051 = vpack.c.bf16 %v2999, %v2998
        %v3052 = vpack.c.bf16 %v3001, %v3000
        %v3053 = vpack.c.bf16 %v3003, %v3002
        %v3054 = vpack.c.bf16 %v3005, %v3004
        %v3055 = vpack.c.bf16 %v3007, %v3006
        %v3056 = vpack.c.bf16 %v3009, %v3008
        %v3057 = vpack.c.bf16 %v3011, %v3010
        %v3058 = vpack.c.bf16 %v3013, %v3012
        %v3059 = vpack.c.bf16 %v3015, %v3014
        %v3060 = vpack.c.bf16 %v3017, %v3016
        %v3061 = vpack.c.bf16 %v3019, %v3018
        %v3062 = vpack.c.bf16 %v3021, %v3020
        %v3063 = vpack.c.bf16 %v3023, %v3022
        %v3064 = vpack.c.bf16 %v3025, %v3024
        %v3065 = vpack.c.bf16 %v3027, %v3026
        %v3066 = vpack.c.bf16 %v3029, %v3028
        %v3067 = vpack.c.bf16 %v3031, %v3030
        %v3068 = vpack.c.bf16 %v3033, %v3032
        %v3069 = vpack.c.bf16 %v3035, %v3034
        %v3070 = vpack.c.bf16 %v3037, %v3036
        %v3071 = vpack.c.bf16 %v3039, %v3038
        %v3104 = vunpack.c.l.b16 %v3040
        %v3105 = vunpack.c.h.b16 %v3040
        %v3106 = vunpack.c.l.b16 %v3041
        %v3107 = vunpack.c.h.b16 %v3041
        %v3108 = vunpack.c.l.b16 %v3042
        %v3109 = vunpack.c.h.b16 %v3042
        %v3110 = vunpack.c.l.b16 %v3043
        %v3111 = vunpack.c.h.b16 %v3043
        %v3112 = vunpack.c.l.b16 %v3044
        %v3113 = vunpack.c.h.b16 %v3044
        %v3114 = vunpack.c.l.b16 %v3045
        %v3115 = vunpack.c.h.b16 %v3045
        %v3116 = vunpack.c.l.b16 %v3046
        %v3117 = vunpack.c.h.b16 %v3046
        %v3118 = vunpack.c.l.b16 %v3047
        %v3119 = vunpack.c.h.b16 %v3047
        %v3120 = vunpack.c.l.b16 %v3048
        %v3121 = vunpack.c.h.b16 %v3048
        %v3122 = vunpack.c.l.b16 %v3049
        %v3123 = vunpack.c.h.b16 %v3049
        %v3124 = vunpack.c.l.b16 %v3050
        %v3125 = vunpack.c.h.b16 %v3050
        %v3126 = vunpack.c.l.b16 %v3051
        %v3127 = vunpack.c.h.b16 %v3051
        %v3128 = vunpack.c.l.b16 %v3052
        %v3129 = vunpack.c.h.b16 %v3052
        %v3130 = vunpack.c.l.b16 %v3053
        %v3131 = vunpack.c.h.b16 %v3053
        %v3132 = vunpack.c.l.b16 %v3054
        %v3133 = vunpack.c.h.b16 %v3054
        %v3134 = vunpack.c.l.b16 %v3055
        %v3135 = vunpack.c.h.b16 %v3055
        %v3136 = vunpack.c.l.b16 %v3056
        %v3137 = vunpack.c.h.b16 %v3056
        %v3138 = vunpack.c.l.b16 %v3057
        %v3139 = vunpack.c.h.b16 %v3057
        %v3140 = vunpack.c.l.b16 %v3058
        %v3141 = vunpack.c.h.b16 %v3058
        %v3142 = vunpack.c.l.b16 %v3059
        %v3143 = vunpack.c.h.b16 %v3059
        %v3144 = vunpack.c.l.b16 %v3060
        %v3145 = vunpack.c.h.b16 %v3060
        %v3146 = vunpack.c.l.b16 %v3061
        %v3147 = vunpack.c.h.b16 %v3061
        %v3148 = vunpack.c.l.b16 %v3062
        %v3149 = vunpack.c.h.b16 %v3062
        %v3150 = vunpack.c.l.b16 %v3063
        %v3151 = vunpack.c.h.b16 %v3063
        %v3152 = vunpack.c.l.b16 %v3064
        %v3153 = vunpack.c.h.b16 %v3064
        %v3154 = vunpack.c.l.b16 %v3065
        %v3155 = vunpack.c.h.b16 %v3065
        %v3156 = vunpack.c.l.b16 %v3066
        %v3157 = vunpack.c.h.b16 %v3066
        %v3158 = vunpack.c.l.b16 %v3067
        %v3159 = vunpack.c.h.b16 %v3067
        %v3160 = vunpack.c.l.b16 %v3068
        %v3161 = vunpack.c.h.b16 %v3068
        %v3162 = vunpack.c.l.b16 %v3069
        %v3163 = vunpack.c.h.b16 %v3069
        %v3164 = vunpack.c.l.b16 %v3070
        %v3165 = vunpack.c.h.b16 %v3070
        %v3166 = vunpack.c.l.b16 %v3071
        %v3167 = vunpack.c.h.b16 %v3071
        %v3168 = vpack.c.b16 %v3104, %v3104
        %v3169 = vpack.c.b16 %v3105, %v3105
        %v3170 = vpack.c.b16 %v3106, %v3106
        %v3171 = vpack.c.b16 %v3107, %v3107
        %v3172 = vpack.c.b16 %v3108, %v3108
        %v3173 = vpack.c.b16 %v3109, %v3109
        %v3174 = vpack.c.b16 %v3110, %v3110
        %v3175 = vpack.c.b16 %v3111, %v3111
        %v3176 = vpack.c.b16 %v3112, %v3112
        %v3177 = vpack.c.b16 %v3113, %v3113
        %v3178 = vpack.c.b16 %v3114, %v3114
        %v3179 = vpack.c.b16 %v3115, %v3115
        %v3180 = vpack.c.b16 %v3116, %v3116
        %v3181 = vpack.c.b16 %v3117, %v3117
        %v3182 = vpack.c.b16 %v3118, %v3118
        %v3183 = vpack.c.b16 %v3119, %v3119
        %v3184 = vpack.c.b16 %v3120, %v3120
        %v3185 = vpack.c.b16 %v3121, %v3121
        %v3186 = vpack.c.b16 %v3122, %v3122
        %v3187 = vpack.c.b16 %v3123, %v3123
        %v3188 = vpack.c.b16 %v3124, %v3124
        %v3189 = vpack.c.b16 %v3125, %v3125
        %v3190 = vpack.c.b16 %v3126, %v3126
        %v3191 = vpack.c.b16 %v3127, %v3127
        %v3192 = vpack.c.b16 %v3128, %v3128
        %v3193 = vpack.c.b16 %v3129, %v3129
        %v3194 = vpack.c.b16 %v3130, %v3130
        %v3195 = vpack.c.b16 %v3131, %v3131
        %v3196 = vpack.c.b16 %v3132, %v3132
        %v3197 = vpack.c.b16 %v3133, %v3133
        %v3198 = vpack.c.b16 %v3134, %v3134
        %v3199 = vpack.c.b16 %v3135, %v3135
        %v3200 = vpack.c.b16 %v3136, %v3136
        %v3201 = vpack.c.b16 %v3137, %v3137
        %v3202 = vpack.c.b16 %v3138, %v3138
        %v3203 = vpack.c.b16 %v3139, %v3139
        %v3204 = vpack.c.b16 %v3140, %v3140
        %v3205 = vpack.c.b16 %v3141, %v3141
        %v3206 = vpack.c.b16 %v3142, %v3142
        %v3207 = vpack.c.b16 %v3143, %v3143
        %v3208 = vpack.c.b16 %v3144, %v3144
        %v3209 = vpack.c.b16 %v3145, %v3145
        %v3210 = vpack.c.b16 %v3146, %v3146
        %v3211 = vpack.c.b16 %v3147, %v3147
        %v3212 = vpack.c.b16 %v3148, %v3148
        %v3213 = vpack.c.b16 %v3149, %v3149
        %v3214 = vpack.c.b16 %v3150, %v3150
        %v3215 = vpack.c.b16 %v3151, %v3151
        %v3216 = vpack.c.b16 %v3152, %v3152
        %v3217 = vpack.c.b16 %v3153, %v3153
        %v3218 = vpack.c.b16 %v3154, %v3154
        %v3219 = vpack.c.b16 %v3155, %v3155
        %v3220 = vpack.c.b16 %v3156, %v3156
        %v3221 = vpack.c.b16 %v3157, %v3157
        %v3222 = vpack.c.b16 %v3158, %v3158
        %v3223 = vpack.c.b16 %v3159, %v3159
        %v3224 = vpack.c.b16 %v3160, %v3160
        %v3225 = vpack.c.b16 %v3161, %v3161
        %v3226 = vpack.c.b16 %v3162, %v3162
        %v3227 = vpack.c.b16 %v3163, %v3163
        %v3228 = vpack.c.b16 %v3164, %v3164
        %v3229 = vpack.c.b16 %v3165, %v3165
        %v3230 = vpack.c.b16 %v3166, %v3166
        %v3231 = vpack.c.b16 %v3167, %v3167
        %3296 = vst [vmem:[%s205] sm:$0xf] %v3168
        %3297 = vst [vmem:[%s205 + $0x4] sm:$0xf] %v3169
        %3298 = vst [vmem:[%s205 + $0x8] sm:$0xf] %v3170
        %3299 = vst [vmem:[%s205 + $0xc] sm:$0xf] %v3171
        %3300 = vst [vmem:[%s205 + $0x10] sm:$0xf] %v3172
        %3301 = vst [vmem:[%s205 + $0x14] sm:$0xf] %v3173
        %3302 = vst [vmem:[%s205 + $0x18] sm:$0xf] %v3174
        %3303 = vst [vmem:[%s205 + $0x1c] sm:$0xf] %v3175
        %3304 = vst [vmem:[%s205 + $0x20] sm:$0xf] %v3176
        %3305 = vst [vmem:[%s205 + $0x24] sm:$0xf] %v3177
        %3306 = vst [vmem:[%s205 + $0x28] sm:$0xf] %v3178
        %3307 = vst [vmem:[%s205 + $0x2c] sm:$0xf] %v3179
        %3308 = vst [vmem:[%s205 + $0x30] sm:$0xf] %v3180
        %3309 = vst [vmem:[%s205 + $0x34] sm:$0xf] %v3181
        %3310 = vst [vmem:[%s205 + $0x38] sm:$0xf] %v3182
        %3311 = vst [vmem:[%s205 + $0x3c] sm:$0xf] %v3183
        %3312 = vst [vmem:[%s205 + $0x40] sm:$0xf] %v3184
        %3313 = vst [vmem:[%s205 + $0x44] sm:$0xf] %v3185
        %3314 = vst [vmem:[%s205 + $0x48] sm:$0xf] %v3186
        %3315 = vst [vmem:[%s205 + $0x4c] sm:$0xf] %v3187
        %3316 = vst [vmem:[%s205 + $0x50] sm:$0xf] %v3188
        %3317 = vst [vmem:[%s205 + $0x54] sm:$0xf] %v3189
        %3318 = vst [vmem:[%s205 + $0x58] sm:$0xf] %v3190
        %3319 = vst [vmem:[%s205 + $0x5c] sm:$0xf] %v3191
        %3320 = vst [vmem:[%s205 + $0x60] sm:$0xf] %v3192
        %3321 = vst [vmem:[%s205 + $0x64] sm:$0xf] %v3193
        %3322 = vst [vmem:[%s205 + $0x68] sm:$0xf] %v3194
        %3323 = vst [vmem:[%s205 + $0x6c] sm:$0xf] %v3195
        %3324 = vst [vmem:[%s205 + $0x70] sm:$0xf] %v3196
        %3325 = vst [vmem:[%s205 + $0x74] sm:$0xf] %v3197
        %3326 = vst [vmem:[%s205 + $0x78] sm:$0xf] %v3198
        %3327 = vst [vmem:[%s205 + $0x7c] sm:$0xf] %v3199
        %3328 = vst [vmem:[%s205 + $0x80] sm:$0xf] %v3200
        %3329 = vst [vmem:[%s205 + $0x84] sm:$0xf] %v3201
        %3330 = vst [vmem:[%s205 + $0x88] sm:$0xf] %v3202
        %3331 = vst [vmem:[%s205 + $0x8c] sm:$0xf] %v3203
        %3332 = vst [vmem:[%s205 + $0x90] sm:$0xf] %v3204
        %3333 = vst [vmem:[%s205 + $0x94] sm:$0xf] %v3205
        %3334 = vst [vmem:[%s205 + $0x98] sm:$0xf] %v3206
        %3335 = vst [vmem:[%s205 + $0x9c] sm:$0xf] %v3207
        %3336 = vst [vmem:[%s205 + $0xa0] sm:$0xf] %v3208
        %3337 = vst [vmem:[%s205 + $0xa4] sm:$0xf] %v3209
        %3338 = vst [vmem:[%s205 + $0xa8] sm:$0xf] %v3210
        %3339 = vst [vmem:[%s205 + $0xac] sm:$0xf] %v3211
        %3340 = vst [vmem:[%s205 + $0xb0] sm:$0xf] %v3212
        %3341 = vst [vmem:[%s205 + $0xb4] sm:$0xf] %v3213
        %3342 = vst [vmem:[%s205 + $0xb8] sm:$0xf] %v3214
        %3343 = vst [vmem:[%s205 + $0xbc] sm:$0xf] %v3215
        %3344 = vst [vmem:[%s205 + $0xc0] sm:$0xf] %v3216
        %3345 = vst [vmem:[%s205 + $0xc4] sm:$0xf] %v3217
        %3346 = vst [vmem:[%s205 + $0xc8] sm:$0xf] %v3218
        %3347 = vst [vmem:[%s205 + $0xcc] sm:$0xf] %v3219
        %3348 = vst [vmem:[%s205 + $0xd0] sm:$0xf] %v3220
        %3349 = vst [vmem:[%s205 + $0xd4] sm:$0xf] %v3221
        %3350 = vst [vmem:[%s205 + $0xd8] sm:$0xf] %v3222
        %3351 = vst [vmem:[%s205 + $0xdc] sm:$0xf] %v3223
        %3352 = vst [vmem:[%s205 + $0xe0] sm:$0xf] %v3224
        %3353 = vst [vmem:[%s205 + $0xe4] sm:$0xf] %v3225
        %3354 = vst [vmem:[%s205 + $0xe8] sm:$0xf] %v3226
        %3355 = vst [vmem:[%s205 + $0xec] sm:$0xf] %v3227
        %3356 = vst [vmem:[%s205 + $0xf0] sm:$0xf] %v3228
        %3357 = vst [vmem:[%s205 + $0xf4] sm:$0xf] %v3229
        %3358 = vst [vmem:[%s205 + $0xf8] sm:$0xf] %v3230
        %3359 = vst [vmem:[%s205 + $0xfc] sm:$0xf] %v3231
        %v3360 = vmul.f32 %v411, 2.0
        %v3361 = vmul.f32 %v412, 2.0
        %v3362 = vmul.f32 %v413, 2.0
        %v3363 = vmul.f32 %v414, 2.0
        %v3364 = vmul.f32 %v415, 2.0
        %v3365 = vmul.f32 %v416, 2.0
        %v3366 = vmul.f32 %v417, 2.0
        %v3367 = vmul.f32 %v418, 2.0
        %v3368 = vmul.f32 %v419, 2.0
        %v3369 = vmul.f32 %v420, 2.0
        %v3370 = vmul.f32 %v421, 2.0
        %v3371 = vmul.f32 %v422, 2.0
        %v3372 = vmul.f32 %v423, 2.0
        %v3373 = vmul.f32 %v424, 2.0
        %v3374 = vmul.f32 %v425, 2.0
        %v3375 = vmul.f32 %v426, 2.0
        %v3376 = vmul.f32 %v427, 2.0
        %v3377 = vmul.f32 %v428, 2.0
        %v3378 = vmul.f32 %v429, 2.0
        %v3379 = vmul.f32 %v430, 2.0
        %v3380 = vmul.f32 %v431, 2.0
        %v3381 = vmul.f32 %v432, 2.0
        %v3382 = vmul.f32 %v433, 2.0
        %v3383 = vmul.f32 %v434, 2.0
        %v3384 = vmul.f32 %v435, 2.0
        %v3385 = vmul.f32 %v436, 2.0
        %v3386 = vmul.f32 %v437, 2.0
        %v3387 = vmul.f32 %v438, 2.0
        %v3388 = vmul.f32 %v439, 2.0
        %v3389 = vmul.f32 %v440, 2.0
        %v3390 = vmul.f32 %v441, 2.0
        %v3391 = vmul.f32 %v442, 2.0
        %v3392 = vmul.f32 %v443, 2.0
        %v3393 = vmul.f32 %v444, 2.0
        %v3394 = vmul.f32 %v445, 2.0
        %v3395 = vmul.f32 %v446, 2.0
        %v3396 = vmul.f32 %v447, 2.0
        %v3397 = vmul.f32 %v448, 2.0
        %v3398 = vmul.f32 %v449, 2.0
        %v3399 = vmul.f32 %v450, 2.0
        %v3400 = vmul.f32 %v451, 2.0
        %v3401 = vmul.f32 %v452, 2.0
        %v3402 = vmul.f32 %v453, 2.0
        %v3403 = vmul.f32 %v454, 2.0
        %v3404 = vmul.f32 %v455, 2.0
        %v3405 = vmul.f32 %v456, 2.0
        %v3406 = vmul.f32 %v457, 2.0
        %v3407 = vmul.f32 %v458, 2.0
        %v3408 = vmul.f32 %v459, 2.0
        %v3409 = vmul.f32 %v460, 2.0
        %v3410 = vmul.f32 %v461, 2.0
        %v3411 = vmul.f32 %v462, 2.0
        %v3412 = vmul.f32 %v463, 2.0
        %v3413 = vmul.f32 %v464, 2.0
        %v3414 = vmul.f32 %v465, 2.0
        %v3415 = vmul.f32 %v466, 2.0
        %v3416 = vmul.f32 %v467, 2.0
        %v3417 = vmul.f32 %v468, 2.0
        %v3418 = vmul.f32 %v469, 2.0
        %v3419 = vmul.f32 %v470, 2.0
        %v3420 = vmul.f32 %v471, 2.0
        %v3421 = vmul.f32 %v472, 2.0
        %v3422 = vmul.f32 %v473, 2.0
        %v3423 = vmul.f32 %v474, 2.0
        %v3424 = vsub.f32 1.0, %v411
        %v3425 = vsub.f32 1.0, %v412
        %v3426 = vsub.f32 1.0, %v413
        %v3427 = vsub.f32 1.0, %v414
        %v3428 = vsub.f32 1.0, %v415
        %v3429 = vsub.f32 1.0, %v416
        %v3430 = vsub.f32 1.0, %v417
        %v3431 = vsub.f32 1.0, %v418
        %v3432 = vsub.f32 1.0, %v419
        %v3433 = vsub.f32 1.0, %v420
        %v3434 = vsub.f32 1.0, %v421
        %v3435 = vsub.f32 1.0, %v422
        %v3436 = vsub.f32 1.0, %v423
        %v3437 = vsub.f32 1.0, %v424
        %v3438 = vsub.f32 1.0, %v425
        %v3439 = vsub.f32 1.0, %v426
        %v3440 = vsub.f32 1.0, %v427
        %v3441 = vsub.f32 1.0, %v428
        %v3442 = vsub.f32 1.0, %v429
        %v3443 = vsub.f32 1.0, %v430
        %v3444 = vsub.f32 1.0, %v431
        %v3445 = vsub.f32 1.0, %v432
        %v3446 = vsub.f32 1.0, %v433
        %v3447 = vsub.f32 1.0, %v434
        %v3448 = vsub.f32 1.0, %v435
        %v3449 = vsub.f32 1.0, %v436
        %v3450 = vsub.f32 1.0, %v437
        %v3451 = vsub.f32 1.0, %v438
        %v3452 = vsub.f32 1.0, %v439
        %v3453 = vsub.f32 1.0, %v440
        %v3454 = vsub.f32 1.0, %v441
        %v3455 = vsub.f32 1.0, %v442
        %v3456 = vsub.f32 1.0, %v443
        %v3457 = vsub.f32 1.0, %v444
        %v3458 = vsub.f32 1.0, %v445
        %v3459 = vsub.f32 1.0, %v446
        %v3460 = vsub.f32 1.0, %v447
        %v3461 = vsub.f32 1.0, %v448
        %v3462 = vsub.f32 1.0, %v449
        %v3463 = vsub.f32 1.0, %v450
        %v3464 = vsub.f32 1.0, %v451
        %v3465 = vsub.f32 1.0, %v452
        %v3466 = vsub.f32 1.0, %v453
        %v3467 = vsub.f32 1.0, %v454
        %v3468 = vsub.f32 1.0, %v455
        %v3469 = vsub.f32 1.0, %v456
        %v3470 = vsub.f32 1.0, %v457
        %v3471 = vsub.f32 1.0, %v458
        %v3472 = vsub.f32 1.0, %v459
        %v3473 = vsub.f32 1.0, %v460
        %v3474 = vsub.f32 1.0, %v461
        %v3475 = vsub.f32 1.0, %v462
        %v3476 = vsub.f32 1.0, %v463
        %v3477 = vsub.f32 1.0, %v464
        %v3478 = vsub.f32 1.0, %v465
        %v3479 = vsub.f32 1.0, %v466
        %v3480 = vsub.f32 1.0, %v467
        %v3481 = vsub.f32 1.0, %v468
        %v3482 = vsub.f32 1.0, %v469
        %v3483 = vsub.f32 1.0, %v470
        %v3484 = vsub.f32 1.0, %v471
        %v3485 = vsub.f32 1.0, %v472
        %v3486 = vsub.f32 1.0, %v473
        %v3487 = vsub.f32 1.0, %v474
        %v3488 = vsub.f32 0.0, %v1760
        %v3489 = vsub.f32 0.0, %v1761
        %v3490 = vsub.f32 0.0, %v1762
        %v3491 = vsub.f32 0.0, %v1763
        %v3492 = vsub.f32 0.0, %v1764
        %v3493 = vsub.f32 0.0, %v1765
        %v3494 = vsub.f32 0.0, %v1766
        %v3495 = vsub.f32 0.0, %v1767
        %v3496 = vsub.f32 0.0, %v1768
        %v3497 = vsub.f32 0.0, %v1769
        %v3498 = vsub.f32 0.0, %v1770
        %v3499 = vsub.f32 0.0, %v1771
        %v3500 = vsub.f32 0.0, %v1772
        %v3501 = vsub.f32 0.0, %v1773
        %v3502 = vsub.f32 0.0, %v1774
        %v3503 = vsub.f32 0.0, %v1775
        %v3504 = vsub.f32 0.0, %v1776
        %v3505 = vsub.f32 0.0, %v1777
        %v3506 = vsub.f32 0.0, %v1778
        %v3507 = vsub.f32 0.0, %v1779
        %v3508 = vsub.f32 0.0, %v1780
        %v3509 = vsub.f32 0.0, %v1781
        %v3510 = vsub.f32 0.0, %v1782
        %v3511 = vsub.f32 0.0, %v1783
        %v3512 = vsub.f32 0.0, %v1784
        %v3513 = vsub.f32 0.0, %v1785
        %v3514 = vsub.f32 0.0, %v1786
        %v3515 = vsub.f32 0.0, %v1787
        %v3516 = vsub.f32 0.0, %v1788
        %v3517 = vsub.f32 0.0, %v1789
        %v3518 = vsub.f32 0.0, %v1790
        %v3519 = vsub.f32 0.0, %v1791
        %v3520 = vsub.f32 0.0, %v1792
        %v3521 = vsub.f32 0.0, %v1793
        %v3522 = vsub.f32 0.0, %v1794
        %v3523 = vsub.f32 0.0, %v1795
        %v3524 = vsub.f32 0.0, %v1796
        %v3525 = vsub.f32 0.0, %v1797
        %v3526 = vsub.f32 0.0, %v1798
        %v3527 = vsub.f32 0.0, %v1799
        %v3528 = vsub.f32 0.0, %v1800
        %v3529 = vsub.f32 0.0, %v1801
        %v3530 = vsub.f32 0.0, %v1802
        %v3531 = vsub.f32 0.0, %v1803
        %v3532 = vsub.f32 0.0, %v1804
        %v3533 = vsub.f32 0.0, %v1805
        %v3534 = vsub.f32 0.0, %v1806
        %v3535 = vsub.f32 0.0, %v1807
        %v3536 = vsub.f32 0.0, %v1808
        %v3537 = vsub.f32 0.0, %v1809
        %v3538 = vsub.f32 0.0, %v1810
        %v3539 = vsub.f32 0.0, %v1811
        %v3540 = vsub.f32 0.0, %v1812
        %v3541 = vsub.f32 0.0, %v1813
        %v3542 = vsub.f32 0.0, %v1814
        %v3543 = vsub.f32 0.0, %v1815
        %v3544 = vsub.f32 0.0, %v1816
        %v3545 = vsub.f32 0.0, %v1817
        %v3546 = vsub.f32 0.0, %v1818
        %v3547 = vsub.f32 0.0, %v1819
        %v3548 = vsub.f32 0.0, %v1820
        %v3549 = vsub.f32 0.0, %v1821
        %v3550 = vsub.f32 0.0, %v1822
        %v3551 = vsub.f32 0.0, %v1823
        %v3552 = vmax.f32 %v3488, 0.0
        %v3553 = vmax.f32 %v3489, 0.0
        %v3554 = vmax.f32 %v3490, 0.0
        %v3555 = vmax.f32 %v3491, 0.0
        %v3556 = vmax.f32 %v3492, 0.0
        %v3557 = vmax.f32 %v3493, 0.0
        %v3558 = vmax.f32 %v3494, 0.0
        %v3559 = vmax.f32 %v3495, 0.0
        %v3560 = vmax.f32 %v3496, 0.0
        %v3561 = vmax.f32 %v3497, 0.0
        %v3562 = vmax.f32 %v3498, 0.0
        %v3563 = vmax.f32 %v3499, 0.0
        %v3564 = vmax.f32 %v3500, 0.0
        %v3565 = vmax.f32 %v3501, 0.0
        %v3566 = vmax.f32 %v3502, 0.0
        %v3567 = vmax.f32 %v3503, 0.0
        %v3568 = vmax.f32 %v3504, 0.0
        %v3569 = vmax.f32 %v3505, 0.0
        %v3570 = vmax.f32 %v3506, 0.0
        %v3571 = vmax.f32 %v3507, 0.0
        %v3572 = vmax.f32 %v3508, 0.0
        %v3573 = vmax.f32 %v3509, 0.0
        %v3574 = vmax.f32 %v3510, 0.0
        %v3575 = vmax.f32 %v3511, 0.0
        %v3576 = vmax.f32 %v3512, 0.0
        %v3577 = vmax.f32 %v3513, 0.0
        %v3578 = vmax.f32 %v3514, 0.0
        %v3579 = vmax.f32 %v3515, 0.0
        %v3580 = vmax.f32 %v3516, 0.0
        %v3581 = vmax.f32 %v3517, 0.0
        %v3582 = vmax.f32 %v3518, 0.0
        %v3583 = vmax.f32 %v3519, 0.0
        %v3584 = vmax.f32 %v3520, 0.0
        %v3585 = vmax.f32 %v3521, 0.0
        %v3586 = vmax.f32 %v3522, 0.0
        %v3587 = vmax.f32 %v3523, 0.0
        %v3588 = vmax.f32 %v3524, 0.0
        %v3589 = vmax.f32 %v3525, 0.0
        %v3590 = vmax.f32 %v3526, 0.0
        %v3591 = vmax.f32 %v3527, 0.0
        %v3592 = vmax.f32 %v3528, 0.0
        %v3593 = vmax.f32 %v3529, 0.0
        %v3594 = vmax.f32 %v3530, 0.0
        %v3595 = vmax.f32 %v3531, 0.0
        %v3596 = vmax.f32 %v3532, 0.0
        %v3597 = vmax.f32 %v3533, 0.0
        %v3598 = vmax.f32 %v3534, 0.0
        %v3599 = vmax.f32 %v3535, 0.0
        %v3600 = vmax.f32 %v3536, 0.0
        %v3601 = vmax.f32 %v3537, 0.0
        %v3602 = vmax.f32 %v3538, 0.0
        %v3603 = vmax.f32 %v3539, 0.0
        %v3604 = vmax.f32 %v3540, 0.0
        %v3605 = vmax.f32 %v3541, 0.0
        %v3606 = vmax.f32 %v3542, 0.0
        %v3607 = vmax.f32 %v3543, 0.0
        %v3608 = vmax.f32 %v3544, 0.0
        %v3609 = vmax.f32 %v3545, 0.0
        %v3610 = vmax.f32 %v3546, 0.0
        %v3611 = vmax.f32 %v3547, 0.0
        %v3612 = vmax.f32 %v3548, 0.0
        %v3613 = vmax.f32 %v3549, 0.0
        %v3614 = vmax.f32 %v3550, 0.0
        %v3615 = vmax.f32 %v3551, 0.0
        %v3616 = vmul.f32 %v3360, %v3552
        %v3617 = vmul.f32 %v3361, %v3553
        %v3618 = vmul.f32 %v3362, %v3554
        %v3619 = vmul.f32 %v3363, %v3555
        %v3620 = vmul.f32 %v3364, %v3556
        %v3621 = vmul.f32 %v3365, %v3557
        %v3622 = vmul.f32 %v3366, %v3558
        %v3623 = vmul.f32 %v3367, %v3559
        %v3624 = vmul.f32 %v3368, %v3560
        %v3625 = vmul.f32 %v3369, %v3561
        %v3626 = vmul.f32 %v3370, %v3562
        %v3627 = vmul.f32 %v3371, %v3563
        %v3628 = vmul.f32 %v3372, %v3564
        %v3629 = vmul.f32 %v3373, %v3565
        %v3630 = vmul.f32 %v3374, %v3566
        %v3631 = vmul.f32 %v3375, %v3567
        %v3632 = vmul.f32 %v3376, %v3568
        %v3633 = vmul.f32 %v3377, %v3569
        %v3634 = vmul.f32 %v3378, %v3570
        %v3635 = vmul.f32 %v3379, %v3571
        %v3636 = vmul.f32 %v3380, %v3572
        %v3637 = vmul.f32 %v3381, %v3573
        %v3638 = vmul.f32 %v3382, %v3574
        %v3639 = vmul.f32 %v3383, %v3575
        %v3640 = vmul.f32 %v3384, %v3576
        %v3641 = vmul.f32 %v3385, %v3577
        %v3642 = vmul.f32 %v3386, %v3578
        %v3643 = vmul.f32 %v3387, %v3579
        %v3644 = vmul.f32 %v3388, %v3580
        %v3645 = vmul.f32 %v3389, %v3581
        %v3646 = vmul.f32 %v3390, %v3582
        %v3647 = vmul.f32 %v3391, %v3583
        %v3648 = vmul.f32 %v3392, %v3584
        %v3649 = vmul.f32 %v3393, %v3585
        %v3650 = vmul.f32 %v3394, %v3586
        %v3651 = vmul.f32 %v3395, %v3587
        %v3652 = vmul.f32 %v3396, %v3588
        %v3653 = vmul.f32 %v3397, %v3589
        %v3654 = vmul.f32 %v3398, %v3590
        %v3655 = vmul.f32 %v3399, %v3591
        %v3656 = vmul.f32 %v3400, %v3592
        %v3657 = vmul.f32 %v3401, %v3593
        %v3658 = vmul.f32 %v3402, %v3594
        %v3659 = vmul.f32 %v3403, %v3595
        %v3660 = vmul.f32 %v3404, %v3596
        %v3661 = vmul.f32 %v3405, %v3597
        %v3662 = vmul.f32 %v3406, %v3598
        %v3663 = vmul.f32 %v3407, %v3599
        %v3664 = vmul.f32 %v3408, %v3600
        %v3665 = vmul.f32 %v3409, %v3601
        %v3666 = vmul.f32 %v3410, %v3602
        %v3667 = vmul.f32 %v3411, %v3603
        %v3668 = vmul.f32 %v3412, %v3604
        %v3669 = vmul.f32 %v3413, %v3605
        %v3670 = vmul.f32 %v3414, %v3606
        %v3671 = vmul.f32 %v3415, %v3607
        %v3672 = vmul.f32 %v3416, %v3608
        %v3673 = vmul.f32 %v3417, %v3609
        %v3674 = vmul.f32 %v3418, %v3610
        %v3675 = vmul.f32 %v3419, %v3611
        %v3676 = vmul.f32 %v3420, %v3612
        %v3677 = vmul.f32 %v3421, %v3613
        %v3678 = vmul.f32 %v3422, %v3614
        %v3679 = vmul.f32 %v3423, %v3615
        %v3680 = vmax.f32 %v1760, 0.0
        %v3681 = vmax.f32 %v1761, 0.0
        %v3682 = vmax.f32 %v1762, 0.0
        %v3683 = vmax.f32 %v1763, 0.0
        %v3684 = vmax.f32 %v1764, 0.0
        %v3685 = vmax.f32 %v1765, 0.0
        %v3686 = vmax.f32 %v1766, 0.0
        %v3687 = vmax.f32 %v1767, 0.0
        %v3688 = vmax.f32 %v1768, 0.0
        %v3689 = vmax.f32 %v1769, 0.0
        %v3690 = vmax.f32 %v1770, 0.0
        %v3691 = vmax.f32 %v1771, 0.0
        %v3692 = vmax.f32 %v1772, 0.0
        %v3693 = vmax.f32 %v1773, 0.0
        %v3694 = vmax.f32 %v1774, 0.0
        %v3695 = vmax.f32 %v1775, 0.0
        %v3696 = vmax.f32 %v1776, 0.0
        %v3697 = vmax.f32 %v1777, 0.0
        %v3698 = vmax.f32 %v1778, 0.0
        %v3699 = vmax.f32 %v1779, 0.0
        %v3700 = vmax.f32 %v1780, 0.0
        %v3701 = vmax.f32 %v1781, 0.0
        %v3702 = vmax.f32 %v1782, 0.0
        %v3703 = vmax.f32 %v1783, 0.0
        %v3704 = vmax.f32 %v1784, 0.0
        %v3705 = vmax.f32 %v1785, 0.0
        %v3706 = vmax.f32 %v1786, 0.0
        %v3707 = vmax.f32 %v1787, 0.0
        %v3708 = vmax.f32 %v1788, 0.0
        %v3709 = vmax.f32 %v1789, 0.0
        %v3710 = vmax.f32 %v1790, 0.0
        %v3711 = vmax.f32 %v1791, 0.0
        %v3712 = vmax.f32 %v1792, 0.0
        %v3713 = vmax.f32 %v1793, 0.0
        %v3714 = vmax.f32 %v1794, 0.0
        %v3715 = vmax.f32 %v1795, 0.0
        %v3716 = vmax.f32 %v1796, 0.0
        %v3717 = vmax.f32 %v1797, 0.0
        %v3718 = vmax.f32 %v1798, 0.0
        %v3719 = vmax.f32 %v1799, 0.0
        %v3720 = vmax.f32 %v1800, 0.0
        %v3721 = vmax.f32 %v1801, 0.0
        %v3722 = vmax.f32 %v1802, 0.0
        %v3723 = vmax.f32 %v1803, 0.0
        %v3724 = vmax.f32 %v1804, 0.0
        %v3725 = vmax.f32 %v1805, 0.0
        %v3726 = vmax.f32 %v1806, 0.0
        %v3727 = vmax.f32 %v1807, 0.0
        %v3728 = vmax.f32 %v1808, 0.0
        %v3729 = vmax.f32 %v1809, 0.0
        %v3730 = vmax.f32 %v1810, 0.0
        %v3731 = vmax.f32 %v1811, 0.0
        %v3732 = vmax.f32 %v1812, 0.0
        %v3733 = vmax.f32 %v1813, 0.0
        %v3734 = vmax.f32 %v1814, 0.0
        %v3735 = vmax.f32 %v1815, 0.0
        %v3736 = vmax.f32 %v1816, 0.0
        %v3737 = vmax.f32 %v1817, 0.0
        %v3738 = vmax.f32 %v1818, 0.0
        %v3739 = vmax.f32 %v1819, 0.0
        %v3740 = vmax.f32 %v1820, 0.0
        %v3741 = vmax.f32 %v1821, 0.0
        %v3742 = vmax.f32 %v1822, 0.0
        %v3743 = vmax.f32 %v1823, 0.0
        %v3744 = vmul.f32 %v3424, %v3680
        %v3745 = vmul.f32 %v3425, %v3681
        %v3746 = vmul.f32 %v3426, %v3682
        %v3747 = vmul.f32 %v3427, %v3683
        %v3748 = vmul.f32 %v3428, %v3684
        %v3749 = vmul.f32 %v3429, %v3685
        %v3750 = vmul.f32 %v3430, %v3686
        %v3751 = vmul.f32 %v3431, %v3687
        %v3752 = vmul.f32 %v3432, %v3688
        %v3753 = vmul.f32 %v3433, %v3689
        %v3754 = vmul.f32 %v3434, %v3690
        %v3755 = vmul.f32 %v3435, %v3691
        %v3756 = vmul.f32 %v3436, %v3692
        %v3757 = vmul.f32 %v3437, %v3693
        %v3758 = vmul.f32 %v3438, %v3694
        %v3759 = vmul.f32 %v3439, %v3695
        %v3760 = vmul.f32 %v3440, %v3696
        %v3761 = vmul.f32 %v3441, %v3697
        %v3762 = vmul.f32 %v3442, %v3698
        %v3763 = vmul.f32 %v3443, %v3699
        %v3764 = vmul.f32 %v3444, %v3700
        %v3765 = vmul.f32 %v3445, %v3701
        %v3766 = vmul.f32 %v3446, %v3702
        %v3767 = vmul.f32 %v3447, %v3703
        %v3768 = vmul.f32 %v3448, %v3704
        %v3769 = vmul.f32 %v3449, %v3705
        %v3770 = vmul.f32 %v3450, %v3706
        %v3771 = vmul.f32 %v3451, %v3707
        %v3772 = vmul.f32 %v3452, %v3708
        %v3773 = vmul.f32 %v3453, %v3709
        %v3774 = vmul.f32 %v3454, %v3710
        %v3775 = vmul.f32 %v3455, %v3711
        %v3776 = vmul.f32 %v3456, %v3712
        %v3777 = vmul.f32 %v3457, %v3713
        %v3778 = vmul.f32 %v3458, %v3714
        %v3779 = vmul.f32 %v3459, %v3715
        %v3780 = vmul.f32 %v3460, %v3716
        %v3781 = vmul.f32 %v3461, %v3717
        %v3782 = vmul.f32 %v3462, %v3718
        %v3783 = vmul.f32 %v3463, %v3719
        %v3784 = vmul.f32 %v3464, %v3720
        %v3785 = vmul.f32 %v3465, %v3721
        %v3786 = vmul.f32 %v3466, %v3722
        %v3787 = vmul.f32 %v3467, %v3723
        %v3788 = vmul.f32 %v3468, %v3724
        %v3789 = vmul.f32 %v3469, %v3725
        %v3790 = vmul.f32 %v3470, %v3726
        %v3791 = vmul.f32 %v3471, %v3727
        %v3792 = vmul.f32 %v3472, %v3728
        %v3793 = vmul.f32 %v3473, %v3729
        %v3794 = vmul.f32 %v3474, %v3730
        %v3795 = vmul.f32 %v3475, %v3731
        %v3796 = vmul.f32 %v3476, %v3732
        %v3797 = vmul.f32 %v3477, %v3733
        %v3798 = vmul.f32 %v3478, %v3734
        %v3799 = vmul.f32 %v3479, %v3735
        %v3800 = vmul.f32 %v3480, %v3736
        %v3801 = vmul.f32 %v3481, %v3737
        %v3802 = vmul.f32 %v3482, %v3738
        %v3803 = vmul.f32 %v3483, %v3739
        %v3804 = vmul.f32 %v3484, %v3740
        %v3805 = vmul.f32 %v3485, %v3741
        %v3806 = vmul.f32 %v3486, %v3742
        %v3807 = vmul.f32 %v3487, %v3743
        %v3808 = vadd.f32 %v3616, %v3744
        %v3809 = vadd.f32 %v3617, %v3745
        %v3810 = vadd.f32 %v3618, %v3746
        %v3811 = vadd.f32 %v3619, %v3747
        %v3812 = vadd.f32 %v3620, %v3748
        %v3813 = vadd.f32 %v3621, %v3749
        %v3814 = vadd.f32 %v3622, %v3750
        %v3815 = vadd.f32 %v3623, %v3751
        %v3816 = vadd.f32 %v3624, %v3752
        %v3817 = vadd.f32 %v3625, %v3753
        %v3818 = vadd.f32 %v3626, %v3754
        %v3819 = vadd.f32 %v3627, %v3755
        %v3820 = vadd.f32 %v3628, %v3756
        %v3821 = vadd.f32 %v3629, %v3757
        %v3822 = vadd.f32 %v3630, %v3758
        %v3823 = vadd.f32 %v3631, %v3759
        %v3824 = vadd.f32 %v3632, %v3760
        %v3825 = vadd.f32 %v3633, %v3761
        %v3826 = vadd.f32 %v3634, %v3762
        %v3827 = vadd.f32 %v3635, %v3763
        %v3828 = vadd.f32 %v3636, %v3764
        %v3829 = vadd.f32 %v3637, %v3765
        %v3830 = vadd.f32 %v3638, %v3766
        %v3831 = vadd.f32 %v3639, %v3767
        %v3832 = vadd.f32 %v3640, %v3768
        %v3833 = vadd.f32 %v3641, %v3769
        %v3834 = vadd.f32 %v3642, %v3770
        %v3835 = vadd.f32 %v3643, %v3771
        %v3836 = vadd.f32 %v3644, %v3772
        %v3837 = vadd.f32 %v3645, %v3773
        %v3838 = vadd.f32 %v3646, %v3774
        %v3839 = vadd.f32 %v3647, %v3775
        %v3840 = vadd.f32 %v3648, %v3776
        %v3841 = vadd.f32 %v3649, %v3777
        %v3842 = vadd.f32 %v3650, %v3778
        %v3843 = vadd.f32 %v3651, %v3779
        %v3844 = vadd.f32 %v3652, %v3780
        %v3845 = vadd.f32 %v3653, %v3781
        %v3846 = vadd.f32 %v3654, %v3782
        %v3847 = vadd.f32 %v3655, %v3783
        %v3848 = vadd.f32 %v3656, %v3784
        %v3849 = vadd.f32 %v3657, %v3785
        %v3850 = vadd.f32 %v3658, %v3786
        %v3851 = vadd.f32 %v3659, %v3787
        %v3852 = vadd.f32 %v3660, %v3788
        %v3853 = vadd.f32 %v3661, %v3789
        %v3854 = vadd.f32 %v3662, %v3790
        %v3855 = vadd.f32 %v3663, %v3791
        %v3856 = vadd.f32 %v3664, %v3792
        %v3857 = vadd.f32 %v3665, %v3793
        %v3858 = vadd.f32 %v3666, %v3794
        %v3859 = vadd.f32 %v3667, %v3795
        %v3860 = vadd.f32 %v3668, %v3796
        %v3861 = vadd.f32 %v3669, %v3797
        %v3862 = vadd.f32 %v3670, %v3798
        %v3863 = vadd.f32 %v3671, %v3799
        %v3864 = vadd.f32 %v3672, %v3800
        %v3865 = vadd.f32 %v3673, %v3801
        %v3866 = vadd.f32 %v3674, %v3802
        %v3867 = vadd.f32 %v3675, %v3803
        %v3868 = vadd.f32 %v3676, %v3804
        %v3869 = vadd.f32 %v3677, %v3805
        %v3870 = vadd.f32 %v3678, %v3806
        %v3871 = vadd.f32 %v3679, %v3807
        %v3872 = vadd.f32 %v3360, %v3424
        %v3873 = vadd.f32 %v3361, %v3425
        %v3874 = vadd.f32 %v3362, %v3426
        %v3875 = vadd.f32 %v3363, %v3427
        %v3876 = vadd.f32 %v3364, %v3428
        %v3877 = vadd.f32 %v3365, %v3429
        %v3878 = vadd.f32 %v3366, %v3430
        %v3879 = vadd.f32 %v3367, %v3431
        %v3880 = vadd.f32 %v3368, %v3432
        %v3881 = vadd.f32 %v3369, %v3433
        %v3882 = vadd.f32 %v3370, %v3434
        %v3883 = vadd.f32 %v3371, %v3435
        %v3884 = vadd.f32 %v3372, %v3436
        %v3885 = vadd.f32 %v3373, %v3437
        %v3886 = vadd.f32 %v3374, %v3438
        %v3887 = vadd.f32 %v3375, %v3439
        %v3888 = vadd.f32 %v3376, %v3440
        %v3889 = vadd.f32 %v3377, %v3441
        %v3890 = vadd.f32 %v3378, %v3442
        %v3891 = vadd.f32 %v3379, %v3443
        %v3892 = vadd.f32 %v3380, %v3444
        %v3893 = vadd.f32 %v3381, %v3445
        %v3894 = vadd.f32 %v3382, %v3446
        %v3895 = vadd.f32 %v3383, %v3447
        %v3896 = vadd.f32 %v3384, %v3448
        %v3897 = vadd.f32 %v3385, %v3449
        %v3898 = vadd.f32 %v3386, %v3450
        %v3899 = vadd.f32 %v3387, %v3451
        %v3900 = vadd.f32 %v3388, %v3452
        %v3901 = vadd.f32 %v3389, %v3453
        %v3902 = vadd.f32 %v3390, %v3454
        %v3903 = vadd.f32 %v3391, %v3455
        %v3904 = vadd.f32 %v3392, %v3456
        %v3905 = vadd.f32 %v3393, %v3457
        %v3906 = vadd.f32 %v3394, %v3458
        %v3907 = vadd.f32 %v3395, %v3459
        %v3908 = vadd.f32 %v3396, %v3460
        %v3909 = vadd.f32 %v3397, %v3461
        %v3910 = vadd.f32 %v3398, %v3462
        %v3911 = vadd.f32 %v3399, %v3463
        %v3912 = vadd.f32 %v3400, %v3464
        %v3913 = vadd.f32 %v3401, %v3465
        %v3914 = vadd.f32 %v3402, %v3466
        %v3915 = vadd.f32 %v3403, %v3467
        %v3916 = vadd.f32 %v3404, %v3468
        %v3917 = vadd.f32 %v3405, %v3469
        %v3918 = vadd.f32 %v3406, %v3470
        %v3919 = vadd.f32 %v3407, %v3471
        %v3920 = vadd.f32 %v3408, %v3472
        %v3921 = vadd.f32 %v3409, %v3473
        %v3922 = vadd.f32 %v3410, %v3474
        %v3923 = vadd.f32 %v3411, %v3475
        %v3924 = vadd.f32 %v3412, %v3476
        %v3925 = vadd.f32 %v3413, %v3477
        %v3926 = vadd.f32 %v3414, %v3478
        %v3927 = vadd.f32 %v3415, %v3479
        %v3928 = vadd.f32 %v3416, %v3480
        %v3929 = vadd.f32 %v3417, %v3481
        %v3930 = vadd.f32 %v3418, %v3482
        %v3931 = vadd.f32 %v3419, %v3483
        %v3932 = vadd.f32 %v3420, %v3484
        %v3933 = vadd.f32 %v3421, %v3485
        %v3934 = vadd.f32 %v3422, %v3486
        %v3935 = vadd.f32 %v3423, %v3487
        %v3936 = vmul.f32 %v3872, %v2088
        %v3937 = vmul.f32 %v3873, %v2097
        %v3938 = vmul.f32 %v3874, %v2106
        %v3939 = vmul.f32 %v3875, %v2115
        %v3940 = vmul.f32 %v3876, %v2124
        %v3941 = vmul.f32 %v3877, %v2133
        %v3942 = vmul.f32 %v3878, %v2142
        %v3943 = vmul.f32 %v3879, %v2151
        %v3944 = vmul.f32 %v3880, %v2160
        %v3945 = vmul.f32 %v3881, %v2169
        %v3946 = vmul.f32 %v3882, %v2178
        %v3947 = vmul.f32 %v3883, %v2187
        %v3948 = vmul.f32 %v3884, %v2196
        %v3949 = vmul.f32 %v3885, %v2205
        %v3950 = vmul.f32 %v3886, %v2214
        %v3951 = vmul.f32 %v3887, %v2223
        %v3952 = vmul.f32 %v3888, %v2232
        %v3953 = vmul.f32 %v3889, %v2241
        %v3954 = vmul.f32 %v3890, %v2250
        %v3955 = vmul.f32 %v3891, %v2259
        %v3956 = vmul.f32 %v3892, %v2268
        %v3957 = vmul.f32 %v3893, %v2277
        %v3958 = vmul.f32 %v3894, %v2286
        %v3959 = vmul.f32 %v3895, %v2295
        %v3960 = vmul.f32 %v3896, %v2304
        %v3961 = vmul.f32 %v3897, %v2313
        %v3962 = vmul.f32 %v3898, %v2322
        %v3963 = vmul.f32 %v3899, %v2331
        %v3964 = vmul.f32 %v3900, %v2340
        %v3965 = vmul.f32 %v3901, %v2349
        %v3966 = vmul.f32 %v3902, %v2358
        %v3967 = vmul.f32 %v3903, %v2367
        %v3968 = vmul.f32 %v3904, %v2376
        %v3969 = vmul.f32 %v3905, %v2385
        %v3970 = vmul.f32 %v3906, %v2394
        %v3971 = vmul.f32 %v3907, %v2403
        %v3972 = vmul.f32 %v3908, %v2412
        %v3973 = vmul.f32 %v3909, %v2421
        %v3974 = vmul.f32 %v3910, %v2430
        %v3975 = vmul.f32 %v3911, %v2439
        %v3976 = vmul.f32 %v3912, %v2448
        %v3977 = vmul.f32 %v3913, %v2457
        %v3978 = vmul.f32 %v3914, %v2466
        %v3979 = vmul.f32 %v3915, %v2475
        %v3980 = vmul.f32 %v3916, %v2484
        %v3981 = vmul.f32 %v3917, %v2493
        %v3982 = vmul.f32 %v3918, %v2502
        %v3983 = vmul.f32 %v3919, %v2511
        %v3984 = vmul.f32 %v3920, %v2520
        %v3985 = vmul.f32 %v3921, %v2529
        %v3986 = vmul.f32 %v3922, %v2538
        %v3987 = vmul.f32 %v3923, %v2547
        %v3988 = vmul.f32 %v3924, %v2556
        %v3989 = vmul.f32 %v3925, %v2565
        %v3990 = vmul.f32 %v3926, %v2574
        %v3991 = vmul.f32 %v3927, %v2583
        %v3992 = vmul.f32 %v3928, %v2592
        %v3993 = vmul.f32 %v3929, %v2601
        %v3994 = vmul.f32 %v3930, %v2610
        %v3995 = vmul.f32 %v3931, %v2619
        %v3996 = vmul.f32 %v3932, %v2628
        %v3997 = vmul.f32 %v3933, %v2637
        %v3998 = vmul.f32 %v3934, %v2646
        %v3999 = vmul.f32 %v3935, %v2655
        %v4000 = vadd.f32 %v3808, %v3936
        %v4001 = vadd.f32 %v3809, %v3937
        %v4002 = vadd.f32 %v3810, %v3938
        %v4003 = vadd.f32 %v3811, %v3939
        %v4004 = vadd.f32 %v3812, %v3940
        %v4005 = vadd.f32 %v3813, %v3941
        %v4006 = vadd.f32 %v3814, %v3942
        %v4007 = vadd.f32 %v3815, %v3943
        %v4008 = vadd.f32 %v3816, %v3944
        %v4009 = vadd.f32 %v3817, %v3945
        %v4010 = vadd.f32 %v3818, %v3946
        %v4011 = vadd.f32 %v3819, %v3947
        %v4012 = vadd.f32 %v3820, %v3948
        %v4013 = vadd.f32 %v3821, %v3949
        %v4014 = vadd.f32 %v3822, %v3950
        %v4015 = vadd.f32 %v3823, %v3951
        %v4016 = vadd.f32 %v3824, %v3952
        %v4017 = vadd.f32 %v3825, %v3953
        %v4018 = vadd.f32 %v3826, %v3954
        %v4019 = vadd.f32 %v3827, %v3955
        %v4020 = vadd.f32 %v3828, %v3956
        %v4021 = vadd.f32 %v3829, %v3957
        %v4022 = vadd.f32 %v3830, %v3958
        %v4023 = vadd.f32 %v3831, %v3959
        %v4024 = vadd.f32 %v3832, %v3960
        %v4025 = vadd.f32 %v3833, %v3961
        %v4026 = vadd.f32 %v3834, %v3962
        %v4027 = vadd.f32 %v3835, %v3963
        %v4028 = vadd.f32 %v3836, %v3964
        %v4029 = vadd.f32 %v3837, %v3965
        %v4030 = vadd.f32 %v3838, %v3966
        %v4031 = vadd.f32 %v3839, %v3967
        %v4032 = vadd.f32 %v3840, %v3968
        %v4033 = vadd.f32 %v3841, %v3969
        %v4034 = vadd.f32 %v3842, %v3970
        %v4035 = vadd.f32 %v3843, %v3971
        %v4036 = vadd.f32 %v3844, %v3972
        %v4037 = vadd.f32 %v3845, %v3973
        %v4038 = vadd.f32 %v3846, %v3974
        %v4039 = vadd.f32 %v3847, %v3975
        %v4040 = vadd.f32 %v3848, %v3976
        %v4041 = vadd.f32 %v3849, %v3977
        %v4042 = vadd.f32 %v3850, %v3978
        %v4043 = vadd.f32 %v3851, %v3979
        %v4044 = vadd.f32 %v3852, %v3980
        %v4045 = vadd.f32 %v3853, %v3981
        %v4046 = vadd.f32 %v3854, %v3982
        %v4047 = vadd.f32 %v3855, %v3983
        %v4048 = vadd.f32 %v3856, %v3984
        %v4049 = vadd.f32 %v3857, %v3985
        %v4050 = vadd.f32 %v3858, %v3986
        %v4051 = vadd.f32 %v3859, %v3987
        %v4052 = vadd.f32 %v3860, %v3988
        %v4053 = vadd.f32 %v3861, %v3989
        %v4054 = vadd.f32 %v3862, %v3990
        %v4055 = vadd.f32 %v3863, %v3991
        %v4056 = vadd.f32 %v3864, %v3992
        %v4057 = vadd.f32 %v3865, %v3993
        %v4058 = vadd.f32 %v3866, %v3994
        %v4059 = vadd.f32 %v3867, %v3995
        %v4060 = vadd.f32 %v3868, %v3996
        %v4061 = vadd.f32 %v3869, %v3997
        %v4062 = vadd.f32 %v3870, %v3998
        %v4063 = vadd.f32 %v3871, %v3999
        %v4064 = vmul.f32 %v4000, %v539
        %v4065 = vmul.f32 %v4001, %v540
        %v4066 = vmul.f32 %v4002, %v541
        %v4067 = vmul.f32 %v4003, %v542
        %v4068 = vmul.f32 %v4004, %v543
        %v4069 = vmul.f32 %v4005, %v544
        %v4070 = vmul.f32 %v4006, %v545
        %v4071 = vmul.f32 %v4007, %v546
        %v4072 = vmul.f32 %v4008, %v547
        %v4073 = vmul.f32 %v4009, %v548
        %v4074 = vmul.f32 %v4010, %v549
        %v4075 = vmul.f32 %v4011, %v550
        %v4076 = vmul.f32 %v4012, %v551
        %v4077 = vmul.f32 %v4013, %v552
        %v4078 = vmul.f32 %v4014, %v553
        %v4079 = vmul.f32 %v4015, %v554
        %v4080 = vmul.f32 %v4016, %v555
        %v4081 = vmul.f32 %v4017, %v556
        %v4082 = vmul.f32 %v4018, %v557
        %v4083 = vmul.f32 %v4019, %v558
        %v4084 = vmul.f32 %v4020, %v559
        %v4085 = vmul.f32 %v4021, %v560
        %v4086 = vmul.f32 %v4022, %v561
        %v4087 = vmul.f32 %v4023, %v562
        %v4088 = vmul.f32 %v4024, %v563
        %v4089 = vmul.f32 %v4025, %v564
        %v4090 = vmul.f32 %v4026, %v565
        %v4091 = vmul.f32 %v4027, %v566
        %v4092 = vmul.f32 %v4028, %v567
        %v4093 = vmul.f32 %v4029, %v568
        %v4094 = vmul.f32 %v4030, %v569
        %v4095 = vmul.f32 %v4031, %v570
        %v4096 = vmul.f32 %v4032, %v571
        %v4097 = vmul.f32 %v4033, %v572
        %v4098 = vmul.f32 %v4034, %v573
        %v4099 = vmul.f32 %v4035, %v574
        %v4100 = vmul.f32 %v4036, %v575
        %v4101 = vmul.f32 %v4037, %v576
        %v4102 = vmul.f32 %v4038, %v577
        %v4103 = vmul.f32 %v4039, %v578
        %v4104 = vmul.f32 %v4040, %v579
        %v4105 = vmul.f32 %v4041, %v580
        %v4106 = vmul.f32 %v4042, %v581
        %v4107 = vmul.f32 %v4043, %v582
        %v4108 = vmul.f32 %v4044, %v583
        %v4109 = vmul.f32 %v4045, %v584
        %v4110 = vmul.f32 %v4046, %v585
        %v4111 = vmul.f32 %v4047, %v586
        %v4112 = vmul.f32 %v4048, %v587
        %v4113 = vmul.f32 %v4049, %v588
        %v4114 = vmul.f32 %v4050, %v589
        %v4115 = vmul.f32 %v4051, %v590
        %v4116 = vmul.f32 %v4052, %v591
        %v4117 = vmul.f32 %v4053, %v592
        %v4118 = vmul.f32 %v4054, %v593
        %v4119 = vmul.f32 %v4055, %v594
        %v4120 = vmul.f32 %v4056, %v595
        %v4121 = vmul.f32 %v4057, %v596
        %v4122 = vmul.f32 %v4058, %v597
        %v4123 = vmul.f32 %v4059, %v598
        %v4124 = vmul.f32 %v4060, %v599
        %v4125 = vmul.f32 %v4061, %v600
        %v4126 = vmul.f32 %v4062, %v601
        %v4127 = vmul.f32 %v4063, %v602
        %v4128 = vadd.f32 %v4064, %v4065
        %v4129 = vadd.f32 %v4128, %v4066
        %v4130 = vadd.f32 %v4129, %v4067
        %v4131 = vadd.f32 %v4130, %v4068
        %v4132 = vadd.f32 %v4131, %v4069
        %v4133 = vadd.f32 %v4132, %v4070
        %v4134 = vadd.f32 %v4133, %v4071
        %v4135 = vadd.f32 %v4134, %v4072
        %v4136 = vadd.f32 %v4135, %v4073
        %v4137 = vadd.f32 %v4136, %v4074
        %v4138 = vadd.f32 %v4137, %v4075
        %v4139 = vadd.f32 %v4138, %v4076
        %v4140 = vadd.f32 %v4139, %v4077
        %v4141 = vadd.f32 %v4140, %v4078
        %v4142 = vadd.f32 %v4141, %v4079
        %v4143 = vadd.f32 %v4142, %v4080
        %v4144 = vadd.f32 %v4143, %v4081
        %v4145 = vadd.f32 %v4144, %v4082
        %v4146 = vadd.f32 %v4145, %v4083
        %v4147 = vadd.f32 %v4146, %v4084
        %v4148 = vadd.f32 %v4147, %v4085
        %v4149 = vadd.f32 %v4148, %v4086
        %v4150 = vadd.f32 %v4149, %v4087
        %v4151 = vadd.f32 %v4150, %v4088
        %v4152 = vadd.f32 %v4151, %v4089
        %v4153 = vadd.f32 %v4152, %v4090
        %v4154 = vadd.f32 %v4153, %v4091
        %v4155 = vadd.f32 %v4154, %v4092
        %v4156 = vadd.f32 %v4155, %v4093
        %v4157 = vadd.f32 %v4156, %v4094
        %v4158 = vadd.f32 %v4157, %v4095
        %v4159 = vadd.f32 %v4158, %v4096
        %v4160 = vadd.f32 %v4159, %v4097
        %v4161 = vadd.f32 %v4160, %v4098
        %v4162 = vadd.f32 %v4161, %v4099
        %v4163 = vadd.f32 %v4162, %v4100
        %v4164 = vadd.f32 %v4163, %v4101
        %v4165 = vadd.f32 %v4164, %v4102
        %v4166 = vadd.f32 %v4165, %v4103
        %v4167 = vadd.f32 %v4166, %v4104
        %v4168 = vadd.f32 %v4167, %v4105
        %v4169 = vadd.f32 %v4168, %v4106
        %v4170 = vadd.f32 %v4169, %v4107
        %v4171 = vadd.f32 %v4170, %v4108
        %v4172 = vadd.f32 %v4171, %v4109
        %v4173 = vadd.f32 %v4172, %v4110
        %v4174 = vadd.f32 %v4173, %v4111
        %v4175 = vadd.f32 %v4174, %v4112
        %v4176 = vadd.f32 %v4175, %v4113
        %v4177 = vadd.f32 %v4176, %v4114
        %v4178 = vadd.f32 %v4177, %v4115
        %v4179 = vadd.f32 %v4178, %v4116
        %v4180 = vadd.f32 %v4179, %v4117
        %v4181 = vadd.f32 %v4180, %v4118
        %v4182 = vadd.f32 %v4181, %v4119
        %v4183 = vadd.f32 %v4182, %v4120
        %v4184 = vadd.f32 %v4183, %v4121
        %v4185 = vadd.f32 %v4184, %v4122
        %v4186 = vadd.f32 %v4185, %v4123
        %v4187 = vadd.f32 %v4186, %v4124
        %v4188 = vadd.f32 %v4187, %v4125
        %v4189 = vadd.f32 %v4188, %v4126
        %v4190 = vadd.f32 %v4189, %v4127
        %v4191 = vrot.slane %v4190, 4
        %v4192 = vadd.f32 %v4190, %v4191
        %v4193 = vrot.slane %v4192, 2
        %v4194 = vadd.f32 %v4192, %v4193
        %v4195 = vrot.slane %v4194, 1
        %v4196 = vadd.f32 %v4194, %v4195
        %v4197 = vadd.f32 %v539, %v540
        %v4198 = vadd.f32 %v4197, %v541
        %v4199 = vadd.f32 %v4198, %v542
        %v4200 = vadd.f32 %v4199, %v543
        %v4201 = vadd.f32 %v4200, %v544
        %v4202 = vadd.f32 %v4201, %v545
        %v4203 = vadd.f32 %v4202, %v546
        %v4204 = vadd.f32 %v4203, %v547
        %v4205 = vadd.f32 %v4204, %v548
        %v4206 = vadd.f32 %v4205, %v549
        %v4207 = vadd.f32 %v4206, %v550
        %v4208 = vadd.f32 %v4207, %v551
        %v4209 = vadd.f32 %v4208, %v552
        %v4210 = vadd.f32 %v4209, %v553
        %v4211 = vadd.f32 %v4210, %v554
        %v4212 = vadd.f32 %v4211, %v555
        %v4213 = vadd.f32 %v4212, %v556
        %v4214 = vadd.f32 %v4213, %v557
        %v4215 = vadd.f32 %v4214, %v558
        %v4216 = vadd.f32 %v4215, %v559
        %v4217 = vadd.f32 %v4216, %v560
        %v4218 = vadd.f32 %v4217, %v561
        %v4219 = vadd.f32 %v4218, %v562
        %v4220 = vadd.f32 %v4219, %v563
        %v4221 = vadd.f32 %v4220, %v564
        %v4222 = vadd.f32 %v4221, %v565
        %v4223 = vadd.f32 %v4222, %v566
        %v4224 = vadd.f32 %v4223, %v567
        %v4225 = vadd.f32 %v4224, %v568
        %v4226 = vadd.f32 %v4225, %v569
        %v4227 = vadd.f32 %v4226, %v570
        %v4228 = vadd.f32 %v4227, %v571
        %v4229 = vadd.f32 %v4228, %v572
        %v4230 = vadd.f32 %v4229, %v573
        %v4231 = vadd.f32 %v4230, %v574
        %v4232 = vadd.f32 %v4231, %v575
        %v4233 = vadd.f32 %v4232, %v576
        %v4234 = vadd.f32 %v4233, %v577
        %v4235 = vadd.f32 %v4234, %v578
        %v4236 = vadd.f32 %v4235, %v579
        %v4237 = vadd.f32 %v4236, %v580
        %v4238 = vadd.f32 %v4237, %v581
        %v4239 = vadd.f32 %v4238, %v582
        %v4240 = vadd.f32 %v4239, %v583
        %v4241 = vadd.f32 %v4240, %v584
        %v4242 = vadd.f32 %v4241, %v585
        %v4243 = vadd.f32 %v4242, %v586
        %v4244 = vadd.f32 %v4243, %v587
        %v4245 = vadd.f32 %v4244, %v588
        %v4246 = vadd.f32 %v4245, %v589
        %v4247 = vadd.f32 %v4246, %v590
        %v4248 = vadd.f32 %v4247, %v591
        %v4249 = vadd.f32 %v4248, %v592
        %v4250 = vadd.f32 %v4249, %v593
        %v4251 = vadd.f32 %v4250, %v594
        %v4252 = vadd.f32 %v4251, %v595
        %v4253 = vadd.f32 %v4252, %v596
        %v4254 = vadd.f32 %v4253, %v597
        %v4255 = vadd.f32 %v4254, %v598
        %v4256 = vadd.f32 %v4255, %v599
        %v4257 = vadd.f32 %v4256, %v600
        %v4258 = vadd.f32 %v4257, %v601
        %v4259 = vadd.f32 %v4258, %v602
        %v4260 = vrot.slane %v4259, 4
        %v4261 = vadd.f32 %v4259, %v4260
        %v4262 = vrot.slane %v4261, 2
        %v4263 = vadd.f32 %v4261, %v4262
        %v4264 = vrot.slane %v4263, 1
        %v4265 = vadd.f32 %v4263, %v4264
        %vm4266 = vcmask 1040384
        %v4267 = vsel %vm4266, %v4196, %v4265
        %vm4268 = vcmask 1041408
        %v4269 = vsel %vm4268, %v4267, 0.0
        %4270 = vst [vmem:[%s217] sm:$0xff] %v4269
        %s4271 = sand.u32 %s77, 1
        %s4272 = scalar_lea.sflag [#allocation4], %s4271
        %s4273 = sand.u32 %s77, 1
        %s4274 = smul.addr %s4273, 256
        %s4275 = scalar_lea.vmem [#allocation7], %s4274
        %p4276 = scmp.lt.s32.totalorder %s22, 1
        %s4277 = scalar_select %p4276, %s22, 1
        %s4278 = smul.addr %s4277, 8
        %s4279 = scalar_lea.vmem %s3, %s4278
        // Predicated region
        $region37: #{trainer_predict_and_loss.1} parent=27 // pred_check
          %p4280 = pneg %p87
        $region38: #{trainer_predict_and_loss.1} parent=27 // pred_check_branch
          %4282 = sbr.rel (%p4280) target = $region40
        $region39: #{trainer_predict_and_loss.1} parent=27 // pred_region
          %s4283 = smul.u32 4, %s22
          %s4285 = ssub.s32 4096, 4096
          %4286 = vsyncadd %s4272, %s4285
          %s4287 = smul.addr %s4283, 16
          %s4288 = smul.addr %s4287, 64
          %s4289 = scalar_lea.hbm %s2, %s4288
          %s4290 = sshll.u32 %s4275, 4
          %s4291 = int_to_ptr.vmem [resolvable:$true] %s4290
          %4296 = dma.vmem_to_hbm [thread:$0]  %s4291, 4096, %s4289, %s4272, 64, 64, 4
        $region40: #{trainer_predict_and_loss.1} parent=27 // pred_fallthru
          _
        // Predicated region
        $region41: #{trainer_predict_and_loss.1} parent=27 // pred_check
          %p4297 = pneg %p113
        $region42: #{trainer_predict_and_loss.1} parent=27 // pred_check_branch
          %4299 = sbr.rel (%p4297) target = $region44
        $region43: #{trainer_predict_and_loss.1} parent=27 // pred_region
          _
        $region44: #{trainer_predict_and_loss.1} parent=27 // pred_fallthru
          _
      $region28: #{trainer_predict_and_loss.1} parent=5 // pred_fallthru
        _
      %p4300 = scmp.le.s32.totalorder 2, %s17
      // Predicated region
      $region45: #{trainer_predict_and_loss.1} parent=5 // pred_check
        %p4301 = pneg %p4300
      $region46: #{trainer_predict_and_loss.1} parent=5 // pred_check_branch
        %4303 = sbr.rel (%p4301) target = $region48
      $region47: #{trainer_predict_and_loss.1} parent=5 // pred_region
        %s4304 = ssub.s32 %s17, 2
        // Predicated region
        $region49: #{trainer_predict_and_loss.1} parent=47 // pred_check
          %p4305 = pneg %p93
        $region50: #{trainer_predict_and_loss.1} parent=47 // pred_check_branch
          %4307 = sbr.rel (%p4305) target = $region52
        $region51: #{trainer_predict_and_loss.1} parent=47 // pred_region
          %s4308 = sand.u32 %s78, 1
          %s4309 = scalar_lea.sflag [#allocation4], %s4308
          %s4310 = sand.u32 %s78, 1
          %s4311 = smul.addr %s4310, 256
          %s4312 = scalar_lea.vmem [#allocation7], %s4311
          %4313 = dma.done %s4309, 4096
        $region52: #{trainer_predict_and_loss.1} parent=47 // pred_fallthru
          _
        // Predicated region
        $region53: #{trainer_predict_and_loss.1} parent=47 // pred_check
          %p4314 = pneg %p119
        $region54: #{trainer_predict_and_loss.1} parent=47 // pred_check_branch
          %4316 = sbr.rel (%p4314) target = $region56
        $region55: #{trainer_predict_and_loss.1} parent=47 // pred_region
          %p4317 = scmp.lt.s32.totalorder %s23, 1
          %s4318 = scalar_select %p4317, %s23, 1
          %s4319 = smul.addr %s4318, 8
          %s4320 = scalar_lea.vmem %s3, %s4319
        $region56: #{trainer_predict_and_loss.1} parent=47 // pred_fallthru
          _
      $region48: #{trainer_predict_and_loss.1} parent=5 // pred_fallthru
        _
    $region6: #{trainer_predict_and_loss.1} parent=1 // loop_footer
      %s21 = sadd.s32 1, %s17
    $region7: #{trainer_predict_and_loss.1} parent=1 // loop_footer_branch
      %16 = sbr.rel target = $region3
    $region8: #{trainer_predict_and_loss.1} parent=1 // loop_exit
      _
    %4321 = vsyncpa [#allocation3], 1
    %s4322 = scalar_lea.sflag [#allocation3], 1
    %4323 = vsyncpa %s4322, 1
    %4324 = vsyncpa [#allocation6], 1
    %4325 = vsyncpa [#allocation4], 1
    %s4326 = scalar_lea.sflag [#allocation4], 1
    %4327 = vsyncpa %s4326, 1

</llo_original>
